<compile_context>
chip_gen: v6e
topology: v6e:2x2x1
jax: 0.10.0
libtpu: 0.0.40
codegen_flags: <defaults>
</compile_context>

<pallas_src>
import functools

import numpy as np

import jax
import jax.numpy as jnp
from jax.experimental import pallas as pl
from jax.experimental.pallas import tpu as pltpu

_LANES = 128


def _slab_offsets(C, W, H):
    """Row offsets (8-aligned) of each parameter inside the packed slab."""
    def a8(x):
        return (x + 7) // 8 * 8
    offs, off = {}, 0
    for name, rows in (("wih_c", C), ("whh_c", C), ("b_c", 1),
                       ("wih_w_word", W), ("wih_w_char", C), ("whh_w", H),
                       ("b_w", 1), ("wt", H), ("bt", 1)):
        offs[name] = off
        off = a8(off + rows)
    return offs, max(off, 8)


def pos_lstm_char_kernel(ce_ref, mask_ref, we_ref, pp_ref, out_ref, lstm_ref, *,
                         seq_len, max_chars, block_sents, c_dim, w_dim, h_dim,
                         offs):
    S, L, BB = seq_len, max_chars, block_sents
    C, W, H = c_dim, w_dim, h_dim
    N = BB * S
    C4, H4 = 4 * C, 4 * H
    f32 = jnp.float32

    # ---- unpack the lane-dense parameter slab (static slices, once) ---------
    wih_c = pp_ref[offs["wih_c"]:offs["wih_c"] + C, :C4]          # (C, 4C)
    whh_c = pp_ref[offs["whh_c"]:offs["whh_c"] + C, :C4]          # (C, 4C)
    b_c = pp_ref[offs["b_c"]:offs["b_c"] + 1, :C4]                # (1, 4C)
    wih_w_wd = pp_ref[offs["wih_w_word"]:offs["wih_w_word"] + W, :H4]
    wih_w_ch = pp_ref[offs["wih_w_char"]:offs["wih_w_char"] + C, :H4]
    whh_w = pp_ref[offs["whh_w"]:offs["whh_w"] + H, :H4]          # (H, 4H)
    b_w = pp_ref[offs["b_w"]:offs["b_w"] + 1, :H4]                # (1, 4H)
    wt = pp_ref[offs["wt"]:offs["wt"] + H, :]                     # (H, 128) zero-padded
    bt = pp_ref[offs["bt"]:offs["bt"] + 1, :]                     # (1, 128) zero-padded

    # ---- hoisted loop-invariant masks ---------------------------------------
    lane_c = jax.lax.broadcasted_iota(jnp.int32, (N, C4), 1)
    gmask_c = (lane_c >= 2 * C) & (lane_c < 3 * C)
    lane_w = jax.lax.broadcasted_iota(jnp.int32, (BB, H4), 1)
    gmask_w = (lane_w >= 2 * H) & (lane_w < 3 * H)
    keep_all = jnp.broadcast_to(mask_ref[...] > 0.5, (L * N, C))

    def gate_acts(gates, hid, gmask):
        # One EUP pass: tanh(x) = 2*sigmoid(2x) - 1, selected with the hoisted
        # g-block lane mask; i/f/g/o are split from the result.
        sig = jax.nn.sigmoid(jnp.where(gmask, gates + gates, gates))
        acts = jnp.where(gmask, sig + sig - 1.0, sig)
        return (acts[:, 0 * hid:1 * hid], acts[:, 1 * hid:2 * hid],
                acts[:, 2 * hid:3 * hid], acts[:, 3 * hid:4 * hid])

    # ---- char-level LSTM: all BB*S words of the block as one batch ----------
    # Hoisted input projection: (L*N, C) @ (C, 4C).
    xg_c = jnp.dot(ce_ref[...], wih_c, preferred_element_type=f32) + b_c
    h_c = jnp.zeros((N, C), f32)
    c_c = jnp.zeros((N, C), f32)
    for t in range(L):                         # unrolled (L is small & static)
        gates = (xg_c[t * N:(t + 1) * N, :]
                 + jnp.dot(h_c, whh_c, preferred_element_type=f32))
        i, f, g, o = gate_acts(gates, C, gmask_c)
        c_new = f * c_c + i * g
        h_new = o * jnp.tanh(c_new)
        keep = keep_all[t * N:(t + 1) * N, :]  # hold state at padded chars
        h_c = jnp.where(keep, h_new, h_c)
        c_c = jnp.where(keep, c_new, c_c)

    # ---- word-level LSTM: time = S, batch = BB sentences ---------------------
    # Concat-free hoisted input projection (word part + char part).
    xg_w = (jnp.dot(we_ref[...], wih_w_wd, preferred_element_type=f32)
            + jnp.dot(h_c, wih_w_ch, preferred_element_type=f32)
            + b_w)                                                  # (N, 4H)
    h_w = jnp.zeros((BB, H), f32)
    c_w = jnp.zeros((BB, H), f32)
    for s in range(S):                                              # unrolled
        gates = (xg_w[s * BB:(s + 1) * BB, :]                       # (BB, 4H)=(8,128)
                 + jnp.dot(h_w, whh_w, preferred_element_type=f32))
        i, f, g, o = gate_acts(gates, H, gmask_w)
        c_w = f * c_w + i * g
        h_w = o * jnp.tanh(c_w)
        lstm_ref[s * BB:(s + 1) * BB, :] = h_w   # row store; no concat epilogue

    # ---- hidden2tag: one lane-dense (N, 128) store ---------------------------
    out_ref[...] = jnp.dot(lstm_ref[...], wt, preferred_element_type=f32) + bt


def pos_lstm_char_forward(params, word_ids, char_ids, char_lens, *, block_sents=8):
    """word_ids (B,S), char_ids (B,S,L) suffix-padded, char_lens (B,S)."""
    B, S = word_ids.shape
    L = char_ids.shape[2]
    C = params["char_emb"].shape[1]
    W = params["word_emb"].shape[1]
    H = params["w_hh_w"].shape[1]          # PyTorch layout (4H, H) -> H is dim 1
    T = params["t_w"].shape[0]
    f32 = jnp.float32

    BB = block_sents
    assert 4 * H <= _LANES and 4 * C <= _LANES and T <= _LANES
    assert B % BB == 0, "pad the sentence batch to a multiple of block_sents"
    assert S % 8 == 0, "pad sentence length to a multiple of 8 (sublane alignment)"
    nb = B // BB
    N = BB * S

    # ---- embedding gathers + (block, char-step, word-pos, sentence) layout ---
    ce = jnp.take(params["char_emb"], char_ids, axis=0)             # (B,S,L,C)
    ce = ce.reshape(nb, BB, S, L, C).transpose(0, 3, 2, 1, 4)       # (nb,L,S,BB,C)
    ce_flat = ce.reshape(nb * L * N, C)

    lens = char_lens.reshape(nb, BB, S).transpose(0, 2, 1)          # (nb,S,BB)
    t_idx = jnp.arange(L, dtype=char_lens.dtype)
    mask = (t_idx[None, :, None, None] < lens[:, None, :, :]).astype(f32)
    mask_flat = mask.reshape(nb * L * N, 1)

    we = jnp.take(params["word_emb"], word_ids, axis=0)             # (B,S,W)
    we_flat = we.reshape(nb, BB, S, W).transpose(0, 2, 1, 3).reshape(nb * N, W)

    # ---- pack every weight/bias into a single lane-dense (rows, 128) slab ----
    offs, rows = _slab_offsets(C, W, H)
    wih_w = params["w_ih_w"].T.astype(f32)                          # (W+C, 4H)
    slab = jnp.zeros((rows, _LANES), f32)
    slab = slab.at[offs["wih_c"]:offs["wih_c"] + C, :4 * C].set(params["w_ih_c"].T.astype(f32))
    slab = slab.at[offs["whh_c"]:offs["whh_c"] + C, :4 * C].set(params["w_hh_c"].T.astype(f32))
    slab = slab.at[offs["b_c"], :4 * C].set((params["b_ih_c"] + params["b_hh_c"]).astype(f32))
    slab = slab.at[offs["wih_w_word"]:offs["wih_w_word"] + W, :4 * H].set(wih_w[:W])
    slab = slab.at[offs["wih_w_char"]:offs["wih_w_char"] + C, :4 * H].set(wih_w[W:W + C])
    slab = slab.at[offs["whh_w"]:offs["whh_w"] + H, :4 * H].set(params["w_hh_w"].T.astype(f32))
    slab = slab.at[offs["b_w"], :4 * H].set((params["b_ih_w"] + params["b_hh_w"]).astype(f32))
    slab = slab.at[offs["wt"]:offs["wt"] + H, :T].set(params["t_w"].T.astype(f32))
    slab = slab.at[offs["bt"], :T].set(params["t_b"].astype(f32))

    kernel = functools.partial(
        pos_lstm_char_kernel, seq_len=S, max_chars=L, block_sents=BB,
        c_dim=C, w_dim=W, h_dim=H, offs=offs)

    flops = (4 * B * S * L * C * 4 * C          # char x-proj + h recurrence
             + 2 * B * S * (W + C) * 4 * H      # word x-proj
             + 2 * B * S * H * 4 * H            # word h recurrence
             + 2 * B * S * H * _LANES)          # hidden2tag (lane-padded)
    transcendentals = B * S * L * 5 * C + B * S * 5 * H
    bytes_accessed = 4 * (ce_flat.size + mask_flat.size + we_flat.size
                          + slab.size + nb * N * _LANES)

    out = pl.pallas_call(
        kernel,
        out_shape=jax.ShapeDtypeStruct((nb * N, _LANES), f32),
        grid_spec=pltpu.PrefetchScalarGridSpec(
            num_scalar_prefetch=0,
            grid=(nb,),
            in_specs=[
                pl.BlockSpec((L * N, C), lambda b: (b, 0)),    # char embeds
                pl.BlockSpec((L * N, 1), lambda b: (b, 0)),    # char valid mask
                pl.BlockSpec((N, W), lambda b: (b, 0)),        # word embeds
                pl.BlockSpec((rows, _LANES), lambda b: (0, 0)),  # param slab
            ],
            out_specs=pl.BlockSpec((N, _LANES), lambda b: (b, 0)),
            scratch_shapes=[pltpu.VMEM((N, H), f32)],
        ),
        compiler_params=pltpu.CompilerParams(
            dimension_semantics=("parallel",)),
        cost_estimate=pl.CostEstimate(flops=flops,
                                      transcendentals=transcendentals,
                                      bytes_accessed=bytes_accessed),
    )(ce_flat, mask_flat, we_flat, slab)

    # Rows are ordered (block, word-position, sentence-in-block); unscramble and
    # drop the lane padding of the tag dimension.
    out = out.reshape(nb, S, BB, _LANES).transpose(0, 2, 1, 3).reshape(B, S, _LANES)
    return out[:, :, :T]


# ----------------------------- numpy reference --------------------------------
def _np_sigmoid(x):
    return 1.0 / (1.0 + np.exp(-x))


def _np_cell(x, h, c, w_ih, w_hh, b, hid):
    gates = x @ w_ih.T + h @ w_hh.T + b
    i = _np_sigmoid(gates[:, 0 * hid:1 * hid])
    f = _np_sigmoid(gates[:, 1 * hid:2 * hid])
    g = np.tanh(gates[:, 2 * hid:3 * hid])
    o = _np_sigmoid(gates[:, 3 * hid:4 * hid])
    c_new = f * c + i * g
    return o * np.tanh(c_new), c_new


def reference_forward(params, word_ids, char_ids, char_lens):
    p = {k: np.asarray(v, np.float32) for k, v in params.items()}
    word_ids = np.asarray(word_ids)
    char_ids = np.asarray(char_ids)
    char_lens = np.asarray(char_lens)
    B, S = word_ids.shape
    C = p["char_emb"].shape[1]
    H = p["w_hh_w"].shape[1]
    b_c = p["b_ih_c"] + p["b_hh_c"]
    b_w = p["b_ih_w"] + p["b_hh_w"]

    outs = []
    for b in range(B):
        feats = []
        for s in range(S):
            h = np.zeros((1, C), np.float32)
            c = np.zeros((1, C), np.float32)
            for t in range(int(char_lens[b, s])):
                x = p["char_emb"][char_ids[b, s, t]][None, :]
                h, c = _np_cell(x, h, c, p["w_ih_c"], p["w_hh_c"], b_c, C)
            feats.append(h[0])
        feats = np.stack(feats)                                     # (S, C)
        we = p["word_emb"][word_ids[b]]                             # (S, W)
        inp = np.concatenate([we, feats], axis=-1)
        h = np.zeros((1, H), np.float32)
        c = np.zeros((1, H), np.float32)
        hs = []
        for s in range(S):
            h, c = _np_cell(inp[s:s + 1], h, c, p["w_ih_w"], p["w_hh_w"], b_w, H)
            hs.append(h[0])
        outs.append(np.stack(hs) @ p["t_w"].T + p["t_b"])
    return np.stack(outs)                                           # (B, S, T)


# ----------------------------------- main --------------------------------------
if __name__ == "__main__":
    ALPHABET_SIZE = 30
    VOCAB_SIZE = 20
    C_EMB = 8          # c_embedding_dim (== char LSTM hidden)
    W_EMB = 16         # w_embedding_dim
    HIDDEN = 32        # hidden_dim
    TARGETS = 8        # target_size
    B = 16             # sentences per call (2 grid blocks of 8 sentences)
    SEQ = 8            # words per sentence
    MAX_WLEN = 6       # max chars per word

    key = jax.random.PRNGKey(0)
    ks = jax.random.split(key, 16)

    def init(k, shape, scale=0.1):
        return (scale * jax.random.normal(k, shape)).astype(jnp.float32)

    params = {
        "char_emb": init(ks[0], (ALPHABET_SIZE, C_EMB)),
        "word_emb": init(ks[1], (VOCAB_SIZE, W_EMB)),
        "w_ih_c": init(ks[2], (4 * C_EMB, C_EMB)),
        "w_hh_c": init(ks[3], (4 * C_EMB, C_EMB)),
        "b_ih_c": init(ks[4], (4 * C_EMB,)),
        "b_hh_c": init(ks[5], (4 * C_EMB,)),
        "w_ih_w": init(ks[6], (4 * HIDDEN, W_EMB + C_EMB)),
        "w_hh_w": init(ks[7], (4 * HIDDEN, HIDDEN)),
        "b_ih_w": init(ks[8], (4 * HIDDEN,)),
        "b_hh_w": init(ks[9], (4 * HIDDEN,)),
        "t_w": init(ks[10], (TARGETS, HIDDEN)),
        "t_b": init(ks[11], (TARGETS,)),
    }

    # Synthetic batch of sentences: word ids, per-word char ids (suffix-padded)
    # and lengths.
    word_ids = jax.random.randint(ks[12], (B, SEQ), 0, VOCAB_SIZE, dtype=jnp.int32)
    char_lens = jax.random.randint(ks[13], (B, SEQ), 1, MAX_WLEN + 1, dtype=jnp.int32)
    char_ids = jax.random.randint(ks[14], (B, SEQ, MAX_WLEN), 0, ALPHABET_SIZE,
                                  dtype=jnp.int32)

    out = pos_lstm_char_forward(params, word_ids, char_ids, char_lens)
    out = jax.block_until_ready(out)

    ref = reference_forward(params, word_ids, char_ids, char_lens)
    assert out.shape == (B, SEQ, TARGETS)
    err = float(np.max(np.abs(np.asarray(out) - ref)))
    assert err < 5e-3, f"max abs error {err}"

    print("KERNEL_OK")
</pallas_src>

<mosaic_0001>
module attributes {stable_mosaic.version = 11 : i64} {
  func.func @pos_lstm_char_kernel(%arg0: i32, %arg1: memref<384x8xf32, #tpu.memory_space<vmem>>, %arg2: memref<384x1xf32, #tpu.memory_space<vmem>>, %arg3: memref<64x16xf32, #tpu.memory_space<vmem>>, %arg4: memref<128x128xf32, #tpu.memory_space<vmem>>, %arg5: memref<64x128xf32, #tpu.memory_space<vmem>>, %arg6: memref<64x32xf32, #tpu.memory_space<vmem>>) attributes {dimension_semantics = [#tpu.dimension_semantics<parallel>], iteration_bounds = array<i64: 2>, scalar_prefetch = 0 : i64, scratch_operands = 1 : i64, tpu.core_type = #tpu.core_type<tc>, window_params = [{transform_indices = @transform_0, window_bounds = array<i64: 384, 8>}, {transform_indices = @transform_1, window_bounds = array<i64: 384, 1>}, {transform_indices = @transform_2, window_bounds = array<i64: 64, 16>}, {pipeline_mode = #tpu.pipeline_mode<synchronous>, transform_indices = @transform_3, window_bounds = array<i64: 128, 128>}, {transform_indices = @transform_4, window_bounds = array<i64: 64, 128>}]} {
    %c0 = arith.constant 0 : index
    %c0_0 = arith.constant 0 : index
    %0 = vector.load %arg4[%c0, %c0_0] : memref<128x128xf32, #tpu.memory_space<vmem>>, vector<8x32xf32>
    %c8 = arith.constant 8 : index
    %c0_1 = arith.constant 0 : index
    %1 = vector.load %arg4[%c8, %c0_1] : memref<128x128xf32, #tpu.memory_space<vmem>>, vector<8x32xf32>
    %c16 = arith.constant 16 : index
    %c0_2 = arith.constant 0 : index
    %2 = vector.load %arg4[%c16, %c0_2] : memref<128x128xf32, #tpu.memory_space<vmem>>, vector<1x32xf32>
    %c24 = arith.constant 24 : index
    %c0_3 = arith.constant 0 : index
    %3 = vector.load %arg4[%c24, %c0_3] : memref<128x128xf32, #tpu.memory_space<vmem>>, vector<16x128xf32>
    %c40 = arith.constant 40 : index
    %c0_4 = arith.constant 0 : index
    %4 = vector.load %arg4[%c40, %c0_4] : memref<128x128xf32, #tpu.memory_space<vmem>>, vector<8x128xf32>
    %c48 = arith.constant 48 : index
    %c0_5 = arith.constant 0 : index
    %5 = vector.load %arg4[%c48, %c0_5] : memref<128x128xf32, #tpu.memory_space<vmem>>, vector<32x128xf32>
    %c80 = arith.constant 80 : index
    %c0_6 = arith.constant 0 : index
    %6 = vector.load %arg4[%c80, %c0_6] : memref<128x128xf32, #tpu.memory_space<vmem>>, vector<1x128xf32>
    %c88 = arith.constant 88 : index
    %c0_7 = arith.constant 0 : index
    %7 = vector.load %arg4[%c88, %c0_7] : memref<128x128xf32, #tpu.memory_space<vmem>>, vector<32x128xf32>
    %c120 = arith.constant 120 : index
    %c0_8 = arith.constant 0 : index
    %8 = vector.load %arg4[%c120, %c0_8] : memref<128x128xf32, #tpu.memory_space<vmem>>, vector<1x128xf32>
    %9 = tpu.iota {dimensions = array<i32: 1>} : vector<64x32xi32>
    %c16_i32 = arith.constant 16 : i32
    %10 = vector.broadcast %c16_i32 : i32 to vector<64x32xi32>
    %11 = arith.cmpi sge, %9, %10 : vector<64x32xi32>
    %c24_i32 = arith.constant 24 : i32
    %12 = vector.broadcast %c24_i32 : i32 to vector<64x32xi32>
    %13 = arith.cmpi slt, %9, %12 : vector<64x32xi32>
    %14 = arith.andi %11, %13 : vector<64x32xi1>
    %15 = tpu.iota {dimensions = array<i32: 1>} : vector<8x128xi32>
    %c64_i32 = arith.constant 64 : i32
    %16 = vector.broadcast %c64_i32 : i32 to vector<8x128xi32>
    %17 = arith.cmpi sge, %15, %16 : vector<8x128xi32>
    %c96_i32 = arith.constant 96 : i32
    %18 = vector.broadcast %c96_i32 : i32 to vector<8x128xi32>
    %19 = arith.cmpi slt, %15, %18 : vector<8x128xi32>
    %20 = arith.andi %17, %19 : vector<8x128xi1>
    %c0_9 = arith.constant 0 : index
    %c0_10 = arith.constant 0 : index
    %21 = vector.load %arg2[%c0_9, %c0_10] : memref<384x1xf32, #tpu.memory_space<vmem>>, vector<384x1xf32>
    %cst = arith.constant 5.000000e-01 : f32
    %22 = vector.broadcast %cst : f32 to vector<384x1xf32>
    %23 = arith.cmpf ogt, %21, %22 : vector<384x1xf32>
    %24 = vector.shape_cast %23 : vector<384x1xi1> to vector<384x1xi1>
    %25 = vector.broadcast %24 : vector<384x1xi1> to vector<384x8xi1>
    %c0_11 = arith.constant 0 : index
    %c0_12 = arith.constant 0 : index
    %26 = vector.load %arg1[%c0_11, %c0_12] : memref<384x8xf32, #tpu.memory_space<vmem>>, vector<384x8xf32>
    %cst_13 = arith.constant dense<0.000000e+00> : vector<384x32xf32>
    %27 = tpu.matmul %26, %0, %cst_13 {dimension_numbers = #tpu.dot_dimension_numbers<[1], [0], [0], [1], [0, 0, 1, 1], [], []>} : vector<384x8xf32>, vector<8x32xf32>, vector<384x32xf32> -> vector<384x32xf32>
    %28 = vector.broadcast %2 : vector<1x32xf32> to vector<384x32xf32>
    %29 = arith.addf %27, %28 : vector<384x32xf32>
    %cst_14 = arith.constant 0.000000e+00 : f32
    %30 = vector.broadcast %cst_14 : f32 to vector<64x8xf32>
    %cst_15 = arith.constant 0.000000e+00 : f32
    %31 = vector.broadcast %cst_15 : f32 to vector<64x8xf32>
    %32 = vector.extract_strided_slice %29 {offsets = [0, 0], sizes = [64, 32], strides = [1, 1]} : vector<384x32xf32> to vector<64x32xf32>
    %cst_16 = arith.constant dense<0.000000e+00> : vector<64x32xf32>
    %33 = tpu.matmul %30, %1, %cst_16 {dimension_numbers = #tpu.dot_dimension_numbers<[1], [0], [0], [1], [0, 0, 1, 1], [], []>} : vector<64x8xf32>, vector<8x32xf32>, vector<64x32xf32> -> vector<64x32xf32>
    %34 = arith.addf %32, %33 : vector<64x32xf32>
    %35 = arith.addf %34, %34 : vector<64x32xf32>
    %36 = arith.select %14, %35, %34 : vector<64x32xi1>, vector<64x32xf32>
    %37 = arith.negf %36 : vector<64x32xf32>
    %38 = math.exp %37 : vector<64x32xf32>
    %cst_17 = arith.constant 1.000000e+00 : f32
    %39 = vector.broadcast %cst_17 : f32 to vector<64x32xf32>
    %40 = arith.addf %39, %38 : vector<64x32xf32>
    %41 = arith.divf %39, %40 : vector<64x32xf32>
    %42 = arith.addf %41, %41 : vector<64x32xf32>
    %cst_18 = arith.constant 1.000000e+00 : f32
    %43 = vector.broadcast %cst_18 : f32 to vector<64x32xf32>
    %44 = arith.subf %42, %43 : vector<64x32xf32>
    %45 = arith.select %14, %44, %41 : vector<64x32xi1>, vector<64x32xf32>
    %46 = vector.extract_strided_slice %45 {offsets = [0, 0], sizes = [64, 8], strides = [1, 1]} : vector<64x32xf32> to vector<64x8xf32>
    %47 = vector.extract_strided_slice %45 {offsets = [0, 8], sizes = [64, 8], strides = [1, 1]} : vector<64x32xf32> to vector<64x8xf32>
    %48 = vector.extract_strided_slice %45 {offsets = [0, 16], sizes = [64, 8], strides = [1, 1]} : vector<64x32xf32> to vector<64x8xf32>
    %49 = vector.extract_strided_slice %45 {offsets = [0, 24], sizes = [64, 8], strides = [1, 1]} : vector<64x32xf32> to vector<64x8xf32>
    %50 = arith.mulf %47, %31 : vector<64x8xf32>
    %51 = arith.mulf %46, %48 : vector<64x8xf32>
    %52 = arith.addf %50, %51 : vector<64x8xf32>
    %53 = math.tanh %52 : vector<64x8xf32>
    %54 = arith.mulf %49, %53 : vector<64x8xf32>
    %55 = vector.extract_strided_slice %25 {offsets = [0, 0], sizes = [64, 8], strides = [1, 1]} : vector<384x8xi1> to vector<64x8xi1>
    %56 = arith.select %55, %54, %30 : vector<64x8xi1>, vector<64x8xf32>
    %57 = arith.select %55, %52, %31 : vector<64x8xi1>, vector<64x8xf32>
    %58 = vector.extract_strided_slice %29 {offsets = [64, 0], sizes = [64, 32], strides = [1, 1]} : vector<384x32xf32> to vector<64x32xf32>
    %cst_19 = arith.constant dense<0.000000e+00> : vector<64x32xf32>
    %59 = tpu.matmul %56, %1, %cst_19 {dimension_numbers = #tpu.dot_dimension_numbers<[1], [0], [0], [1], [0, 0, 1, 1], [], []>} : vector<64x8xf32>, vector<8x32xf32>, vector<64x32xf32> -> vector<64x32xf32>
    %60 = arith.addf %58, %59 : vector<64x32xf32>
    %61 = arith.addf %60, %60 : vector<64x32xf32>
    %62 = arith.select %14, %61, %60 : vector<64x32xi1>, vector<64x32xf32>
    %63 = arith.negf %62 : vector<64x32xf32>
    %64 = math.exp %63 : vector<64x32xf32>
    %cst_20 = arith.constant 1.000000e+00 : f32
    %65 = vector.broadcast %cst_20 : f32 to vector<64x32xf32>
    %66 = arith.addf %65, %64 : vector<64x32xf32>
    %67 = arith.divf %65, %66 : vector<64x32xf32>
    %68 = arith.addf %67, %67 : vector<64x32xf32>
    %cst_21 = arith.constant 1.000000e+00 : f32
    %69 = vector.broadcast %cst_21 : f32 to vector<64x32xf32>
    %70 = arith.subf %68, %69 : vector<64x32xf32>
    %71 = arith.select %14, %70, %67 : vector<64x32xi1>, vector<64x32xf32>
    %72 = vector.extract_strided_slice %71 {offsets = [0, 0], sizes = [64, 8], strides = [1, 1]} : vector<64x32xf32> to vector<64x8xf32>
    %73 = vector.extract_strided_slice %71 {offsets = [0, 8], sizes = [64, 8], strides = [1, 1]} : vector<64x32xf32> to vector<64x8xf32>
    %74 = vector.extract_strided_slice %71 {offsets = [0, 16], sizes = [64, 8], strides = [1, 1]} : vector<64x32xf32> to vector<64x8xf32>
    %75 = vector.extract_strided_slice %71 {offsets = [0, 24], sizes = [64, 8], strides = [1, 1]} : vector<64x32xf32> to vector<64x8xf32>
    %76 = arith.mulf %73, %57 : vector<64x8xf32>
    %77 = arith.mulf %72, %74 : vector<64x8xf32>
    %78 = arith.addf %76, %77 : vector<64x8xf32>
    %79 = math.tanh %78 : vector<64x8xf32>
    %80 = arith.mulf %75, %79 : vector<64x8xf32>
    %81 = vector.extract_strided_slice %25 {offsets = [64, 0], sizes = [64, 8], strides = [1, 1]} : vector<384x8xi1> to vector<64x8xi1>
    %82 = arith.select %81, %80, %56 : vector<64x8xi1>, vector<64x8xf32>
    %83 = arith.select %81, %78, %57 : vector<64x8xi1>, vector<64x8xf32>
    %84 = vector.extract_strided_slice %29 {offsets = [128, 0], sizes = [64, 32], strides = [1, 1]} : vector<384x32xf32> to vector<64x32xf32>
    %cst_22 = arith.constant dense<0.000000e+00> : vector<64x32xf32>
    %85 = tpu.matmul %82, %1, %cst_22 {dimension_numbers = #tpu.dot_dimension_numbers<[1], [0], [0], [1], [0, 0, 1, 1], [], []>} : vector<64x8xf32>, vector<8x32xf32>, vector<64x32xf32> -> vector<64x32xf32>
    %86 = arith.addf %84, %85 : vector<64x32xf32>
    %87 = arith.addf %86, %86 : vector<64x32xf32>
    %88 = arith.select %14, %87, %86 : vector<64x32xi1>, vector<64x32xf32>
    %89 = arith.negf %88 : vector<64x32xf32>
    %90 = math.exp %89 : vector<64x32xf32>
    %cst_23 = arith.constant 1.000000e+00 : f32
    %91 = vector.broadcast %cst_23 : f32 to vector<64x32xf32>
    %92 = arith.addf %91, %90 : vector<64x32xf32>
    %93 = arith.divf %91, %92 : vector<64x32xf32>
    %94 = arith.addf %93, %93 : vector<64x32xf32>
    %cst_24 = arith.constant 1.000000e+00 : f32
    %95 = vector.broadcast %cst_24 : f32 to vector<64x32xf32>
    %96 = arith.subf %94, %95 : vector<64x32xf32>
    %97 = arith.select %14, %96, %93 : vector<64x32xi1>, vector<64x32xf32>
    %98 = vector.extract_strided_slice %97 {offsets = [0, 0], sizes = [64, 8], strides = [1, 1]} : vector<64x32xf32> to vector<64x8xf32>
    %99 = vector.extract_strided_slice %97 {offsets = [0, 8], sizes = [64, 8], strides = [1, 1]} : vector<64x32xf32> to vector<64x8xf32>
    %100 = vector.extract_strided_slice %97 {offsets = [0, 16], sizes = [64, 8], strides = [1, 1]} : vector<64x32xf32> to vector<64x8xf32>
    %101 = vector.extract_strided_slice %97 {offsets = [0, 24], sizes = [64, 8], strides = [1, 1]} : vector<64x32xf32> to vector<64x8xf32>
    %102 = arith.mulf %99, %83 : vector<64x8xf32>
    %103 = arith.mulf %98, %100 : vector<64x8xf32>
    %104 = arith.addf %102, %103 : vector<64x8xf32>
    %105 = math.tanh %104 : vector<64x8xf32>
    %106 = arith.mulf %101, %105 : vector<64x8xf32>
    %107 = vector.extract_strided_slice %25 {offsets = [128, 0], sizes = [64, 8], strides = [1, 1]} : vector<384x8xi1> to vector<64x8xi1>
    %108 = arith.select %107, %106, %82 : vector<64x8xi1>, vector<64x8xf32>
    %109 = arith.select %107, %104, %83 : vector<64x8xi1>, vector<64x8xf32>
    %110 = vector.extract_strided_slice %29 {offsets = [192, 0], sizes = [64, 32], strides = [1, 1]} : vector<384x32xf32> to vector<64x32xf32>
    %cst_25 = arith.constant dense<0.000000e+00> : vector<64x32xf32>
    %111 = tpu.matmul %108, %1, %cst_25 {dimension_numbers = #tpu.dot_dimension_numbers<[1], [0], [0], [1], [0, 0, 1, 1], [], []>} : vector<64x8xf32>, vector<8x32xf32>, vector<64x32xf32> -> vector<64x32xf32>
    %112 = arith.addf %110, %111 : vector<64x32xf32>
    %113 = arith.addf %112, %112 : vector<64x32xf32>
    %114 = arith.select %14, %113, %112 : vector<64x32xi1>, vector<64x32xf32>
    %115 = arith.negf %114 : vector<64x32xf32>
    %116 = math.exp %115 : vector<64x32xf32>
    %cst_26 = arith.constant 1.000000e+00 : f32
    %117 = vector.broadcast %cst_26 : f32 to vector<64x32xf32>
    %118 = arith.addf %117, %116 : vector<64x32xf32>
    %119 = arith.divf %117, %118 : vector<64x32xf32>
    %120 = arith.addf %119, %119 : vector<64x32xf32>
    %cst_27 = arith.constant 1.000000e+00 : f32
    %121 = vector.broadcast %cst_27 : f32 to vector<64x32xf32>
    %122 = arith.subf %120, %121 : vector<64x32xf32>
    %123 = arith.select %14, %122, %119 : vector<64x32xi1>, vector<64x32xf32>
    %124 = vector.extract_strided_slice %123 {offsets = [0, 0], sizes = [64, 8], strides = [1, 1]} : vector<64x32xf32> to vector<64x8xf32>
    %125 = vector.extract_strided_slice %123 {offsets = [0, 8], sizes = [64, 8], strides = [1, 1]} : vector<64x32xf32> to vector<64x8xf32>
    %126 = vector.extract_strided_slice %123 {offsets = [0, 16], sizes = [64, 8], strides = [1, 1]} : vector<64x32xf32> to vector<64x8xf32>
    %127 = vector.extract_strided_slice %123 {offsets = [0, 24], sizes = [64, 8], strides = [1, 1]} : vector<64x32xf32> to vector<64x8xf32>
    %128 = arith.mulf %125, %109 : vector<64x8xf32>
    %129 = arith.mulf %124, %126 : vector<64x8xf32>
    %130 = arith.addf %128, %129 : vector<64x8xf32>
    %131 = math.tanh %130 : vector<64x8xf32>
    %132 = arith.mulf %127, %131 : vector<64x8xf32>
    %133 = vector.extract_strided_slice %25 {offsets = [192, 0], sizes = [64, 8], strides = [1, 1]} : vector<384x8xi1> to vector<64x8xi1>
    %134 = arith.select %133, %132, %108 : vector<64x8xi1>, vector<64x8xf32>
    %135 = arith.select %133, %130, %109 : vector<64x8xi1>, vector<64x8xf32>
    %136 = vector.extract_strided_slice %29 {offsets = [256, 0], sizes = [64, 32], strides = [1, 1]} : vector<384x32xf32> to vector<64x32xf32>
    %cst_28 = arith.constant dense<0.000000e+00> : vector<64x32xf32>
    %137 = tpu.matmul %134, %1, %cst_28 {dimension_numbers = #tpu.dot_dimension_numbers<[1], [0], [0], [1], [0, 0, 1, 1], [], []>} : vector<64x8xf32>, vector<8x32xf32>, vector<64x32xf32> -> vector<64x32xf32>
    %138 = arith.addf %136, %137 : vector<64x32xf32>
    %139 = arith.addf %138, %138 : vector<64x32xf32>
    %140 = arith.select %14, %139, %138 : vector<64x32xi1>, vector<64x32xf32>
    %141 = arith.negf %140 : vector<64x32xf32>
    %142 = math.exp %141 : vector<64x32xf32>
    %cst_29 = arith.constant 1.000000e+00 : f32
    %143 = vector.broadcast %cst_29 : f32 to vector<64x32xf32>
    %144 = arith.addf %143, %142 : vector<64x32xf32>
    %145 = arith.divf %143, %144 : vector<64x32xf32>
    %146 = arith.addf %145, %145 : vector<64x32xf32>
    %cst_30 = arith.constant 1.000000e+00 : f32
    %147 = vector.broadcast %cst_30 : f32 to vector<64x32xf32>
    %148 = arith.subf %146, %147 : vector<64x32xf32>
    %149 = arith.select %14, %148, %145 : vector<64x32xi1>, vector<64x32xf32>
    %150 = vector.extract_strided_slice %149 {offsets = [0, 0], sizes = [64, 8], strides = [1, 1]} : vector<64x32xf32> to vector<64x8xf32>
    %151 = vector.extract_strided_slice %149 {offsets = [0, 8], sizes = [64, 8], strides = [1, 1]} : vector<64x32xf32> to vector<64x8xf32>
    %152 = vector.extract_strided_slice %149 {offsets = [0, 16], sizes = [64, 8], strides = [1, 1]} : vector<64x32xf32> to vector<64x8xf32>
    %153 = vector.extract_strided_slice %149 {offsets = [0, 24], sizes = [64, 8], strides = [1, 1]} : vector<64x32xf32> to vector<64x8xf32>
    %154 = arith.mulf %151, %135 : vector<64x8xf32>
    %155 = arith.mulf %150, %152 : vector<64x8xf32>
    %156 = arith.addf %154, %155 : vector<64x8xf32>
    %157 = math.tanh %156 : vector<64x8xf32>
    %158 = arith.mulf %153, %157 : vector<64x8xf32>
    %159 = vector.extract_strided_slice %25 {offsets = [256, 0], sizes = [64, 8], strides = [1, 1]} : vector<384x8xi1> to vector<64x8xi1>
    %160 = arith.select %159, %158, %134 : vector<64x8xi1>, vector<64x8xf32>
    %161 = arith.select %159, %156, %135 : vector<64x8xi1>, vector<64x8xf32>
    %162 = vector.extract_strided_slice %29 {offsets = [320, 0], sizes = [64, 32], strides = [1, 1]} : vector<384x32xf32> to vector<64x32xf32>
    %cst_31 = arith.constant dense<0.000000e+00> : vector<64x32xf32>
    %163 = tpu.matmul %160, %1, %cst_31 {dimension_numbers = #tpu.dot_dimension_numbers<[1], [0], [0], [1], [0, 0, 1, 1], [], []>} : vector<64x8xf32>, vector<8x32xf32>, vector<64x32xf32> -> vector<64x32xf32>
    %164 = arith.addf %162, %163 : vector<64x32xf32>
    %165 = arith.addf %164, %164 : vector<64x32xf32>
    %166 = arith.select %14, %165, %164 : vector<64x32xi1>, vector<64x32xf32>
    %167 = arith.negf %166 : vector<64x32xf32>
    %168 = math.exp %167 : vector<64x32xf32>
    %cst_32 = arith.constant 1.000000e+00 : f32
    %169 = vector.broadcast %cst_32 : f32 to vector<64x32xf32>
    %170 = arith.addf %169, %168 : vector<64x32xf32>
    %171 = arith.divf %169, %170 : vector<64x32xf32>
    %172 = arith.addf %171, %171 : vector<64x32xf32>
    %cst_33 = arith.constant 1.000000e+00 : f32
    %173 = vector.broadcast %cst_33 : f32 to vector<64x32xf32>
    %174 = arith.subf %172, %173 : vector<64x32xf32>
    %175 = arith.select %14, %174, %171 : vector<64x32xi1>, vector<64x32xf32>
    %176 = vector.extract_strided_slice %175 {offsets = [0, 0], sizes = [64, 8], strides = [1, 1]} : vector<64x32xf32> to vector<64x8xf32>
    %177 = vector.extract_strided_slice %175 {offsets = [0, 8], sizes = [64, 8], strides = [1, 1]} : vector<64x32xf32> to vector<64x8xf32>
    %178 = vector.extract_strided_slice %175 {offsets = [0, 16], sizes = [64, 8], strides = [1, 1]} : vector<64x32xf32> to vector<64x8xf32>
    %179 = vector.extract_strided_slice %175 {offsets = [0, 24], sizes = [64, 8], strides = [1, 1]} : vector<64x32xf32> to vector<64x8xf32>
    %180 = arith.mulf %177, %161 : vector<64x8xf32>
    %181 = arith.mulf %176, %178 : vector<64x8xf32>
    %182 = arith.addf %180, %181 : vector<64x8xf32>
    %183 = math.tanh %182 : vector<64x8xf32>
    %184 = arith.mulf %179, %183 : vector<64x8xf32>
    %185 = vector.extract_strided_slice %25 {offsets = [320, 0], sizes = [64, 8], strides = [1, 1]} : vector<384x8xi1> to vector<64x8xi1>
    %186 = arith.select %185, %184, %160 : vector<64x8xi1>, vector<64x8xf32>
    %c0_34 = arith.constant 0 : index
    %c0_35 = arith.constant 0 : index
    %187 = vector.load %arg3[%c0_34, %c0_35] : memref<64x16xf32, #tpu.memory_space<vmem>>, vector<64x16xf32>
    %cst_36 = arith.constant dense<0.000000e+00> : vector<64x128xf32>
    %188 = tpu.matmul %187, %3, %cst_36 {dimension_numbers = #tpu.dot_dimension_numbers<[1], [0], [0], [1], [0, 0, 1, 1], [], []>} : vector<64x16xf32>, vector<16x128xf32>, vector<64x128xf32> -> vector<64x128xf32>
    %cst_37 = arith.constant dense<0.000000e+00> : vector<64x128xf32>
    %189 = tpu.matmul %186, %4, %cst_37 {dimension_numbers = #tpu.dot_dimension_numbers<[1], [0], [0], [1], [0, 0, 1, 1], [], []>} : vector<64x8xf32>, vector<8x128xf32>, vector<64x128xf32> -> vector<64x128xf32>
    %190 = arith.addf %188, %189 : vector<64x128xf32>
    %191 = vector.broadcast %6 : vector<1x128xf32> to vector<64x128xf32>
    %192 = arith.addf %190, %191 : vector<64x128xf32>
    %cst_38 = arith.constant 0.000000e+00 : f32
    %193 = vector.broadcast %cst_38 : f32 to vector<8x32xf32>
    %cst_39 = arith.constant 0.000000e+00 : f32
    %194 = vector.broadcast %cst_39 : f32 to vector<8x32xf32>
    %195 = vector.extract_strided_slice %192 {offsets = [0, 0], sizes = [8, 128], strides = [1, 1]} : vector<64x128xf32> to vector<8x128xf32>
    %cst_40 = arith.constant dense<0.000000e+00> : vector<8x128xf32>
    %196 = tpu.matmul %193, %5, %cst_40 {dimension_numbers = #tpu.dot_dimension_numbers<[1], [0], [0], [1], [0, 0, 1, 1], [], []>} : vector<8x32xf32>, vector<32x128xf32>, vector<8x128xf32> -> vector<8x128xf32>
    %197 = arith.addf %195, %196 : vector<8x128xf32>
    %198 = arith.addf %197, %197 : vector<8x128xf32>
    %199 = arith.select %20, %198, %197 : vector<8x128xi1>, vector<8x128xf32>
    %200 = arith.negf %199 : vector<8x128xf32>
    %201 = math.exp %200 : vector<8x128xf32>
    %cst_41 = arith.constant 1.000000e+00 : f32
    %202 = vector.broadcast %cst_41 : f32 to vector<8x128xf32>
    %203 = arith.addf %202, %201 : vector<8x128xf32>
    %204 = arith.divf %202, %203 : vector<8x128xf32>
    %205 = arith.addf %204, %204 : vector<8x128xf32>
    %cst_42 = arith.constant 1.000000e+00 : f32
    %206 = vector.broadcast %cst_42 : f32 to vector<8x128xf32>
    %207 = arith.subf %205, %206 : vector<8x128xf32>
    %208 = arith.select %20, %207, %204 : vector<8x128xi1>, vector<8x128xf32>
    %209 = vector.extract_strided_slice %208 {offsets = [0, 0], sizes = [8, 32], strides = [1, 1]} : vector<8x128xf32> to vector<8x32xf32>
    %210 = vector.extract_strided_slice %208 {offsets = [0, 32], sizes = [8, 32], strides = [1, 1]} : vector<8x128xf32> to vector<8x32xf32>
    %211 = vector.extract_strided_slice %208 {offsets = [0, 64], sizes = [8, 32], strides = [1, 1]} : vector<8x128xf32> to vector<8x32xf32>
    %212 = vector.extract_strided_slice %208 {offsets = [0, 96], sizes = [8, 32], strides = [1, 1]} : vector<8x128xf32> to vector<8x32xf32>
    %213 = arith.mulf %210, %194 : vector<8x32xf32>
    %214 = arith.mulf %209, %211 : vector<8x32xf32>
    %215 = arith.addf %213, %214 : vector<8x32xf32>
    %216 = math.tanh %215 : vector<8x32xf32>
    %217 = arith.mulf %212, %216 : vector<8x32xf32>
    %c0_43 = arith.constant 0 : index
    %c0_44 = arith.constant 0 : index
    %218 = vector.load %arg6[%c0_43, %c0_44] : memref<64x32xf32, #tpu.memory_space<vmem>>, vector<8x32xf32>
    tpu.vector_store %arg6[%c0_43, %c0_44], %217 {strides = array<i32>} : memref<64x32xf32, #tpu.memory_space<vmem>>, vector<8x32xf32>,
    %219 = vector.extract_strided_slice %192 {offsets = [8, 0], sizes = [8, 128], strides = [1, 1]} : vector<64x128xf32> to vector<8x128xf32>
    %cst_45 = arith.constant dense<0.000000e+00> : vector<8x128xf32>
    %220 = tpu.matmul %217, %5, %cst_45 {dimension_numbers = #tpu.dot_dimension_numbers<[1], [0], [0], [1], [0, 0, 1, 1], [], []>} : vector<8x32xf32>, vector<32x128xf32>, vector<8x128xf32> -> vector<8x128xf32>
    %221 = arith.addf %219, %220 : vector<8x128xf32>
    %222 = arith.addf %221, %221 : vector<8x128xf32>
    %223 = arith.select %20, %222, %221 : vector<8x128xi1>, vector<8x128xf32>
    %224 = arith.negf %223 : vector<8x128xf32>
    %225 = math.exp %224 : vector<8x128xf32>
    %cst_46 = arith.constant 1.000000e+00 : f32
    %226 = vector.broadcast %cst_46 : f32 to vector<8x128xf32>
    %227 = arith.addf %226, %225 : vector<8x128xf32>
    %228 = arith.divf %226, %227 : vector<8x128xf32>
    %229 = arith.addf %228, %228 : vector<8x128xf32>
    %cst_47 = arith.constant 1.000000e+00 : f32
    %230 = vector.broadcast %cst_47 : f32 to vector<8x128xf32>
    %231 = arith.subf %229, %230 : vector<8x128xf32>
    %232 = arith.select %20, %231, %228 : vector<8x128xi1>, vector<8x128xf32>
    %233 = vector.extract_strided_slice %232 {offsets = [0, 0], sizes = [8, 32], strides = [1, 1]} : vector<8x128xf32> to vector<8x32xf32>
    %234 = vector.extract_strided_slice %232 {offsets = [0, 32], sizes = [8, 32], strides = [1, 1]} : vector<8x128xf32> to vector<8x32xf32>
    %235 = vector.extract_strided_slice %232 {offsets = [0, 64], sizes = [8, 32], strides = [1, 1]} : vector<8x128xf32> to vector<8x32xf32>
    %236 = vector.extract_strided_slice %232 {offsets = [0, 96], sizes = [8, 32], strides = [1, 1]} : vector<8x128xf32> to vector<8x32xf32>
    %237 = arith.mulf %234, %215 : vector<8x32xf32>
    %238 = arith.mulf %233, %235 : vector<8x32xf32>
    %239 = arith.addf %237, %238 : vector<8x32xf32>
    %240 = math.tanh %239 : vector<8x32xf32>
    %241 = arith.mulf %236, %240 : vector<8x32xf32>
    %c8_48 = arith.constant 8 : index
    %c0_49 = arith.constant 0 : index
    %242 = vector.load %arg6[%c8_48, %c0_49] : memref<64x32xf32, #tpu.memory_space<vmem>>, vector<8x32xf32>
    tpu.vector_store %arg6[%c8_48, %c0_49], %241 {strides = array<i32>} : memref<64x32xf32, #tpu.memory_space<vmem>>, vector<8x32xf32>,
    %243 = vector.extract_strided_slice %192 {offsets = [16, 0], sizes = [8, 128], strides = [1, 1]} : vector<64x128xf32> to vector<8x128xf32>
    %cst_50 = arith.constant dense<0.000000e+00> : vector<8x128xf32>
    %244 = tpu.matmul %241, %5, %cst_50 {dimension_numbers = #tpu.dot_dimension_numbers<[1], [0], [0], [1], [0, 0, 1, 1], [], []>} : vector<8x32xf32>, vector<32x128xf32>, vector<8x128xf32> -> vector<8x128xf32>
    %245 = arith.addf %243, %244 : vector<8x128xf32>
    %246 = arith.addf %245, %245 : vector<8x128xf32>
    %247 = arith.select %20, %246, %245 : vector<8x128xi1>, vector<8x128xf32>
    %248 = arith.negf %247 : vector<8x128xf32>
    %249 = math.exp %248 : vector<8x128xf32>
    %cst_51 = arith.constant 1.000000e+00 : f32
    %250 = vector.broadcast %cst_51 : f32 to vector<8x128xf32>
    %251 = arith.addf %250, %249 : vector<8x128xf32>
    %252 = arith.divf %250, %251 : vector<8x128xf32>
    %253 = arith.addf %252, %252 : vector<8x128xf32>
    %cst_52 = arith.constant 1.000000e+00 : f32
    %254 = vector.broadcast %cst_52 : f32 to vector<8x128xf32>
    %255 = arith.subf %253, %254 : vector<8x128xf32>
    %256 = arith.select %20, %255, %252 : vector<8x128xi1>, vector<8x128xf32>
    %257 = vector.extract_strided_slice %256 {offsets = [0, 0], sizes = [8, 32], strides = [1, 1]} : vector<8x128xf32> to vector<8x32xf32>
    %258 = vector.extract_strided_slice %256 {offsets = [0, 32], sizes = [8, 32], strides = [1, 1]} : vector<8x128xf32> to vector<8x32xf32>
    %259 = vector.extract_strided_slice %256 {offsets = [0, 64], sizes = [8, 32], strides = [1, 1]} : vector<8x128xf32> to vector<8x32xf32>
    %260 = vector.extract_strided_slice %256 {offsets = [0, 96], sizes = [8, 32], strides = [1, 1]} : vector<8x128xf32> to vector<8x32xf32>
    %261 = arith.mulf %258, %239 : vector<8x32xf32>
    %262 = arith.mulf %257, %259 : vector<8x32xf32>
    %263 = arith.addf %261, %262 : vector<8x32xf32>
    %264 = math.tanh %263 : vector<8x32xf32>
    %265 = arith.mulf %260, %264 : vector<8x32xf32>
    %c16_53 = arith.constant 16 : index
    %c0_54 = arith.constant 0 : index
    %266 = vector.load %arg6[%c16_53, %c0_54] : memref<64x32xf32, #tpu.memory_space<vmem>>, vector<8x32xf32>
    tpu.vector_store %arg6[%c16_53, %c0_54], %265 {strides = array<i32>} : memref<64x32xf32, #tpu.memory_space<vmem>>, vector<8x32xf32>,
    %267 = vector.extract_strided_slice %192 {offsets = [24, 0], sizes = [8, 128], strides = [1, 1]} : vector<64x128xf32> to vector<8x128xf32>
    %cst_55 = arith.constant dense<0.000000e+00> : vector<8x128xf32>
    %268 = tpu.matmul %265, %5, %cst_55 {dimension_numbers = #tpu.dot_dimension_numbers<[1], [0], [0], [1], [0, 0, 1, 1], [], []>} : vector<8x32xf32>, vector<32x128xf32>, vector<8x128xf32> -> vector<8x128xf32>
    %269 = arith.addf %267, %268 : vector<8x128xf32>
    %270 = arith.addf %269, %269 : vector<8x128xf32>
    %271 = arith.select %20, %270, %269 : vector<8x128xi1>, vector<8x128xf32>
    %272 = arith.negf %271 : vector<8x128xf32>
    %273 = math.exp %272 : vector<8x128xf32>
    %cst_56 = arith.constant 1.000000e+00 : f32
    %274 = vector.broadcast %cst_56 : f32 to vector<8x128xf32>
    %275 = arith.addf %274, %273 : vector<8x128xf32>
    %276 = arith.divf %274, %275 : vector<8x128xf32>
    %277 = arith.addf %276, %276 : vector<8x128xf32>
    %cst_57 = arith.constant 1.000000e+00 : f32
    %278 = vector.broadcast %cst_57 : f32 to vector<8x128xf32>
    %279 = arith.subf %277, %278 : vector<8x128xf32>
    %280 = arith.select %20, %279, %276 : vector<8x128xi1>, vector<8x128xf32>
    %281 = vector.extract_strided_slice %280 {offsets = [0, 0], sizes = [8, 32], strides = [1, 1]} : vector<8x128xf32> to vector<8x32xf32>
    %282 = vector.extract_strided_slice %280 {offsets = [0, 32], sizes = [8, 32], strides = [1, 1]} : vector<8x128xf32> to vector<8x32xf32>
    %283 = vector.extract_strided_slice %280 {offsets = [0, 64], sizes = [8, 32], strides = [1, 1]} : vector<8x128xf32> to vector<8x32xf32>
    %284 = vector.extract_strided_slice %280 {offsets = [0, 96], sizes = [8, 32], strides = [1, 1]} : vector<8x128xf32> to vector<8x32xf32>
    %285 = arith.mulf %282, %263 : vector<8x32xf32>
    %286 = arith.mulf %281, %283 : vector<8x32xf32>
    %287 = arith.addf %285, %286 : vector<8x32xf32>
    %288 = math.tanh %287 : vector<8x32xf32>
    %289 = arith.mulf %284, %288 : vector<8x32xf32>
    %c24_58 = arith.constant 24 : index
    %c0_59 = arith.constant 0 : index
    %290 = vector.load %arg6[%c24_58, %c0_59] : memref<64x32xf32, #tpu.memory_space<vmem>>, vector<8x32xf32>
    tpu.vector_store %arg6[%c24_58, %c0_59], %289 {strides = array<i32>} : memref<64x32xf32, #tpu.memory_space<vmem>>, vector<8x32xf32>,
    %291 = vector.extract_strided_slice %192 {offsets = [32, 0], sizes = [8, 128], strides = [1, 1]} : vector<64x128xf32> to vector<8x128xf32>
    %cst_60 = arith.constant dense<0.000000e+00> : vector<8x128xf32>
    %292 = tpu.matmul %289, %5, %cst_60 {dimension_numbers = #tpu.dot_dimension_numbers<[1], [0], [0], [1], [0, 0, 1, 1], [], []>} : vector<8x32xf32>, vector<32x128xf32>, vector<8x128xf32> -> vector<8x128xf32>
    %293 = arith.addf %291, %292 : vector<8x128xf32>
    %294 = arith.addf %293, %293 : vector<8x128xf32>
    %295 = arith.select %20, %294, %293 : vector<8x128xi1>, vector<8x128xf32>
    %296 = arith.negf %295 : vector<8x128xf32>
    %297 = math.exp %296 : vector<8x128xf32>
    %cst_61 = arith.constant 1.000000e+00 : f32
    %298 = vector.broadcast %cst_61 : f32 to vector<8x128xf32>
    %299 = arith.addf %298, %297 : vector<8x128xf32>
    %300 = arith.divf %298, %299 : vector<8x128xf32>
    %301 = arith.addf %300, %300 : vector<8x128xf32>
    %cst_62 = arith.constant 1.000000e+00 : f32
    %302 = vector.broadcast %cst_62 : f32 to vector<8x128xf32>
    %303 = arith.subf %301, %302 : vector<8x128xf32>
    %304 = arith.select %20, %303, %300 : vector<8x128xi1>, vector<8x128xf32>
    %305 = vector.extract_strided_slice %304 {offsets = [0, 0], sizes = [8, 32], strides = [1, 1]} : vector<8x128xf32> to vector<8x32xf32>
    %306 = vector.extract_strided_slice %304 {offsets = [0, 32], sizes = [8, 32], strides = [1, 1]} : vector<8x128xf32> to vector<8x32xf32>
    %307 = vector.extract_strided_slice %304 {offsets = [0, 64], sizes = [8, 32], strides = [1, 1]} : vector<8x128xf32> to vector<8x32xf32>
    %308 = vector.extract_strided_slice %304 {offsets = [0, 96], sizes = [8, 32], strides = [1, 1]} : vector<8x128xf32> to vector<8x32xf32>
    %309 = arith.mulf %306, %287 : vector<8x32xf32>
    %310 = arith.mulf %305, %307 : vector<8x32xf32>
    %311 = arith.addf %309, %310 : vector<8x32xf32>
    %312 = math.tanh %311 : vector<8x32xf32>
    %313 = arith.mulf %308, %312 : vector<8x32xf32>
    %c32 = arith.constant 32 : index
    %c0_63 = arith.constant 0 : index
    %314 = vector.load %arg6[%c32, %c0_63] : memref<64x32xf32, #tpu.memory_space<vmem>>, vector<8x32xf32>
    tpu.vector_store %arg6[%c32, %c0_63], %313 {strides = array<i32>} : memref<64x32xf32, #tpu.memory_space<vmem>>, vector<8x32xf32>,
    %315 = vector.extract_strided_slice %192 {offsets = [40, 0], sizes = [8, 128], strides = [1, 1]} : vector<64x128xf32> to vector<8x128xf32>
    %cst_64 = arith.constant dense<0.000000e+00> : vector<8x128xf32>
    %316 = tpu.matmul %313, %5, %cst_64 {dimension_numbers = #tpu.dot_dimension_numbers<[1], [0], [0], [1], [0, 0, 1, 1], [], []>} : vector<8x32xf32>, vector<32x128xf32>, vector<8x128xf32> -> vector<8x128xf32>
    %317 = arith.addf %315, %316 : vector<8x128xf32>
    %318 = arith.addf %317, %317 : vector<8x128xf32>
    %319 = arith.select %20, %318, %317 : vector<8x128xi1>, vector<8x128xf32>
    %320 = arith.negf %319 : vector<8x128xf32>
    %321 = math.exp %320 : vector<8x128xf32>
    %cst_65 = arith.constant 1.000000e+00 : f32
    %322 = vector.broadcast %cst_65 : f32 to vector<8x128xf32>
    %323 = arith.addf %322, %321 : vector<8x128xf32>
    %324 = arith.divf %322, %323 : vector<8x128xf32>
    %325 = arith.addf %324, %324 : vector<8x128xf32>
    %cst_66 = arith.constant 1.000000e+00 : f32
    %326 = vector.broadcast %cst_66 : f32 to vector<8x128xf32>
    %327 = arith.subf %325, %326 : vector<8x128xf32>
    %328 = arith.select %20, %327, %324 : vector<8x128xi1>, vector<8x128xf32>
    %329 = vector.extract_strided_slice %328 {offsets = [0, 0], sizes = [8, 32], strides = [1, 1]} : vector<8x128xf32> to vector<8x32xf32>
    %330 = vector.extract_strided_slice %328 {offsets = [0, 32], sizes = [8, 32], strides = [1, 1]} : vector<8x128xf32> to vector<8x32xf32>
    %331 = vector.extract_strided_slice %328 {offsets = [0, 64], sizes = [8, 32], strides = [1, 1]} : vector<8x128xf32> to vector<8x32xf32>
    %332 = vector.extract_strided_slice %328 {offsets = [0, 96], sizes = [8, 32], strides = [1, 1]} : vector<8x128xf32> to vector<8x32xf32>
    %333 = arith.mulf %330, %311 : vector<8x32xf32>
    %334 = arith.mulf %329, %331 : vector<8x32xf32>
    %335 = arith.addf %333, %334 : vector<8x32xf32>
    %336 = math.tanh %335 : vector<8x32xf32>
    %337 = arith.mulf %332, %336 : vector<8x32xf32>
    %c40_67 = arith.constant 40 : index
    %c0_68 = arith.constant 0 : index
    %338 = vector.load %arg6[%c40_67, %c0_68] : memref<64x32xf32, #tpu.memory_space<vmem>>, vector<8x32xf32>
    tpu.vector_store %arg6[%c40_67, %c0_68], %337 {strides = array<i32>} : memref<64x32xf32, #tpu.memory_space<vmem>>, vector<8x32xf32>,
    %339 = vector.extract_strided_slice %192 {offsets = [48, 0], sizes = [8, 128], strides = [1, 1]} : vector<64x128xf32> to vector<8x128xf32>
    %cst_69 = arith.constant dense<0.000000e+00> : vector<8x128xf32>
    %340 = tpu.matmul %337, %5, %cst_69 {dimension_numbers = #tpu.dot_dimension_numbers<[1], [0], [0], [1], [0, 0, 1, 1], [], []>} : vector<8x32xf32>, vector<32x128xf32>, vector<8x128xf32> -> vector<8x128xf32>
    %341 = arith.addf %339, %340 : vector<8x128xf32>
    %342 = arith.addf %341, %341 : vector<8x128xf32>
    %343 = arith.select %20, %342, %341 : vector<8x128xi1>, vector<8x128xf32>
    %344 = arith.negf %343 : vector<8x128xf32>
    %345 = math.exp %344 : vector<8x128xf32>
    %cst_70 = arith.constant 1.000000e+00 : f32
    %346 = vector.broadcast %cst_70 : f32 to vector<8x128xf32>
    %347 = arith.addf %346, %345 : vector<8x128xf32>
    %348 = arith.divf %346, %347 : vector<8x128xf32>
    %349 = arith.addf %348, %348 : vector<8x128xf32>
    %cst_71 = arith.constant 1.000000e+00 : f32
    %350 = vector.broadcast %cst_71 : f32 to vector<8x128xf32>
    %351 = arith.subf %349, %350 : vector<8x128xf32>
    %352 = arith.select %20, %351, %348 : vector<8x128xi1>, vector<8x128xf32>
    %353 = vector.extract_strided_slice %352 {offsets = [0, 0], sizes = [8, 32], strides = [1, 1]} : vector<8x128xf32> to vector<8x32xf32>
    %354 = vector.extract_strided_slice %352 {offsets = [0, 32], sizes = [8, 32], strides = [1, 1]} : vector<8x128xf32> to vector<8x32xf32>
    %355 = vector.extract_strided_slice %352 {offsets = [0, 64], sizes = [8, 32], strides = [1, 1]} : vector<8x128xf32> to vector<8x32xf32>
    %356 = vector.extract_strided_slice %352 {offsets = [0, 96], sizes = [8, 32], strides = [1, 1]} : vector<8x128xf32> to vector<8x32xf32>
    %357 = arith.mulf %354, %335 : vector<8x32xf32>
    %358 = arith.mulf %353, %355 : vector<8x32xf32>
    %359 = arith.addf %357, %358 : vector<8x32xf32>
    %360 = math.tanh %359 : vector<8x32xf32>
    %361 = arith.mulf %356, %360 : vector<8x32xf32>
    %c48_72 = arith.constant 48 : index
    %c0_73 = arith.constant 0 : index
    %362 = vector.load %arg6[%c48_72, %c0_73] : memref<64x32xf32, #tpu.memory_space<vmem>>, vector<8x32xf32>
    tpu.vector_store %arg6[%c48_72, %c0_73], %361 {strides = array<i32>} : memref<64x32xf32, #tpu.memory_space<vmem>>, vector<8x32xf32>,
    %363 = vector.extract_strided_slice %192 {offsets = [56, 0], sizes = [8, 128], strides = [1, 1]} : vector<64x128xf32> to vector<8x128xf32>
    %cst_74 = arith.constant dense<0.000000e+00> : vector<8x128xf32>
    %364 = tpu.matmul %361, %5, %cst_74 {dimension_numbers = #tpu.dot_dimension_numbers<[1], [0], [0], [1], [0, 0, 1, 1], [], []>} : vector<8x32xf32>, vector<32x128xf32>, vector<8x128xf32> -> vector<8x128xf32>
    %365 = arith.addf %363, %364 : vector<8x128xf32>
    %366 = arith.addf %365, %365 : vector<8x128xf32>
    %367 = arith.select %20, %366, %365 : vector<8x128xi1>, vector<8x128xf32>
    %368 = arith.negf %367 : vector<8x128xf32>
    %369 = math.exp %368 : vector<8x128xf32>
    %cst_75 = arith.constant 1.000000e+00 : f32
    %370 = vector.broadcast %cst_75 : f32 to vector<8x128xf32>
    %371 = arith.addf %370, %369 : vector<8x128xf32>
    %372 = arith.divf %370, %371 : vector<8x128xf32>
    %373 = arith.addf %372, %372 : vector<8x128xf32>
    %cst_76 = arith.constant 1.000000e+00 : f32
    %374 = vector.broadcast %cst_76 : f32 to vector<8x128xf32>
    %375 = arith.subf %373, %374 : vector<8x128xf32>
    %376 = arith.select %20, %375, %372 : vector<8x128xi1>, vector<8x128xf32>
    %377 = vector.extract_strided_slice %376 {offsets = [0, 0], sizes = [8, 32], strides = [1, 1]} : vector<8x128xf32> to vector<8x32xf32>
    %378 = vector.extract_strided_slice %376 {offsets = [0, 32], sizes = [8, 32], strides = [1, 1]} : vector<8x128xf32> to vector<8x32xf32>
    %379 = vector.extract_strided_slice %376 {offsets = [0, 64], sizes = [8, 32], strides = [1, 1]} : vector<8x128xf32> to vector<8x32xf32>
    %380 = vector.extract_strided_slice %376 {offsets = [0, 96], sizes = [8, 32], strides = [1, 1]} : vector<8x128xf32> to vector<8x32xf32>
    %381 = arith.mulf %378, %359 : vector<8x32xf32>
    %382 = arith.mulf %377, %379 : vector<8x32xf32>
    %383 = arith.addf %381, %382 : vector<8x32xf32>
    %384 = math.tanh %383 : vector<8x32xf32>
    %385 = arith.mulf %380, %384 : vector<8x32xf32>
    %c56 = arith.constant 56 : index
    %c0_77 = arith.constant 0 : index
    %386 = vector.load %arg6[%c56, %c0_77] : memref<64x32xf32, #tpu.memory_space<vmem>>, vector<8x32xf32>
    tpu.vector_store %arg6[%c56, %c0_77], %385 {strides = array<i32>} : memref<64x32xf32, #tpu.memory_space<vmem>>, vector<8x32xf32>,
    %c0_78 = arith.constant 0 : index
    %c0_79 = arith.constant 0 : index
    %387 = vector.load %arg6[%c0_78, %c0_79] : memref<64x32xf32, #tpu.memory_space<vmem>>, vector<64x32xf32>
    %cst_80 = arith.constant dense<0.000000e+00> : vector<64x128xf32>
    %388 = tpu.matmul %387, %7, %cst_80 {dimension_numbers = #tpu.dot_dimension_numbers<[1], [0], [0], [1], [0, 0, 1, 1], [], []>} : vector<64x32xf32>, vector<32x128xf32>, vector<64x128xf32> -> vector<64x128xf32>
    %389 = vector.broadcast %8 : vector<1x128xf32> to vector<64x128xf32>
    %390 = arith.addf %388, %389 : vector<64x128xf32>
    %c0_81 = arith.constant 0 : index
    %c0_82 = arith.constant 0 : index
    %391 = vector.load %arg5[%c0_81, %c0_82] : memref<64x128xf32, #tpu.memory_space<vmem>>, vector<64x128xf32>
    tpu.vector_store %arg5[%c0_81, %c0_82], %390 {strides = array<i32>} : memref<64x128xf32, #tpu.memory_space<vmem>>, vector<64x128xf32>,
    return
  }
  func.func @transform_0(%arg0: i32) -> (i32, i32) {
    %c0_i32 = arith.constant 0 : i32
    %c0_i32_0 = arith.constant 0 : i32
    return %arg0, %c0_i32 : i32, i32
  }
  func.func @transform_1(%arg0: i32) -> (i32, i32) {
    %c0_i32 = arith.constant 0 : i32
    %c0_i32_0 = arith.constant 0 : i32
    return %arg0, %c0_i32 : i32, i32
  }
  func.func @transform_2(%arg0: i32) -> (i32, i32) {
    %c0_i32 = arith.constant 0 : i32
    %c0_i32_0 = arith.constant 0 : i32
    return %arg0, %c0_i32 : i32, i32
  }
  func.func @transform_3(%arg0: i32) -> (i32, i32) {
    %c0_i32 = arith.constant 0 : i32
    %c0_i32_0 = arith.constant 0 : i32
    %c0_i32_1 = arith.constant 0 : i32
    return %c0_i32, %c0_i32_0 : i32, i32
  }
  func.func @transform_4(%arg0: i32) -> (i32, i32) {
    %c0_i32 = arith.constant 0 : i32
    %c0_i32_0 = arith.constant 0 : i32
    return %arg0, %c0_i32 : i32, i32
  }
}

</mosaic_0001>

<llo_original>
// kernel: tpu_custom_call.1
$region0: #{tpu_custom_call.1}
  #allocation0 [shape = 'u32[]', space=smem, size = 0x4, offset = 0x4, fixed_abs, tag = 'smem constant byte address 0x4 - core index']
  #allocation1 [shape = 'u32[144,128]{1,0:T(1,128)}', space=vmem, size = 0x12000, scoped, tag = 'internal scratch']
  #allocation2 [shape = 'f32[64,32]{1,0:T(8,128)}', space=vmem, size = 0x8000, scoped, tag = 'scratch operand']
  %s0 = inlined_call_operand.vmem [shape: f32[768,8], index: 0, kind: input, shape index: {}]
  %s1 = inlined_call_operand.vmem [shape: f32[768,1], index: 1, kind: input, shape index: {}]
  %s2 = inlined_call_operand.vmem [shape: f32[128,16], index: 2, kind: input, shape index: {}]
  %s3 = inlined_call_operand.vmem [shape: f32[128,128], index: 3, kind: input, shape index: {}]
  %s4 = inlined_call_operand.hbm [shape: f32[128,128], index: 4, kind: output, shape index: {}]
  %s5 = sld [smem:[#allocation0]]
  $region49: #{tpu_custom_call.1} parent=0
    _
  %s7 = ssub.s32 1, %s5
  %s8 = scalar_select 0, %s7, %s5
  $region1: #{tpu_custom_call.1} parent=0
    #allocation3 [shape = 'u8[65536]{0}', space=vmem, size = 0x10000, scoped, tag = 'output window, operand 0']
    #allocation4 [shape = 's32[2]{0}', space=sflag, size = 0x8, scoped, tag = 'scoped memory for tpu_custom_call.1']
    %9 = vsyncpa [#allocation4], 0
    %s10 = scalar_lea.sflag [#allocation4], 1
    %11 = vsyncpa %s10, 0
    loop: start=0, step=1, limit=4
    $region2: #{tpu_custom_call.1} parent=1 // loop_pre_header
      _
    $region3: #{tpu_custom_call.1} parent=1 // loop_header
      %s13 = sphi 0, %s17
      %p14 = scmp.ge.s32.totalorder %s13, 4
      %s23 = sphi 0, %s25
      %s26 = sphi 0, %s23
      %s27 = sphi 0, %s26
      %s43 = sphi 0, %s27
      %s49 = sphi 0, %s51
      %s52 = sphi 0, %s49
      %s53 = sphi 0, %s52
      %s69 = sphi 0, %s53
      %s75 = sphi 0, %s77
      %s78 = sphi 0, %s75
      %s79 = sphi 0, %s78
      %s95 = sphi 0, %s79
      %s99 = sphi 0, %s99
      %s101 = sphi 0, %s99
      %s102 = sphi 0, %s101
      %s116 = sphi 0, %s102
      %s122 = sphi 0, %s124
      %s125 = sphi 0, %s122
      %s126 = sphi 0, %s125
      %s142 = sphi 0, %s126
    $region4: #{tpu_custom_call.1} parent=1 // loop_header_branch
      %16 = sbr.rel (%p14) target = $region8
    $region5: #{tpu_custom_call.1} parent=1 // loop_body
      %s18 = ssub.s32 %s13, 1
      %s19 = ssub.s32 %s13, 2
      %s20 = sadd.s32 %s13, 1
      %s21 = ssub.s32 %s13, %s20
      %p22 = scmp.eq.s32.totalorder %s21, 0
      %s24 = sadd.s32 %s23, 1
      %s25 = scalar_select %p22, %s23, %s24
      %p28 = pneg %p22
      %p29 = scmp.eq.s32.totalorder %s13, 1
      %p30 = por %p28, %p29
      %p31 = scmp.ne.s32.totalorder %s23, %s26
      %p32 = scmp.eq.s32.totalorder %s13, 0
      %p33 = por %p31, %p32
      %p34 = scmp.ne.s32.totalorder %s23, %s26
      %p35 = scmp.eq.s32.totalorder %s18, 1
      %p36 = por %p34, %p35
      %p37 = scmp.ne.s32.totalorder %s26, %s27
      %p38 = scmp.eq.s32.totalorder %s18, 0
      %p39 = por %p37, %p38
      %p40 = scmp.ne.s32.totalorder %s26, %s27
      %p41 = scmp.eq.s32.totalorder %s19, 1
      %p42 = por %p40, %p41
      %p44 = scmp.ne.s32.totalorder %s27, %s43
      %p45 = scmp.eq.s32.totalorder %s19, 0
      %p46 = por %p44, %p45
      %s47 = ssub.s32 %s13, %s20
      %p48 = scmp.eq.s32.totalorder %s47, 0
      %s50 = sadd.s32 %s49, 1
      %s51 = scalar_select %p48, %s49, %s50
      %p54 = pneg %p48
      %p55 = scmp.eq.s32.totalorder %s13, 1
      %p56 = por %p54, %p55
      %p57 = scmp.ne.s32.totalorder %s49, %s52
      %p58 = scmp.eq.s32.totalorder %s13, 0
      %p59 = por %p57, %p58
      %p60 = scmp.ne.s32.totalorder %s49, %s52
      %p61 = scmp.eq.s32.totalorder %s18, 1
      %p62 = por %p60, %p61
      %p63 = scmp.ne.s32.totalorder %s52, %s53
      %p64 = scmp.eq.s32.totalorder %s18, 0
      %p65 = por %p63, %p64
      %p66 = scmp.ne.s32.totalorder %s52, %s53
      %p67 = scmp.eq.s32.totalorder %s19, 1
      %p68 = por %p66, %p67
      %p70 = scmp.ne.s32.totalorder %s53, %s69
      %p71 = scmp.eq.s32.totalorder %s19, 0
      %p72 = por %p70, %p71
      %s73 = ssub.s32 %s13, %s20
      %p74 = scmp.eq.s32.totalorder %s73, 0
      %s76 = sadd.s32 %s75, 1
      %s77 = scalar_select %p74, %s75, %s76
      %p80 = pneg %p74
      %p81 = scmp.eq.s32.totalorder %s13, 1
      %p82 = por %p80, %p81
      %p83 = scmp.ne.s32.totalorder %s75, %s78
      %p84 = scmp.eq.s32.totalorder %s13, 0
      %p85 = por %p83, %p84
      %p86 = scmp.ne.s32.totalorder %s75, %s78
      %p87 = scmp.eq.s32.totalorder %s18, 1
      %p88 = por %p86, %p87
      %p89 = scmp.ne.s32.totalorder %s78, %s79
      %p90 = scmp.eq.s32.totalorder %s18, 0
      %p91 = por %p89, %p90
      %p92 = scmp.ne.s32.totalorder %s78, %s79
      %p93 = scmp.eq.s32.totalorder %s19, 1
      %p94 = por %p92, %p93
      %p96 = scmp.ne.s32.totalorder %s79, %s95
      %p97 = scmp.eq.s32.totalorder %s19, 0
      %p98 = por %p96, %p97
      %s100 = sadd.s32 %s99, 1
      %p103 = scmp.eq.s32.totalorder %s13, 1
      %p104 = scmp.ne.s32.totalorder %s99, %s101
      %p105 = scmp.eq.s32.totalorder %s13, 0
      %p106 = por %p104, %p105
      %p107 = scmp.ne.s32.totalorder %s99, %s101
      %p108 = scmp.eq.s32.totalorder %s18, 1
      %p109 = por %p107, %p108
      %p110 = scmp.ne.s32.totalorder %s101, %s102
      %p111 = scmp.eq.s32.totalorder %s18, 0
      %p112 = por %p110, %p111
      %p113 = scmp.ne.s32.totalorder %s101, %s102
      %p114 = scmp.eq.s32.totalorder %s19, 1
      %p115 = por %p113, %p114
      %p117 = scmp.ne.s32.totalorder %s102, %s116
      %p118 = scmp.eq.s32.totalorder %s19, 0
      %p119 = por %p117, %p118
      %s120 = ssub.s32 %s13, %s20
      %p121 = scmp.eq.s32.totalorder %s120, 0
      %s123 = sadd.s32 %s122, 1
      %s124 = scalar_select %p121, %s122, %s123
      %p127 = pneg %p121
      %p128 = scmp.eq.s32.totalorder %s13, 1
      %p129 = por %p127, %p128
      %p130 = scmp.ne.s32.totalorder %s122, %s125
      %p131 = scmp.eq.s32.totalorder %s13, 0
      %p132 = por %p130, %p131
      %p133 = scmp.ne.s32.totalorder %s122, %s125
      %p134 = scmp.eq.s32.totalorder %s18, 1
      %p135 = por %p133, %p134
      %p136 = scmp.ne.s32.totalorder %s125, %s126
      %p137 = scmp.eq.s32.totalorder %s18, 0
      %p138 = por %p136, %p137
      %p139 = scmp.ne.s32.totalorder %s125, %s126
      %p140 = scmp.eq.s32.totalorder %s19, 1
      %p141 = por %p139, %p140
      %p143 = scmp.ne.s32.totalorder %s126, %s142
      %p144 = scmp.eq.s32.totalorder %s19, 0
      %p145 = por %p143, %p144
      %p146 = scmp.le.s32.totalorder 1, %s13
      %p147 = scmp.lt.s32.totalorder %s13, 3
      %p148 = pnand %p146, %p147
      %p149 = pneg %p148
      // Predicated region
      $region9: #{tpu_custom_call.1} parent=5 // pred_check
        _
      $region10: #{tpu_custom_call.1} parent=5 // pred_check_branch
        %151 = sbr.rel (%p148) target = $region12
      $region11: #{tpu_custom_call.1} parent=5 // pred_region
        %s152 = ssub.s32 %s13, 1
        // Predicated region
        $region13: #{tpu_custom_call.1} parent=11 // pred_check
          %p153 = pneg %p112
        $region14: #{tpu_custom_call.1} parent=11 // pred_check_branch
          %155 = sbr.rel (%p153) target = $region16
        $region15: #{tpu_custom_call.1} parent=11 // pred_region
          _
        $region16: #{tpu_custom_call.1} parent=11 // pred_fallthru
          _
      $region12: #{tpu_custom_call.1} parent=5 // pred_fallthru
        _
      %p156 = scmp.lt.s32.totalorder %s13, 2
      // Predicated region
      $region17: #{tpu_custom_call.1} parent=5 // pred_check
        %p157 = pneg %p156
      $region18: #{tpu_custom_call.1} parent=5 // pred_check_branch
        %159 = sbr.rel (%p157) target = $region20
      $region19: #{tpu_custom_call.1} parent=5 // pred_region
        // Predicated region
        $region21: #{tpu_custom_call.1} parent=19 // pred_check
          %p160 = pneg %p33
        $region22: #{tpu_custom_call.1} parent=19 // pred_check_branch
          %162 = sbr.rel (%p160) target = $region24
        $region23: #{tpu_custom_call.1} parent=19 // pred_region
          %s163 = smul.u32 48, %s13
          %p164 = scmp.lt.s32.totalorder %s163, 95
          %s165 = scalar_select %p164, %s163, 95
          %s166 = smul.addr %s165, 8
          %s167 = scalar_lea.vmem %s0, %s166
          %s168 = smul.u32 48, %s13
        $region24: #{tpu_custom_call.1} parent=19 // pred_fallthru
          _
        // Predicated region
        $region25: #{tpu_custom_call.1} parent=19 // pred_check
          %p169 = pneg %p59
        $region26: #{tpu_custom_call.1} parent=19 // pred_check_branch
          %171 = sbr.rel (%p169) target = $region28
        $region27: #{tpu_custom_call.1} parent=19 // pred_region
          %s172 = smul.u32 48, %s13
          %p173 = scmp.lt.s32.totalorder %s172, 95
          %s174 = scalar_select %p173, %s172, 95
          %s175 = smul.addr %s174, 8
          %s176 = scalar_lea.vmem %s1, %s175
          %s177 = smul.u32 48, %s13
        $region28: #{tpu_custom_call.1} parent=19 // pred_fallthru
          _
        // Predicated region
        $region29: #{tpu_custom_call.1} parent=19 // pred_check
          %p178 = pneg %p85
        $region30: #{tpu_custom_call.1} parent=19 // pred_check_branch
          %180 = sbr.rel (%p178) target = $region32
        $region31: #{tpu_custom_call.1} parent=19 // pred_region
          %s181 = smul.u32 8, %s13
          %p182 = scmp.lt.s32.totalorder %s181, 15
          %s183 = scalar_select %p182, %s181, 15
          %s184 = smul.addr %s183, 8
          %s185 = scalar_lea.vmem %s2, %s184
          %s186 = smul.u32 8, %s13
        $region32: #{tpu_custom_call.1} parent=19 // pred_fallthru
          _
      $region20: #{tpu_custom_call.1} parent=5 // pred_fallthru
        _
      %p187 = scmp.le.s32.totalorder 1, %s13
      %p188 = scmp.lt.s32.totalorder %s13, 3
      %p189 = pnand %p187, %p188
      %p190 = pneg %p189
      // Predicated region
      $region33: #{tpu_custom_call.1} parent=5 // pred_check
        _
      $region34: #{tpu_custom_call.1} parent=5 // pred_check_branch
        %192 = sbr.rel (%p189) target = $region36
      $region35: #{tpu_custom_call.1} parent=5 // pred_region
        %s193 = ssub.s32 %s13, 1
        %s194 = smul.u32 48, %s18
        %p195 = scmp.lt.s32.totalorder %s194, 95
        %s196 = scalar_select %p195, %s194, 95
        %s197 = smul.addr %s196, 8
        %s198 = scalar_lea.vmem %s0, %s197
        %p199 = pneg %p39
        %p200 = pneg %p36
        %s201 = smul.u32 48, %s18
        %p202 = scmp.lt.s32.totalorder %s201, 95
        %s203 = scalar_select %p202, %s201, 95
        %s204 = smul.addr %s203, 8
        %s205 = scalar_lea.vmem %s1, %s204
        %p206 = pneg %p65
        %p207 = pneg %p62
        %s208 = smul.u32 8, %s18
        %p209 = scmp.lt.s32.totalorder %s208, 15
        %s210 = scalar_select %p209, %s208, 15
        %s211 = smul.addr %s210, 8
        %s212 = scalar_lea.vmem %s2, %s211
        %p213 = pneg %p91
        %p214 = pneg %p88
        %p215 = pneg %p112
        %p216 = pneg %p109
        %p217 = pneg %p138
        %p218 = pneg %p135
        %s219 = sand.u32 %s125, 1
        %s220 = scalar_lea.sflag [#allocation4], %s219
        %s221 = sand.u32 %s125, 1
        %s222 = smul.addr %s221, 64
        %s223 = scalar_lea.vmem [#allocation3], %s222
        %s224 = smul.u32 48, %s18
        %p225 = scmp.lt.s32.totalorder %s224, 95
        %s226 = scalar_select %p225, %s224, 95
        %s227 = smul.addr %s226, 8
        %s228 = scalar_lea.vmem %s0, %s227
        %s229 = smul.u32 48, %s18
        %s230 = smul.u32 48, %s18
        %p231 = scmp.lt.s32.totalorder %s230, 95
        %s232 = scalar_select %p231, %s230, 95
        %s233 = smul.addr %s232, 8
        %s234 = scalar_lea.vmem %s1, %s233
        %s235 = smul.u32 48, %s18
        %s236 = smul.u32 8, %s18
        %p237 = scmp.lt.s32.totalorder %s236, 15
        %s238 = scalar_select %p237, %s236, 15
        %s239 = smul.addr %s238, 8
        %s240 = scalar_lea.vmem %s2, %s239
        %s241 = smul.u32 8, %s18
        %s242 = smul.u32 8, %s18
        %v243 = vld [vmem:[%s3] sm:$0xff]
        %v244 = vld [vmem:[%s3 + $0x8] sm:$0xff]
        %v245 = vld [vmem:[%s3 + $0x10] sm:$0x1]
        %v246 = vld [vmem:[%s3 + $0x18] sm:$0xff]
        %v247 = vld [vmem:[%s3 + $0x20] sm:$0xff]
        %v248 = vld [vmem:[%s3 + $0x28] sm:$0xff]
        %v249 = vld [vmem:[%s3 + $0x30] sm:$0xff]
        %v250 = vld [vmem:[%s3 + $0x38] sm:$0xff]
        %v251 = vld [vmem:[%s3 + $0x40] sm:$0xff]
        %v252 = vld [vmem:[%s3 + $0x48] sm:$0xff]
        %v253 = vld [vmem:[%s3 + $0x50] sm:$0x1]
        %v254 = vld [vmem:[%s3 + $0x58] sm:$0xff]
        %v255 = vld [vmem:[%s3 + $0x60] sm:$0xff]
        %v256 = vld [vmem:[%s3 + $0x68] sm:$0xff]
        %v257 = vld [vmem:[%s3 + $0x70] sm:$0xff]
        %v258 = vld [vmem:[%s3 + $0x78] sm:$0x1]
        %v259 = vlaneseq
        %v260 = vand.u32 %v259, 127
        %vm261 = vcmp.ge.s32.totalorder %v260, 16
        %vm262 = vcmp.lt.s32.totalorder %v260, 24
        %vm263 = vmand %vm261, %vm262
        %vm264 = vcmp.ge.s32.totalorder %v260, 64
        %vm265 = vcmp.lt.s32.totalorder %v260, 96
        %vm266 = vmand %vm264, %vm265
        %v267 = vld [vmem:[%s234] sm:$0xff]
        %v268 = vld [vmem:[%s234 + $0x8] sm:$0xff]
        %v269 = vld [vmem:[%s234 + $0x10] sm:$0xff]
        %v270 = vld [vmem:[%s234 + $0x18] sm:$0xff]
        %v271 = vld [vmem:[%s234 + $0x20] sm:$0xff]
        %v272 = vld [vmem:[%s234 + $0x28] sm:$0xff]
        %v273 = vld [vmem:[%s234 + $0x30] sm:$0xff]
        %v274 = vld [vmem:[%s234 + $0x38] sm:$0xff]
        %v275 = vld [vmem:[%s234 + $0x40] sm:$0xff]
        %v276 = vld [vmem:[%s234 + $0x48] sm:$0xff]
        %v277 = vld [vmem:[%s234 + $0x50] sm:$0xff]
        %v278 = vld [vmem:[%s234 + $0x58] sm:$0xff]
        %v279 = vld [vmem:[%s234 + $0x60] sm:$0xff]
        %v280 = vld [vmem:[%s234 + $0x68] sm:$0xff]
        %v281 = vld [vmem:[%s234 + $0x70] sm:$0xff]
        %v282 = vld [vmem:[%s234 + $0x78] sm:$0xff]
        %v283 = vld [vmem:[%s234 + $0x80] sm:$0xff]
        %v284 = vld [vmem:[%s234 + $0x88] sm:$0xff]
        %v285 = vld [vmem:[%s234 + $0x90] sm:$0xff]
        %v286 = vld [vmem:[%s234 + $0x98] sm:$0xff]
        %v287 = vld [vmem:[%s234 + $0xa0] sm:$0xff]
        %v288 = vld [vmem:[%s234 + $0xa8] sm:$0xff]
        %v289 = vld [vmem:[%s234 + $0xb0] sm:$0xff]
        %v290 = vld [vmem:[%s234 + $0xb8] sm:$0xff]
        %v291 = vld [vmem:[%s234 + $0xc0] sm:$0xff]
        %v292 = vld [vmem:[%s234 + $0xc8] sm:$0xff]
        %v293 = vld [vmem:[%s234 + $0xd0] sm:$0xff]
        %v294 = vld [vmem:[%s234 + $0xd8] sm:$0xff]
        %v295 = vld [vmem:[%s234 + $0xe0] sm:$0xff]
        %v296 = vld [vmem:[%s234 + $0xe8] sm:$0xff]
        %v297 = vld [vmem:[%s234 + $0xf0] sm:$0xff]
        %v298 = vld [vmem:[%s234 + $0xf8] sm:$0xff]
        %v299 = vld [vmem:[%s234 + $0x100] sm:$0xff]
        %v300 = vld [vmem:[%s234 + $0x108] sm:$0xff]
        %v301 = vld [vmem:[%s234 + $0x110] sm:$0xff]
        %v302 = vld [vmem:[%s234 + $0x118] sm:$0xff]
        %v303 = vld [vmem:[%s234 + $0x120] sm:$0xff]
        %v304 = vld [vmem:[%s234 + $0x128] sm:$0xff]
        %v305 = vld [vmem:[%s234 + $0x130] sm:$0xff]
        %v306 = vld [vmem:[%s234 + $0x138] sm:$0xff]
        %v307 = vld [vmem:[%s234 + $0x140] sm:$0xff]
        %v308 = vld [vmem:[%s234 + $0x148] sm:$0xff]
        %v309 = vld [vmem:[%s234 + $0x150] sm:$0xff]
        %v310 = vld [vmem:[%s234 + $0x158] sm:$0xff]
        %v311 = vld [vmem:[%s234 + $0x160] sm:$0xff]
        %v312 = vld [vmem:[%s234 + $0x168] sm:$0xff]
        %v313 = vld [vmem:[%s234 + $0x170] sm:$0xff]
        %v314 = vld [vmem:[%s234 + $0x178] sm:$0xff]
        %vm315 = vcmp.gt.f32.partialorder %v267, 0.5
        %vm316 = vcmp.gt.f32.partialorder %v268, 0.5
        %vm317 = vcmp.gt.f32.partialorder %v269, 0.5
        %vm318 = vcmp.gt.f32.partialorder %v270, 0.5
        %vm319 = vcmp.gt.f32.partialorder %v271, 0.5
        %vm320 = vcmp.gt.f32.partialorder %v272, 0.5
        %vm321 = vcmp.gt.f32.partialorder %v273, 0.5
        %vm322 = vcmp.gt.f32.partialorder %v274, 0.5
        %vm323 = vcmp.gt.f32.partialorder %v275, 0.5
        %vm324 = vcmp.gt.f32.partialorder %v276, 0.5
        %vm325 = vcmp.gt.f32.partialorder %v277, 0.5
        %vm326 = vcmp.gt.f32.partialorder %v278, 0.5
        %vm327 = vcmp.gt.f32.partialorder %v279, 0.5
        %vm328 = vcmp.gt.f32.partialorder %v280, 0.5
        %vm329 = vcmp.gt.f32.partialorder %v281, 0.5
        %vm330 = vcmp.gt.f32.partialorder %v282, 0.5
        %vm331 = vcmp.gt.f32.partialorder %v283, 0.5
        %vm332 = vcmp.gt.f32.partialorder %v284, 0.5
        %vm333 = vcmp.gt.f32.partialorder %v285, 0.5
        %vm334 = vcmp.gt.f32.partialorder %v286, 0.5
        %vm335 = vcmp.gt.f32.partialorder %v287, 0.5
        %vm336 = vcmp.gt.f32.partialorder %v288, 0.5
        %vm337 = vcmp.gt.f32.partialorder %v289, 0.5
        %vm338 = vcmp.gt.f32.partialorder %v290, 0.5
        %vm339 = vcmp.gt.f32.partialorder %v291, 0.5
        %vm340 = vcmp.gt.f32.partialorder %v292, 0.5
        %vm341 = vcmp.gt.f32.partialorder %v293, 0.5
        %vm342 = vcmp.gt.f32.partialorder %v294, 0.5
        %vm343 = vcmp.gt.f32.partialorder %v295, 0.5
        %vm344 = vcmp.gt.f32.partialorder %v296, 0.5
        %vm345 = vcmp.gt.f32.partialorder %v297, 0.5
        %vm346 = vcmp.gt.f32.partialorder %v298, 0.5
        %vm347 = vcmp.gt.f32.partialorder %v299, 0.5
        %vm348 = vcmp.gt.f32.partialorder %v300, 0.5
        %vm349 = vcmp.gt.f32.partialorder %v301, 0.5
        %vm350 = vcmp.gt.f32.partialorder %v302, 0.5
        %vm351 = vcmp.gt.f32.partialorder %v303, 0.5
        %vm352 = vcmp.gt.f32.partialorder %v304, 0.5
        %vm353 = vcmp.gt.f32.partialorder %v305, 0.5
        %vm354 = vcmp.gt.f32.partialorder %v306, 0.5
        %vm355 = vcmp.gt.f32.partialorder %v307, 0.5
        %vm356 = vcmp.gt.f32.partialorder %v308, 0.5
        %vm357 = vcmp.gt.f32.partialorder %v309, 0.5
        %vm358 = vcmp.gt.f32.partialorder %v310, 0.5
        %vm359 = vcmp.gt.f32.partialorder %v311, 0.5
        %vm360 = vcmp.gt.f32.partialorder %v312, 0.5
        %vm361 = vcmp.gt.f32.partialorder %v313, 0.5
        %vm362 = vcmp.gt.f32.partialorder %v314, 0.5
        %v363 = vld [vmem:[%s228] sm:$0xff]
        %v364 = vld [vmem:[%s228 + $0x8] sm:$0xff]
        %v365 = vld [vmem:[%s228 + $0x10] sm:$0xff]
        %v366 = vld [vmem:[%s228 + $0x18] sm:$0xff]
        %v367 = vld [vmem:[%s228 + $0x20] sm:$0xff]
        %v368 = vld [vmem:[%s228 + $0x28] sm:$0xff]
        %v369 = vld [vmem:[%s228 + $0x30] sm:$0xff]
        %v370 = vld [vmem:[%s228 + $0x38] sm:$0xff]
        %v371 = vld [vmem:[%s228 + $0x40] sm:$0xff]
        %v372 = vld [vmem:[%s228 + $0x48] sm:$0xff]
        %v373 = vld [vmem:[%s228 + $0x50] sm:$0xff]
        %v374 = vld [vmem:[%s228 + $0x58] sm:$0xff]
        %v375 = vld [vmem:[%s228 + $0x60] sm:$0xff]
        %v376 = vld [vmem:[%s228 + $0x68] sm:$0xff]
        %v377 = vld [vmem:[%s228 + $0x70] sm:$0xff]
        %v378 = vld [vmem:[%s228 + $0x78] sm:$0xff]
        %v379 = vld [vmem:[%s228 + $0x80] sm:$0xff]
        %v380 = vld [vmem:[%s228 + $0x88] sm:$0xff]
        %v381 = vld [vmem:[%s228 + $0x90] sm:$0xff]
        %v382 = vld [vmem:[%s228 + $0x98] sm:$0xff]
        %v383 = vld [vmem:[%s228 + $0xa0] sm:$0xff]
        %v384 = vld [vmem:[%s228 + $0xa8] sm:$0xff]
        %v385 = vld [vmem:[%s228 + $0xb0] sm:$0xff]
        %v386 = vld [vmem:[%s228 + $0xb8] sm:$0xff]
        %v387 = vld [vmem:[%s228 + $0xc0] sm:$0xff]
        %v388 = vld [vmem:[%s228 + $0xc8] sm:$0xff]
        %v389 = vld [vmem:[%s228 + $0xd0] sm:$0xff]
        %v390 = vld [vmem:[%s228 + $0xd8] sm:$0xff]
        %v391 = vld [vmem:[%s228 + $0xe0] sm:$0xff]
        %v392 = vld [vmem:[%s228 + $0xe8] sm:$0xff]
        %v393 = vld [vmem:[%s228 + $0xf0] sm:$0xff]
        %v394 = vld [vmem:[%s228 + $0xf8] sm:$0xff]
        %v395 = vld [vmem:[%s228 + $0x100] sm:$0xff]
        %v396 = vld [vmem:[%s228 + $0x108] sm:$0xff]
        %v397 = vld [vmem:[%s228 + $0x110] sm:$0xff]
        %v398 = vld [vmem:[%s228 + $0x118] sm:$0xff]
        %v399 = vld [vmem:[%s228 + $0x120] sm:$0xff]
        %v400 = vld [vmem:[%s228 + $0x128] sm:$0xff]
        %v401 = vld [vmem:[%s228 + $0x130] sm:$0xff]
        %v402 = vld [vmem:[%s228 + $0x138] sm:$0xff]
        %v403 = vld [vmem:[%s228 + $0x140] sm:$0xff]
        %v404 = vld [vmem:[%s228 + $0x148] sm:$0xff]
        %v405 = vld [vmem:[%s228 + $0x150] sm:$0xff]
        %v406 = vld [vmem:[%s228 + $0x158] sm:$0xff]
        %v407 = vld [vmem:[%s228 + $0x160] sm:$0xff]
        %v408 = vld [vmem:[%s228 + $0x168] sm:$0xff]
        %v409 = vld [vmem:[%s228 + $0x170] sm:$0xff]
        %v410 = vld [vmem:[%s228 + $0x178] sm:$0xff]
        %v411 = vlaneseq
        %v412 = vshrl.u32 %v411, 7
        %v413 = vsub.s32 0, %v412
        %v414 = vrot.slane %v245, %v413
        %vm415 = vcmask 64512
        %v417 = vsel %vm415, %v363, 0
        %v420 = vsel %vm415, %v364, 0
        %v423 = vsel %vm415, %v365, 0
        %v426 = vsel %vm415, %v366, 0
        %v429 = vsel %vm415, %v367, 0
        %v432 = vsel %vm415, %v368, 0
        %v435 = vsel %vm415, %v369, 0
        %v438 = vsel %vm415, %v370, 0
        %v441 = vsel %vm415, %v371, 0
        %v444 = vsel %vm415, %v372, 0
        %v447 = vsel %vm415, %v373, 0
        %v450 = vsel %vm415, %v374, 0
        %v453 = vsel %vm415, %v375, 0
        %v456 = vsel %vm415, %v376, 0
        %v459 = vsel %vm415, %v377, 0
        %v462 = vsel %vm415, %v378, 0
        %v465 = vsel %vm415, %v379, 0
        %v468 = vsel %vm415, %v380, 0
        %v471 = vsel %vm415, %v381, 0
        %v474 = vsel %vm415, %v382, 0
        %v477 = vsel %vm415, %v383, 0
        %v480 = vsel %vm415, %v384, 0
        %v483 = vsel %vm415, %v385, 0
        %v486 = vsel %vm415, %v386, 0
        %v489 = vsel %vm415, %v387, 0
        %v492 = vsel %vm415, %v388, 0
        %v495 = vsel %vm415, %v389, 0
        %v498 = vsel %vm415, %v390, 0
        %v501 = vsel %vm415, %v391, 0
        %v504 = vsel %vm415, %v392, 0
        %v507 = vsel %vm415, %v393, 0
        %v510 = vsel %vm415, %v394, 0
        %v513 = vsel %vm415, %v395, 0
        %v516 = vsel %vm415, %v396, 0
        %v519 = vsel %vm415, %v397, 0
        %v522 = vsel %vm415, %v398, 0
        %v525 = vsel %vm415, %v399, 0
        %v528 = vsel %vm415, %v400, 0
        %v531 = vsel %vm415, %v401, 0
        %v534 = vsel %vm415, %v402, 0
        %v537 = vsel %vm415, %v403, 0
        %v540 = vsel %vm415, %v404, 0
        %v543 = vsel %vm415, %v405, 0
        %v546 = vsel %vm415, %v406, 0
        %v549 = vsel %vm415, %v407, 0
        %v552 = vsel %vm415, %v408, 0
        %v555 = vsel %vm415, %v409, 0
        %v558 = vsel %vm415, %v410, 0
        %560 = vmatprep.subr.mxu0 0.0
        %561 = vmatpush1.msra.mxu0 0.0
        %562 = vmatprep.subr.mxu0 0.0
        %563 = vmatpush1.msra.mxu0 0.0
        %564 = vmatprep.subr.mxu0 0.0
        %565 = vmatpush1.msra.mxu0 0.0
        %566 = vmatprep.subr.mxu0 0.0
        %567 = vmatpush1.msra.mxu0 0.0
        %568 = vmatprep.subr.mxu0 0.0
        %569 = vmatpush1.msra.mxu0 0.0
        %570 = vmatprep.subr.mxu0 0.0
        %571 = vmatpush1.msra.mxu0 0.0
        %572 = vmatprep.subr.mxu0 0.0
        %573 = vmatpush1.msra.mxu0 0.0
        %574 = vmatprep.subr.mxu0 0.0
        %575 = vmatpush1.msra.mxu0 0.0
        %576 = vmatprep.subr.mxu0 0.0
        %577 = vmatpush1.msra.mxu0 0.0
        %578 = vmatprep.subr.mxu0 0.0
        %579 = vmatpush1.msra.mxu0 0.0
        %580 = vmatprep.subr.mxu0 0.0
        %581 = vmatpush1.msra.mxu0 0.0
        %582 = vmatprep.subr.mxu0 0.0
        %583 = vmatpush1.msra.mxu0 0.0
        %584 = vmatprep.subr.mxu0 0.0
        %585 = vmatpush1.msra.mxu0 0.0
        %586 = vmatprep.subr.mxu0 0.0
        %587 = vmatpush1.msra.mxu0 0.0
        %588 = vmatprep.subr.mxu0 0.0
        %589 = vmatpush1.msra.mxu0 0.0
        %590 = vmatprep.subr.mxu0 0.0
        %591 = vmatpush1.msra.mxu0 %v243
        %592 = vmatprep.subr.mxu0 0.0
        %593 = vmatpush2.msra.mxu0 0.0
        %594 = vmatprep.subr.mxu0 0.0
        %595 = vmatpush2.msra.mxu0 0.0
        %596 = vmatprep.subr.mxu0 0.0
        %597 = vmatpush2.msra.mxu0 0.0
        %598 = vmatprep.subr.mxu0 0.0
        %599 = vmatpush2.msra.mxu0 0.0
        %600 = vmatprep.subr.mxu0 0.0
        %601 = vmatpush2.msra.mxu0 0.0
        %602 = vmatprep.subr.mxu0 0.0
        %603 = vmatpush2.msra.mxu0 0.0
        %604 = vmatprep.subr.mxu0 0.0
        %605 = vmatpush2.msra.mxu0 0.0
        %606 = vmatprep.subr.mxu0 0.0
        %607 = vmatpush2.msra.mxu0 0.0
        %608 = vmatprep.subr.mxu0 0.0
        %609 = vmatpush2.msra.mxu0 0.0
        %610 = vmatprep.subr.mxu0 0.0
        %611 = vmatpush2.msra.mxu0 0.0
        %612 = vmatprep.subr.mxu0 0.0
        %613 = vmatpush2.msra.mxu0 0.0
        %614 = vmatprep.subr.mxu0 0.0
        %615 = vmatpush2.msra.mxu0 0.0
        %616 = vmatprep.subr.mxu0 0.0
        %617 = vmatpush2.msra.mxu0 0.0
        %618 = vmatprep.subr.mxu0 0.0
        %619 = vmatpush2.msra.mxu0 0.0
        %620 = vmatprep.subr.mxu0 0.0
        %621 = vmatpush2.msra.mxu0 0.0
        %622 = vmatprep.subr.mxu0 0.0
        %623 = vmatpush2.msra.mxu0 0.0
        %624 = vmatprep.mubr.f32.mxu0 0.0
        %625 = vmatmul.mubr.f32.gmra.mxu0 %v417
        %v626 = vpop.f32.mrf.mxu0
        %v627 = vadd.f32 %v414, %v626
        %v628 = vpop.f32.mrf.mxu0
        %629 = vmatprep.mubr.f32.mxu0 0.0
        %630 = vmatmul.mubr.f32.gmra.mxu0 %v420
        %v631 = vpop.f32.mrf.mxu0
        %v632 = vadd.f32 %v414, %v631
        %v633 = vpop.f32.mrf.mxu0
        %634 = vmatprep.mubr.f32.mxu0 0.0
        %635 = vmatmul.mubr.f32.gmra.mxu0 %v423
        %v636 = vpop.f32.mrf.mxu0
        %v637 = vadd.f32 %v414, %v636
        %v638 = vpop.f32.mrf.mxu0
        %639 = vmatprep.mubr.f32.mxu0 0.0
        %640 = vmatmul.mubr.f32.gmra.mxu0 %v426
        %v641 = vpop.f32.mrf.mxu0
        %v642 = vadd.f32 %v414, %v641
        %v643 = vpop.f32.mrf.mxu0
        %644 = vmatprep.mubr.f32.mxu0 0.0
        %645 = vmatmul.mubr.f32.gmra.mxu0 %v429
        %v646 = vpop.f32.mrf.mxu0
        %v647 = vadd.f32 %v414, %v646
        %v648 = vpop.f32.mrf.mxu0
        %649 = vmatprep.mubr.f32.mxu0 0.0
        %650 = vmatmul.mubr.f32.gmra.mxu0 %v432
        %v651 = vpop.f32.mrf.mxu0
        %v652 = vadd.f32 %v414, %v651
        %v653 = vpop.f32.mrf.mxu0
        %654 = vmatprep.mubr.f32.mxu0 0.0
        %655 = vmatmul.mubr.f32.gmra.mxu0 %v435
        %v656 = vpop.f32.mrf.mxu0
        %v657 = vadd.f32 %v414, %v656
        %v658 = vpop.f32.mrf.mxu0
        %659 = vmatprep.mubr.f32.mxu0 0.0
        %660 = vmatmul.mubr.f32.gmra.mxu0 %v438
        %v661 = vpop.f32.mrf.mxu0
        %v662 = vadd.f32 %v414, %v661
        %v663 = vpop.f32.mrf.mxu0
        %664 = vmatprep.mubr.f32.mxu0 0.0
        %665 = vmatmul.mubr.f32.gmra.mxu0 %v441
        %v666 = vpop.f32.mrf.mxu0
        %v667 = vadd.f32 %v414, %v666
        %v668 = vpop.f32.mrf.mxu0
        %669 = vmatprep.mubr.f32.mxu0 0.0
        %670 = vmatmul.mubr.f32.gmra.mxu0 %v444
        %v671 = vpop.f32.mrf.mxu0
        %v672 = vadd.f32 %v414, %v671
        %v673 = vpop.f32.mrf.mxu0
        %674 = vmatprep.mubr.f32.mxu0 0.0
        %675 = vmatmul.mubr.f32.gmra.mxu0 %v447
        %v676 = vpop.f32.mrf.mxu0
        %v677 = vadd.f32 %v414, %v676
        %v678 = vpop.f32.mrf.mxu0
        %679 = vmatprep.mubr.f32.mxu0 0.0
        %680 = vmatmul.mubr.f32.gmra.mxu0 %v450
        %v681 = vpop.f32.mrf.mxu0
        %v682 = vadd.f32 %v414, %v681
        %v683 = vpop.f32.mrf.mxu0
        %684 = vmatprep.mubr.f32.mxu0 0.0
        %685 = vmatmul.mubr.f32.gmra.mxu0 %v453
        %v686 = vpop.f32.mrf.mxu0
        %v687 = vadd.f32 %v414, %v686
        %v688 = vpop.f32.mrf.mxu0
        %689 = vmatprep.mubr.f32.mxu0 0.0
        %690 = vmatmul.mubr.f32.gmra.mxu0 %v456
        %v691 = vpop.f32.mrf.mxu0
        %v692 = vadd.f32 %v414, %v691
        %v693 = vpop.f32.mrf.mxu0
        %694 = vmatprep.mubr.f32.mxu0 0.0
        %695 = vmatmul.mubr.f32.gmra.mxu0 %v459
        %v696 = vpop.f32.mrf.mxu0
        %v697 = vadd.f32 %v414, %v696
        %v698 = vpop.f32.mrf.mxu0
        %699 = vmatprep.mubr.f32.mxu0 0.0
        %700 = vmatmul.mubr.f32.gmra.mxu0 %v462
        %v701 = vpop.f32.mrf.mxu0
        %v702 = vadd.f32 %v414, %v701
        %v703 = vpop.f32.mrf.mxu0
        %704 = vmatprep.mubr.f32.mxu0 0.0
        %705 = vmatmul.mubr.f32.gmra.mxu0 %v465
        %v706 = vpop.f32.mrf.mxu0
        %v707 = vadd.f32 %v414, %v706
        %v708 = vpop.f32.mrf.mxu0
        %709 = vmatprep.mubr.f32.mxu0 0.0
        %710 = vmatmul.mubr.f32.gmra.mxu0 %v468
        %v711 = vpop.f32.mrf.mxu0
        %v712 = vadd.f32 %v414, %v711
        %v713 = vpop.f32.mrf.mxu0
        %714 = vmatprep.mubr.f32.mxu0 0.0
        %715 = vmatmul.mubr.f32.gmra.mxu0 %v471
        %v716 = vpop.f32.mrf.mxu0
        %v717 = vadd.f32 %v414, %v716
        %v718 = vpop.f32.mrf.mxu0
        %719 = vmatprep.mubr.f32.mxu0 0.0
        %720 = vmatmul.mubr.f32.gmra.mxu0 %v474
        %v721 = vpop.f32.mrf.mxu0
        %v722 = vadd.f32 %v414, %v721
        %v723 = vpop.f32.mrf.mxu0
        %724 = vmatprep.mubr.f32.mxu0 0.0
        %725 = vmatmul.mubr.f32.gmra.mxu0 %v477
        %v726 = vpop.f32.mrf.mxu0
        %v727 = vadd.f32 %v414, %v726
        %v728 = vpop.f32.mrf.mxu0
        %729 = vmatprep.mubr.f32.mxu0 0.0
        %730 = vmatmul.mubr.f32.gmra.mxu0 %v480
        %v731 = vpop.f32.mrf.mxu0
        %v732 = vadd.f32 %v414, %v731
        %v733 = vpop.f32.mrf.mxu0
        %734 = vmatprep.mubr.f32.mxu0 0.0
        %735 = vmatmul.mubr.f32.gmra.mxu0 %v483
        %v736 = vpop.f32.mrf.mxu0
        %v737 = vadd.f32 %v414, %v736
        %v738 = vpop.f32.mrf.mxu0
        %739 = vmatprep.mubr.f32.mxu0 0.0
        %740 = vmatmul.mubr.f32.gmra.mxu0 %v486
        %v741 = vpop.f32.mrf.mxu0
        %v742 = vadd.f32 %v414, %v741
        %v743 = vpop.f32.mrf.mxu0
        %744 = vmatprep.mubr.f32.mxu0 0.0
        %745 = vmatmul.mubr.f32.gmra.mxu0 %v489
        %v746 = vpop.f32.mrf.mxu0
        %v747 = vadd.f32 %v414, %v746
        %v748 = vpop.f32.mrf.mxu0
        %749 = vmatprep.mubr.f32.mxu0 0.0
        %750 = vmatmul.mubr.f32.gmra.mxu0 %v492
        %v751 = vpop.f32.mrf.mxu0
        %v752 = vadd.f32 %v414, %v751
        %v753 = vpop.f32.mrf.mxu0
        %754 = vmatprep.mubr.f32.mxu0 0.0
        %755 = vmatmul.mubr.f32.gmra.mxu0 %v495
        %v756 = vpop.f32.mrf.mxu0
        %v757 = vadd.f32 %v414, %v756
        %v758 = vpop.f32.mrf.mxu0
        %759 = vmatprep.mubr.f32.mxu0 0.0
        %760 = vmatmul.mubr.f32.gmra.mxu0 %v498
        %v761 = vpop.f32.mrf.mxu0
        %v762 = vadd.f32 %v414, %v761
        %v763 = vpop.f32.mrf.mxu0
        %764 = vmatprep.mubr.f32.mxu0 0.0
        %765 = vmatmul.mubr.f32.gmra.mxu0 %v501
        %v766 = vpop.f32.mrf.mxu0
        %v767 = vadd.f32 %v414, %v766
        %v768 = vpop.f32.mrf.mxu0
        %769 = vmatprep.mubr.f32.mxu0 0.0
        %770 = vmatmul.mubr.f32.gmra.mxu0 %v504
        %v771 = vpop.f32.mrf.mxu0
        %v772 = vadd.f32 %v414, %v771
        %v773 = vpop.f32.mrf.mxu0
        %774 = vmatprep.mubr.f32.mxu0 0.0
        %775 = vmatmul.mubr.f32.gmra.mxu0 %v507
        %v776 = vpop.f32.mrf.mxu0
        %v777 = vadd.f32 %v414, %v776
        %v778 = vpop.f32.mrf.mxu0
        %779 = vmatprep.mubr.f32.mxu0 0.0
        %780 = vmatmul.mubr.f32.gmra.mxu0 %v510
        %v781 = vpop.f32.mrf.mxu0
        %v782 = vadd.f32 %v414, %v781
        %v783 = vpop.f32.mrf.mxu0
        %784 = vmatprep.mubr.f32.mxu0 0.0
        %785 = vmatmul.mubr.f32.gmra.mxu0 %v513
        %v786 = vpop.f32.mrf.mxu0
        %v787 = vadd.f32 %v414, %v786
        %v788 = vpop.f32.mrf.mxu0
        %789 = vmatprep.mubr.f32.mxu0 0.0
        %790 = vmatmul.mubr.f32.gmra.mxu0 %v516
        %v791 = vpop.f32.mrf.mxu0
        %v792 = vadd.f32 %v414, %v791
        %v793 = vpop.f32.mrf.mxu0
        %794 = vmatprep.mubr.f32.mxu0 0.0
        %795 = vmatmul.mubr.f32.gmra.mxu0 %v519
        %v796 = vpop.f32.mrf.mxu0
        %v797 = vadd.f32 %v414, %v796
        %v798 = vpop.f32.mrf.mxu0
        %799 = vmatprep.mubr.f32.mxu0 0.0
        %800 = vmatmul.mubr.f32.gmra.mxu0 %v522
        %v801 = vpop.f32.mrf.mxu0
        %v802 = vadd.f32 %v414, %v801
        %v803 = vpop.f32.mrf.mxu0
        %804 = vmatprep.mubr.f32.mxu0 0.0
        %805 = vmatmul.mubr.f32.gmra.mxu0 %v525
        %v806 = vpop.f32.mrf.mxu0
        %v807 = vadd.f32 %v414, %v806
        %v808 = vpop.f32.mrf.mxu0
        %809 = vmatprep.mubr.f32.mxu0 0.0
        %810 = vmatmul.mubr.f32.gmra.mxu0 %v528
        %v811 = vpop.f32.mrf.mxu0
        %v812 = vadd.f32 %v414, %v811
        %v813 = vpop.f32.mrf.mxu0
        %814 = vmatprep.mubr.f32.mxu0 0.0
        %815 = vmatmul.mubr.f32.gmra.mxu0 %v531
        %v816 = vpop.f32.mrf.mxu0
        %v817 = vadd.f32 %v414, %v816
        %v818 = vpop.f32.mrf.mxu0
        %819 = vmatprep.mubr.f32.mxu0 0.0
        %820 = vmatmul.mubr.f32.gmra.mxu0 %v534
        %v821 = vpop.f32.mrf.mxu0
        %v822 = vadd.f32 %v414, %v821
        %v823 = vpop.f32.mrf.mxu0
        %824 = vmatprep.mubr.f32.mxu0 0.0
        %825 = vmatmul.mubr.f32.gmra.mxu0 %v537
        %v826 = vpop.f32.mrf.mxu0
        %v827 = vadd.f32 %v414, %v826
        %v828 = vpop.f32.mrf.mxu0
        %829 = vmatprep.mubr.f32.mxu0 0.0
        %830 = vmatmul.mubr.f32.gmra.mxu0 %v540
        %v831 = vpop.f32.mrf.mxu0
        %v832 = vadd.f32 %v414, %v831
        %v833 = vpop.f32.mrf.mxu0
        %834 = vmatprep.mubr.f32.mxu0 0.0
        %835 = vmatmul.mubr.f32.gmra.mxu0 %v543
        %v836 = vpop.f32.mrf.mxu0
        %v837 = vadd.f32 %v414, %v836
        %v838 = vpop.f32.mrf.mxu0
        %839 = vmatprep.mubr.f32.mxu0 0.0
        %840 = vmatmul.mubr.f32.gmra.mxu0 %v546
        %v841 = vpop.f32.mrf.mxu0
        %v842 = vadd.f32 %v414, %v841
        %v843 = vpop.f32.mrf.mxu0
        %844 = vmatprep.mubr.f32.mxu0 0.0
        %845 = vmatmul.mubr.f32.gmra.mxu0 %v549
        %v846 = vpop.f32.mrf.mxu0
        %v847 = vadd.f32 %v414, %v846
        %v848 = vpop.f32.mrf.mxu0
        %849 = vmatprep.mubr.f32.mxu0 0.0
        %850 = vmatmul.mubr.f32.gmra.mxu0 %v552
        %v851 = vpop.f32.mrf.mxu0
        %v852 = vadd.f32 %v414, %v851
        %v853 = vpop.f32.mrf.mxu0
        %854 = vmatprep.mubr.f32.mxu0 0.0
        %855 = vmatmul.mubr.f32.gmra.mxu0 %v555
        %v856 = vpop.f32.mrf.mxu0
        %v857 = vadd.f32 %v414, %v856
        %v858 = vpop.f32.mrf.mxu0
        %859 = vmatprep.mubr.f32.mxu0 0.0
        %860 = vmatmul.mubr.f32.gmra.mxu0 %v558
        %v861 = vpop.f32.mrf.mxu0
        %v862 = vadd.f32 %v414, %v861
        %v863 = vpop.f32.mrf.mxu0
        %864 = vdwg.mxu0
        %v866 = vsel %vm415, 0.0, 0
        %868 = vmatprep.subr.mxu0 0.0
        %869 = vmatpush1.msra.mxu0 0.0
        %870 = vmatprep.subr.mxu0 0.0
        %871 = vmatpush1.msra.mxu0 0.0
        %872 = vmatprep.subr.mxu0 0.0
        %873 = vmatpush1.msra.mxu0 0.0
        %874 = vmatprep.subr.mxu0 0.0
        %875 = vmatpush1.msra.mxu0 0.0
        %876 = vmatprep.subr.mxu0 0.0
        %877 = vmatpush1.msra.mxu0 0.0
        %878 = vmatprep.subr.mxu0 0.0
        %879 = vmatpush1.msra.mxu0 0.0
        %880 = vmatprep.subr.mxu0 0.0
        %881 = vmatpush1.msra.mxu0 0.0
        %882 = vmatprep.subr.mxu0 0.0
        %883 = vmatpush1.msra.mxu0 0.0
        %884 = vmatprep.subr.mxu0 0.0
        %885 = vmatpush1.msra.mxu0 0.0
        %886 = vmatprep.subr.mxu0 0.0
        %887 = vmatpush1.msra.mxu0 0.0
        %888 = vmatprep.subr.mxu0 0.0
        %889 = vmatpush1.msra.mxu0 0.0
        %890 = vmatprep.subr.mxu0 0.0
        %891 = vmatpush1.msra.mxu0 0.0
        %892 = vmatprep.subr.mxu0 0.0
        %893 = vmatpush1.msra.mxu0 0.0
        %894 = vmatprep.subr.mxu0 0.0
        %895 = vmatpush1.msra.mxu0 0.0
        %896 = vmatprep.subr.mxu0 0.0
        %897 = vmatpush1.msra.mxu0 0.0
        %898 = vmatprep.subr.mxu0 0.0
        %899 = vmatpush1.msra.mxu0 %v244
        %900 = vmatprep.subr.mxu0 0.0
        %901 = vmatpush2.msra.mxu0 0.0
        %902 = vmatprep.subr.mxu0 0.0
        %903 = vmatpush2.msra.mxu0 0.0
        %904 = vmatprep.subr.mxu0 0.0
        %905 = vmatpush2.msra.mxu0 0.0
        %906 = vmatprep.subr.mxu0 0.0
        %907 = vmatpush2.msra.mxu0 0.0
        %908 = vmatprep.subr.mxu0 0.0
        %909 = vmatpush2.msra.mxu0 0.0
        %910 = vmatprep.subr.mxu0 0.0
        %911 = vmatpush2.msra.mxu0 0.0
        %912 = vmatprep.subr.mxu0 0.0
        %913 = vmatpush2.msra.mxu0 0.0
        %914 = vmatprep.subr.mxu0 0.0
        %915 = vmatpush2.msra.mxu0 0.0
        %916 = vmatprep.subr.mxu0 0.0
        %917 = vmatpush2.msra.mxu0 0.0
        %918 = vmatprep.subr.mxu0 0.0
        %919 = vmatpush2.msra.mxu0 0.0
        %920 = vmatprep.subr.mxu0 0.0
        %921 = vmatpush2.msra.mxu0 0.0
        %922 = vmatprep.subr.mxu0 0.0
        %923 = vmatpush2.msra.mxu0 0.0
        %924 = vmatprep.subr.mxu0 0.0
        %925 = vmatpush2.msra.mxu0 0.0
        %926 = vmatprep.subr.mxu0 0.0
        %927 = vmatpush2.msra.mxu0 0.0
        %928 = vmatprep.subr.mxu0 0.0
        %929 = vmatpush2.msra.mxu0 0.0
        %930 = vmatprep.subr.mxu0 0.0
        %931 = vmatpush2.msra.mxu0 0.0
        %932 = vmatprep.mubr.f32.mxu0 0.0
        %933 = vmatmul.mubr.f32.gmra.mxu0 %v866
        %v934 = vpop.f32.mrf.mxu0
        %v935 = vadd.f32 0.0, %v934
        %v936 = vpop.f32.mrf.mxu0
        %937 = vmatprep.mubr.f32.mxu0 0.0
        %938 = vmatmul.mubr.f32.gmra.mxu0 %v866
        %v939 = vpop.f32.mrf.mxu0
        %v940 = vadd.f32 0.0, %v939
        %v941 = vpop.f32.mrf.mxu0
        %942 = vmatprep.mubr.f32.mxu0 0.0
        %943 = vmatmul.mubr.f32.gmra.mxu0 %v866
        %v944 = vpop.f32.mrf.mxu0
        %v945 = vadd.f32 0.0, %v944
        %v946 = vpop.f32.mrf.mxu0
        %947 = vmatprep.mubr.f32.mxu0 0.0
        %948 = vmatmul.mubr.f32.gmra.mxu0 %v866
        %v949 = vpop.f32.mrf.mxu0
        %v950 = vadd.f32 0.0, %v949
        %v951 = vpop.f32.mrf.mxu0
        %952 = vmatprep.mubr.f32.mxu0 0.0
        %953 = vmatmul.mubr.f32.gmra.mxu0 %v866
        %v954 = vpop.f32.mrf.mxu0
        %v955 = vadd.f32 0.0, %v954
        %v956 = vpop.f32.mrf.mxu0
        %957 = vmatprep.mubr.f32.mxu0 0.0
        %958 = vmatmul.mubr.f32.gmra.mxu0 %v866
        %v959 = vpop.f32.mrf.mxu0
        %v960 = vadd.f32 0.0, %v959
        %v961 = vpop.f32.mrf.mxu0
        %962 = vmatprep.mubr.f32.mxu0 0.0
        %963 = vmatmul.mubr.f32.gmra.mxu0 %v866
        %v964 = vpop.f32.mrf.mxu0
        %v965 = vadd.f32 0.0, %v964
        %v966 = vpop.f32.mrf.mxu0
        %967 = vmatprep.mubr.f32.mxu0 0.0
        %968 = vmatmul.mubr.f32.gmra.mxu0 %v866
        %v969 = vpop.f32.mrf.mxu0
        %v970 = vadd.f32 0.0, %v969
        %v971 = vpop.f32.mrf.mxu0
        %972 = vdwg.mxu0
        %v973 = vadd.f32 %v627, %v935
        %v974 = vadd.f32 %v632, %v940
        %v975 = vadd.f32 %v637, %v945
        %v976 = vadd.f32 %v642, %v950
        %v977 = vadd.f32 %v647, %v955
        %v978 = vadd.f32 %v652, %v960
        %v979 = vadd.f32 %v657, %v965
        %v980 = vadd.f32 %v662, %v970
        %v981 = vadd.f32 %v973, %v973
        %v982 = vadd.f32 %v974, %v974
        %v983 = vadd.f32 %v975, %v975
        %v984 = vadd.f32 %v976, %v976
        %v985 = vadd.f32 %v977, %v977
        %v986 = vadd.f32 %v978, %v978
        %v987 = vadd.f32 %v979, %v979
        %v988 = vadd.f32 %v980, %v980
        %v989 = vsel %vm263, %v981, %v973
        %v990 = vsel %vm263, %v982, %v974
        %v991 = vsel %vm263, %v983, %v975
        %v992 = vsel %vm263, %v984, %v976
        %v993 = vsel %vm263, %v985, %v977
        %v994 = vsel %vm263, %v986, %v978
        %v995 = vsel %vm263, %v987, %v979
        %v996 = vsel %vm263, %v988, %v980
        %v997 = vxor.u32 %v989, 2147483648
        %v998 = vxor.u32 %v990, 2147483648
        %v999 = vxor.u32 %v991, 2147483648
        %v1000 = vxor.u32 %v992, 2147483648
        %v1001 = vxor.u32 %v993, 2147483648
        %v1002 = vxor.u32 %v994, 2147483648
        %v1003 = vxor.u32 %v995, 2147483648
        %v1004 = vxor.u32 %v996, 2147483648
        %v1005 = vmul.f32 %v997, 1.442695
        %v1006 = vpow.pop %v1005
        %v1007 = vmul.f32 %v998, 1.442695
        %v1008 = vpow.pop %v1007
        %v1009 = vmul.f32 %v999, 1.442695
        %v1010 = vpow.pop %v1009
        %v1011 = vmul.f32 %v1000, 1.442695
        %v1012 = vpow.pop %v1011
        %v1013 = vmul.f32 %v1001, 1.442695
        %v1014 = vpow.pop %v1013
        %v1015 = vmul.f32 %v1002, 1.442695
        %v1016 = vpow.pop %v1015
        %v1017 = vmul.f32 %v1003, 1.442695
        %v1018 = vpow.pop %v1017
        %v1019 = vmul.f32 %v1004, 1.442695
        %v1020 = vpow.pop %v1019
        %v1021 = vadd.f32 %v1006, 1.0
        %v1022 = vadd.f32 %v1008, 1.0
        %v1023 = vadd.f32 %v1010, 1.0
        %v1024 = vadd.f32 %v1012, 1.0
        %v1025 = vadd.f32 %v1014, 1.0
        %v1026 = vadd.f32 %v1016, 1.0
        %v1027 = vadd.f32 %v1018, 1.0
        %v1028 = vadd.f32 %v1020, 1.0
        %v1029 = vrcp.pop %v1021
        %v1030 = vmul.f32 1.0, %v1029
        %v1031 = vrcp.pop %v1022
        %v1032 = vmul.f32 1.0, %v1031
        %v1033 = vrcp.pop %v1023
        %v1034 = vmul.f32 1.0, %v1033
        %v1035 = vrcp.pop %v1024
        %v1036 = vmul.f32 1.0, %v1035
        %v1037 = vrcp.pop %v1025
        %v1038 = vmul.f32 1.0, %v1037
        %v1039 = vrcp.pop %v1026
        %v1040 = vmul.f32 1.0, %v1039
        %v1041 = vrcp.pop %v1027
        %v1042 = vmul.f32 1.0, %v1041
        %v1043 = vrcp.pop %v1028
        %v1044 = vmul.f32 1.0, %v1043
        %v1045 = vadd.f32 %v1030, %v1030
        %v1046 = vadd.f32 %v1032, %v1032
        %v1047 = vadd.f32 %v1034, %v1034
        %v1048 = vadd.f32 %v1036, %v1036
        %v1049 = vadd.f32 %v1038, %v1038
        %v1050 = vadd.f32 %v1040, %v1040
        %v1051 = vadd.f32 %v1042, %v1042
        %v1052 = vadd.f32 %v1044, %v1044
        %v1053 = vsub.f32 %v1045, 1.0
        %v1054 = vsub.f32 %v1046, 1.0
        %v1055 = vsub.f32 %v1047, 1.0
        %v1056 = vsub.f32 %v1048, 1.0
        %v1057 = vsub.f32 %v1049, 1.0
        %v1058 = vsub.f32 %v1050, 1.0
        %v1059 = vsub.f32 %v1051, 1.0
        %v1060 = vsub.f32 %v1052, 1.0
        %v1061 = vsel %vm263, %v1053, %v1030
        %v1062 = vsel %vm263, %v1054, %v1032
        %v1063 = vsel %vm263, %v1055, %v1034
        %v1064 = vsel %vm263, %v1056, %v1036
        %v1065 = vsel %vm263, %v1057, %v1038
        %v1066 = vsel %vm263, %v1058, %v1040
        %v1067 = vsel %vm263, %v1059, %v1042
        %v1068 = vsel %vm263, %v1060, %v1044
        %v1069 = vmul.f32 %v1061, 0.0
        %v1070 = vmul.f32 %v1062, 0.0
        %v1071 = vmul.f32 %v1063, 0.0
        %v1072 = vmul.f32 %v1064, 0.0
        %v1073 = vmul.f32 %v1065, 0.0
        %v1074 = vmul.f32 %v1066, 0.0
        %v1075 = vmul.f32 %v1067, 0.0
        %v1076 = vmul.f32 %v1068, 0.0
        %1085 = vrot.lane.b32.xlu0 %v1061, 112
        %v1086 = vpop.permute.xlu0 %1085
        %1087 = vrot.lane.b32.xlu0 %v1062, 112
        %v1088 = vpop.permute.xlu0 %1087
        %1089 = vrot.lane.b32.xlu0 %v1063, 112
        %v1090 = vpop.permute.xlu0 %1089
        %1091 = vrot.lane.b32.xlu0 %v1064, 112
        %v1092 = vpop.permute.xlu0 %1091
        %1093 = vrot.lane.b32.xlu0 %v1065, 112
        %v1094 = vpop.permute.xlu0 %1093
        %1095 = vrot.lane.b32.xlu0 %v1066, 112
        %v1096 = vpop.permute.xlu0 %1095
        %1097 = vrot.lane.b32.xlu0 %v1067, 112
        %v1098 = vpop.permute.xlu0 %1097
        %1099 = vrot.lane.b32.xlu0 %v1068, 112
        %v1100 = vpop.permute.xlu0 %1099
        %v1109 = vmul.f32 %v1061, %v1086
        %v1110 = vmul.f32 %v1062, %v1088
        %v1111 = vmul.f32 %v1063, %v1090
        %v1112 = vmul.f32 %v1064, %v1092
        %v1113 = vmul.f32 %v1065, %v1094
        %v1114 = vmul.f32 %v1066, %v1096
        %v1115 = vmul.f32 %v1067, %v1098
        %v1116 = vmul.f32 %v1068, %v1100
        %1125 = vrot.lane.b32.xlu0 %v1109, 8
        %v1126 = vpop.permute.xlu0 %1125
        %1127 = vrot.lane.b32.xlu0 %v1110, 8
        %v1128 = vpop.permute.xlu0 %1127
        %1129 = vrot.lane.b32.xlu0 %v1111, 8
        %v1130 = vpop.permute.xlu0 %1129
        %1131 = vrot.lane.b32.xlu0 %v1112, 8
        %v1132 = vpop.permute.xlu0 %1131
        %1133 = vrot.lane.b32.xlu0 %v1113, 8
        %v1134 = vpop.permute.xlu0 %1133
        %1135 = vrot.lane.b32.xlu0 %v1114, 8
        %v1136 = vpop.permute.xlu0 %1135
        %1137 = vrot.lane.b32.xlu0 %v1115, 8
        %v1138 = vpop.permute.xlu0 %1137
        %1139 = vrot.lane.b32.xlu0 %v1116, 8
        %v1140 = vpop.permute.xlu0 %1139
        %v1149 = vadd.f32 %v1069, %v1126
        %v1150 = vadd.f32 %v1070, %v1128
        %v1151 = vadd.f32 %v1071, %v1130
        %v1152 = vadd.f32 %v1072, %v1132
        %v1153 = vadd.f32 %v1073, %v1134
        %v1154 = vadd.f32 %v1074, %v1136
        %v1155 = vadd.f32 %v1075, %v1138
        %v1156 = vadd.f32 %v1076, %v1140
        %v1157 = vtanh.pop %v1149
        %v1158 = vtanh.pop %v1150
        %v1159 = vtanh.pop %v1151
        %v1160 = vtanh.pop %v1152
        %v1161 = vtanh.pop %v1153
        %v1162 = vtanh.pop %v1154
        %v1163 = vtanh.pop %v1155
        %v1164 = vtanh.pop %v1156
        %1173 = vrot.lane.b32.xlu0 %v1157, 16
        %v1174 = vpop.permute.xlu0 %1173
        %1175 = vrot.lane.b32.xlu0 %v1158, 16
        %v1176 = vpop.permute.xlu0 %1175
        %1177 = vrot.lane.b32.xlu0 %v1159, 16
        %v1178 = vpop.permute.xlu0 %1177
        %1179 = vrot.lane.b32.xlu0 %v1160, 16
        %v1180 = vpop.permute.xlu0 %1179
        %1181 = vrot.lane.b32.xlu0 %v1161, 16
        %v1182 = vpop.permute.xlu0 %1181
        %1183 = vrot.lane.b32.xlu0 %v1162, 16
        %v1184 = vpop.permute.xlu0 %1183
        %1185 = vrot.lane.b32.xlu0 %v1163, 16
        %v1186 = vpop.permute.xlu0 %1185
        %1187 = vrot.lane.b32.xlu0 %v1164, 16
        %v1188 = vpop.permute.xlu0 %1187
        %v1197 = vmul.f32 %v1061, %v1174
        %v1198 = vmul.f32 %v1062, %v1176
        %v1199 = vmul.f32 %v1063, %v1178
        %v1200 = vmul.f32 %v1064, %v1180
        %v1201 = vmul.f32 %v1065, %v1182
        %v1202 = vmul.f32 %v1066, %v1184
        %v1203 = vmul.f32 %v1067, %v1186
        %v1204 = vmul.f32 %v1068, %v1188
        %v1205 = vsel %vm315, 1, 0
        %v1206 = vsel %vm316, 1, 0
        %v1207 = vsel %vm317, 1, 0
        %v1208 = vsel %vm318, 1, 0
        %v1209 = vsel %vm319, 1, 0
        %v1210 = vsel %vm320, 1, 0
        %v1211 = vsel %vm321, 1, 0
        %v1212 = vsel %vm322, 1, 0
        %1213 = vset.pattern.permute.xlu0 0
        %1214 = vperm.xlu0 %1213, %v1205
        %v1215 = vpop.permute.xlu0 %1214
        %1216 = vset.pattern.permute.xlu0 0
        %1217 = vperm.xlu0 %1216, %v1206
        %v1218 = vpop.permute.xlu0 %1217
        %1219 = vset.pattern.permute.xlu0 0
        %1220 = vperm.xlu0 %1219, %v1207
        %v1221 = vpop.permute.xlu0 %1220
        %1222 = vset.pattern.permute.xlu0 0
        %1223 = vperm.xlu0 %1222, %v1208
        %v1224 = vpop.permute.xlu0 %1223
        %1225 = vset.pattern.permute.xlu0 0
        %1226 = vperm.xlu0 %1225, %v1209
        %v1227 = vpop.permute.xlu0 %1226
        %1228 = vset.pattern.permute.xlu0 0
        %1229 = vperm.xlu0 %1228, %v1210
        %v1230 = vpop.permute.xlu0 %1229
        %1231 = vset.pattern.permute.xlu0 0
        %1232 = vperm.xlu0 %1231, %v1211
        %v1233 = vpop.permute.xlu0 %1232
        %1234 = vset.pattern.permute.xlu0 0
        %1235 = vperm.xlu0 %1234, %v1212
        %v1236 = vpop.permute.xlu0 %1235
        %vm1237 = vcmp.eq.s32.totalorder %v1215, 1
        %vm1238 = vcmp.eq.s32.totalorder %v1218, 1
        %vm1239 = vcmp.eq.s32.totalorder %v1221, 1
        %vm1240 = vcmp.eq.s32.totalorder %v1224, 1
        %vm1241 = vcmp.eq.s32.totalorder %v1227, 1
        %vm1242 = vcmp.eq.s32.totalorder %v1230, 1
        %vm1243 = vcmp.eq.s32.totalorder %v1233, 1
        %vm1244 = vcmp.eq.s32.totalorder %v1236, 1
        %v1245 = vsel %vm1237, %v1197, 0.0
        %v1246 = vsel %vm1238, %v1198, 0.0
        %v1247 = vsel %vm1239, %v1199, 0.0
        %v1248 = vsel %vm1240, %v1200, 0.0
        %v1249 = vsel %vm1241, %v1201, 0.0
        %v1250 = vsel %vm1242, %v1202, 0.0
        %v1251 = vsel %vm1243, %v1203, 0.0
        %v1252 = vsel %vm1244, %v1204, 0.0
        %v1253 = vsel %vm1237, %v1149, 0.0
        %v1254 = vsel %vm1238, %v1150, 0.0
        %v1255 = vsel %vm1239, %v1151, 0.0
        %v1256 = vsel %vm1240, %v1152, 0.0
        %v1257 = vsel %vm1241, %v1153, 0.0
        %v1258 = vsel %vm1242, %v1154, 0.0
        %v1259 = vsel %vm1243, %v1155, 0.0
        %v1260 = vsel %vm1244, %v1156, 0.0
        %1269 = vrot.lane.b32.xlu0 %v1245, 104
        %v1270 = vpop.permute.xlu0 %1269
        %1271 = vrot.lane.b32.xlu0 %v1246, 104
        %v1272 = vpop.permute.xlu0 %1271
        %1273 = vrot.lane.b32.xlu0 %v1247, 104
        %v1274 = vpop.permute.xlu0 %1273
        %1275 = vrot.lane.b32.xlu0 %v1248, 104
        %v1276 = vpop.permute.xlu0 %1275
        %1277 = vrot.lane.b32.xlu0 %v1249, 104
        %v1278 = vpop.permute.xlu0 %1277
        %1279 = vrot.lane.b32.xlu0 %v1250, 104
        %v1280 = vpop.permute.xlu0 %1279
        %1281 = vrot.lane.b32.xlu0 %v1251, 104
        %v1282 = vpop.permute.xlu0 %1281
        %1283 = vrot.lane.b32.xlu0 %v1252, 104
        %v1284 = vpop.permute.xlu0 %1283
        %v1285 = vsel %vm415, %v1270, 0
        %v1287 = vsel %vm415, %v1272, 0
        %v1289 = vsel %vm415, %v1274, 0
        %v1291 = vsel %vm415, %v1276, 0
        %v1293 = vsel %vm415, %v1278, 0
        %v1295 = vsel %vm415, %v1280, 0
        %v1297 = vsel %vm415, %v1282, 0
        %v1299 = vsel %vm415, %v1284, 0
        %1301 = vmatprep.subr.mxu0 0.0
        %1302 = vmatpush1.msra.mxu0 0.0
        %1303 = vmatprep.subr.mxu0 0.0
        %1304 = vmatpush1.msra.mxu0 0.0
        %1305 = vmatprep.subr.mxu0 0.0
        %1306 = vmatpush1.msra.mxu0 0.0
        %1307 = vmatprep.subr.mxu0 0.0
        %1308 = vmatpush1.msra.mxu0 0.0
        %1309 = vmatprep.subr.mxu0 0.0
        %1310 = vmatpush1.msra.mxu0 0.0
        %1311 = vmatprep.subr.mxu0 0.0
        %1312 = vmatpush1.msra.mxu0 0.0
        %1313 = vmatprep.subr.mxu0 0.0
        %1314 = vmatpush1.msra.mxu0 0.0
        %1315 = vmatprep.subr.mxu0 0.0
        %1316 = vmatpush1.msra.mxu0 0.0
        %1317 = vmatprep.subr.mxu0 0.0
        %1318 = vmatpush1.msra.mxu0 0.0
        %1319 = vmatprep.subr.mxu0 0.0
        %1320 = vmatpush1.msra.mxu0 0.0
        %1321 = vmatprep.subr.mxu0 0.0
        %1322 = vmatpush1.msra.mxu0 0.0
        %1323 = vmatprep.subr.mxu0 0.0
        %1324 = vmatpush1.msra.mxu0 0.0
        %1325 = vmatprep.subr.mxu0 0.0
        %1326 = vmatpush1.msra.mxu0 0.0
        %1327 = vmatprep.subr.mxu0 0.0
        %1328 = vmatpush1.msra.mxu0 0.0
        %1329 = vmatprep.subr.mxu0 0.0
        %1330 = vmatpush1.msra.mxu0 0.0
        %1331 = vmatprep.subr.mxu0 0.0
        %1332 = vmatpush1.msra.mxu0 %v244
        %1333 = vmatprep.subr.mxu0 0.0
        %1334 = vmatpush2.msra.mxu0 0.0
        %1335 = vmatprep.subr.mxu0 0.0
        %1336 = vmatpush2.msra.mxu0 0.0
        %1337 = vmatprep.subr.mxu0 0.0
        %1338 = vmatpush2.msra.mxu0 0.0
        %1339 = vmatprep.subr.mxu0 0.0
        %1340 = vmatpush2.msra.mxu0 0.0
        %1341 = vmatprep.subr.mxu0 0.0
        %1342 = vmatpush2.msra.mxu0 0.0
        %1343 = vmatprep.subr.mxu0 0.0
        %1344 = vmatpush2.msra.mxu0 0.0
        %1345 = vmatprep.subr.mxu0 0.0
        %1346 = vmatpush2.msra.mxu0 0.0
        %1347 = vmatprep.subr.mxu0 0.0
        %1348 = vmatpush2.msra.mxu0 0.0
        %1349 = vmatprep.subr.mxu0 0.0
        %1350 = vmatpush2.msra.mxu0 0.0
        %1351 = vmatprep.subr.mxu0 0.0
        %1352 = vmatpush2.msra.mxu0 0.0
        %1353 = vmatprep.subr.mxu0 0.0
        %1354 = vmatpush2.msra.mxu0 0.0
        %1355 = vmatprep.subr.mxu0 0.0
        %1356 = vmatpush2.msra.mxu0 0.0
        %1357 = vmatprep.subr.mxu0 0.0
        %1358 = vmatpush2.msra.mxu0 0.0
        %1359 = vmatprep.subr.mxu0 0.0
        %1360 = vmatpush2.msra.mxu0 0.0
        %1361 = vmatprep.subr.mxu0 0.0
        %1362 = vmatpush2.msra.mxu0 0.0
        %1363 = vmatprep.subr.mxu0 0.0
        %1364 = vmatpush2.msra.mxu0 0.0
        %1365 = vmatprep.mubr.f32.mxu0 0.0
        %1366 = vmatmul.mubr.f32.gmra.mxu0 %v1285
        %v1367 = vpop.f32.mrf.mxu0
        %v1368 = vadd.f32 0.0, %v1367
        %v1369 = vpop.f32.mrf.mxu0
        %1370 = vmatprep.mubr.f32.mxu0 0.0
        %1371 = vmatmul.mubr.f32.gmra.mxu0 %v1287
        %v1372 = vpop.f32.mrf.mxu0
        %v1373 = vadd.f32 0.0, %v1372
        %v1374 = vpop.f32.mrf.mxu0
        %1375 = vmatprep.mubr.f32.mxu0 0.0
        %1376 = vmatmul.mubr.f32.gmra.mxu0 %v1289
        %v1377 = vpop.f32.mrf.mxu0
        %v1378 = vadd.f32 0.0, %v1377
        %v1379 = vpop.f32.mrf.mxu0
        %1380 = vmatprep.mubr.f32.mxu0 0.0
        %1381 = vmatmul.mubr.f32.gmra.mxu0 %v1291
        %v1382 = vpop.f32.mrf.mxu0
        %v1383 = vadd.f32 0.0, %v1382
        %v1384 = vpop.f32.mrf.mxu0
        %1385 = vmatprep.mubr.f32.mxu0 0.0
        %1386 = vmatmul.mubr.f32.gmra.mxu0 %v1293
        %v1387 = vpop.f32.mrf.mxu0
        %v1388 = vadd.f32 0.0, %v1387
        %v1389 = vpop.f32.mrf.mxu0
        %1390 = vmatprep.mubr.f32.mxu0 0.0
        %1391 = vmatmul.mubr.f32.gmra.mxu0 %v1295
        %v1392 = vpop.f32.mrf.mxu0
        %v1393 = vadd.f32 0.0, %v1392
        %v1394 = vpop.f32.mrf.mxu0
        %1395 = vmatprep.mubr.f32.mxu0 0.0
        %1396 = vmatmul.mubr.f32.gmra.mxu0 %v1297
        %v1397 = vpop.f32.mrf.mxu0
        %v1398 = vadd.f32 0.0, %v1397
        %v1399 = vpop.f32.mrf.mxu0
        %1400 = vmatprep.mubr.f32.mxu0 0.0
        %1401 = vmatmul.mubr.f32.gmra.mxu0 %v1299
        %v1402 = vpop.f32.mrf.mxu0
        %v1403 = vadd.f32 0.0, %v1402
        %v1404 = vpop.f32.mrf.mxu0
        %1405 = vdwg.mxu0
        %v1406 = vadd.f32 %v667, %v1368
        %v1407 = vadd.f32 %v672, %v1373
        %v1408 = vadd.f32 %v677, %v1378
        %v1409 = vadd.f32 %v682, %v1383
        %v1410 = vadd.f32 %v687, %v1388
        %v1411 = vadd.f32 %v692, %v1393
        %v1412 = vadd.f32 %v697, %v1398
        %v1413 = vadd.f32 %v702, %v1403
        %v1414 = vadd.f32 %v1406, %v1406
        %v1415 = vadd.f32 %v1407, %v1407
        %v1416 = vadd.f32 %v1408, %v1408
        %v1417 = vadd.f32 %v1409, %v1409
        %v1418 = vadd.f32 %v1410, %v1410
        %v1419 = vadd.f32 %v1411, %v1411
        %v1420 = vadd.f32 %v1412, %v1412
        %v1421 = vadd.f32 %v1413, %v1413
        %v1422 = vsel %vm263, %v1414, %v1406
        %v1423 = vsel %vm263, %v1415, %v1407
        %v1424 = vsel %vm263, %v1416, %v1408
        %v1425 = vsel %vm263, %v1417, %v1409
        %v1426 = vsel %vm263, %v1418, %v1410
        %v1427 = vsel %vm263, %v1419, %v1411
        %v1428 = vsel %vm263, %v1420, %v1412
        %v1429 = vsel %vm263, %v1421, %v1413
        %v1430 = vxor.u32 %v1422, 2147483648
        %v1431 = vxor.u32 %v1423, 2147483648
        %v1432 = vxor.u32 %v1424, 2147483648
        %v1433 = vxor.u32 %v1425, 2147483648
        %v1434 = vxor.u32 %v1426, 2147483648
        %v1435 = vxor.u32 %v1427, 2147483648
        %v1436 = vxor.u32 %v1428, 2147483648
        %v1437 = vxor.u32 %v1429, 2147483648
        %v1438 = vmul.f32 %v1430, 1.442695
        %v1439 = vpow.pop %v1438
        %v1440 = vmul.f32 %v1431, 1.442695
        %v1441 = vpow.pop %v1440
        %v1442 = vmul.f32 %v1432, 1.442695
        %v1443 = vpow.pop %v1442
        %v1444 = vmul.f32 %v1433, 1.442695
        %v1445 = vpow.pop %v1444
        %v1446 = vmul.f32 %v1434, 1.442695
        %v1447 = vpow.pop %v1446
        %v1448 = vmul.f32 %v1435, 1.442695
        %v1449 = vpow.pop %v1448
        %v1450 = vmul.f32 %v1436, 1.442695
        %v1451 = vpow.pop %v1450
        %v1452 = vmul.f32 %v1437, 1.442695
        %v1453 = vpow.pop %v1452
        %v1454 = vadd.f32 %v1439, 1.0
        %v1455 = vadd.f32 %v1441, 1.0
        %v1456 = vadd.f32 %v1443, 1.0
        %v1457 = vadd.f32 %v1445, 1.0
        %v1458 = vadd.f32 %v1447, 1.0
        %v1459 = vadd.f32 %v1449, 1.0
        %v1460 = vadd.f32 %v1451, 1.0
        %v1461 = vadd.f32 %v1453, 1.0
        %v1462 = vrcp.pop %v1454
        %v1463 = vmul.f32 1.0, %v1462
        %v1464 = vrcp.pop %v1455
        %v1465 = vmul.f32 1.0, %v1464
        %v1466 = vrcp.pop %v1456
        %v1467 = vmul.f32 1.0, %v1466
        %v1468 = vrcp.pop %v1457
        %v1469 = vmul.f32 1.0, %v1468
        %v1470 = vrcp.pop %v1458
        %v1471 = vmul.f32 1.0, %v1470
        %v1472 = vrcp.pop %v1459
        %v1473 = vmul.f32 1.0, %v1472
        %v1474 = vrcp.pop %v1460
        %v1475 = vmul.f32 1.0, %v1474
        %v1476 = vrcp.pop %v1461
        %v1477 = vmul.f32 1.0, %v1476
        %v1478 = vadd.f32 %v1463, %v1463
        %v1479 = vadd.f32 %v1465, %v1465
        %v1480 = vadd.f32 %v1467, %v1467
        %v1481 = vadd.f32 %v1469, %v1469
        %v1482 = vadd.f32 %v1471, %v1471
        %v1483 = vadd.f32 %v1473, %v1473
        %v1484 = vadd.f32 %v1475, %v1475
        %v1485 = vadd.f32 %v1477, %v1477
        %v1486 = vsub.f32 %v1478, 1.0
        %v1487 = vsub.f32 %v1479, 1.0
        %v1488 = vsub.f32 %v1480, 1.0
        %v1489 = vsub.f32 %v1481, 1.0
        %v1490 = vsub.f32 %v1482, 1.0
        %v1491 = vsub.f32 %v1483, 1.0
        %v1492 = vsub.f32 %v1484, 1.0
        %v1493 = vsub.f32 %v1485, 1.0
        %v1494 = vsel %vm263, %v1486, %v1463
        %v1495 = vsel %vm263, %v1487, %v1465
        %v1496 = vsel %vm263, %v1488, %v1467
        %v1497 = vsel %vm263, %v1489, %v1469
        %v1498 = vsel %vm263, %v1490, %v1471
        %v1499 = vsel %vm263, %v1491, %v1473
        %v1500 = vsel %vm263, %v1492, %v1475
        %v1501 = vsel %vm263, %v1493, %v1477
        %v1502 = vmul.f32 %v1494, %v1253
        %v1503 = vmul.f32 %v1495, %v1254
        %v1504 = vmul.f32 %v1496, %v1255
        %v1505 = vmul.f32 %v1497, %v1256
        %v1506 = vmul.f32 %v1498, %v1257
        %v1507 = vmul.f32 %v1499, %v1258
        %v1508 = vmul.f32 %v1500, %v1259
        %v1509 = vmul.f32 %v1501, %v1260
        %1518 = vrot.lane.b32.xlu0 %v1494, 112
        %v1519 = vpop.permute.xlu0 %1518
        %1520 = vrot.lane.b32.xlu0 %v1495, 112
        %v1521 = vpop.permute.xlu0 %1520
        %1522 = vrot.lane.b32.xlu0 %v1496, 112
        %v1523 = vpop.permute.xlu0 %1522
        %1524 = vrot.lane.b32.xlu0 %v1497, 112
        %v1525 = vpop.permute.xlu0 %1524
        %1526 = vrot.lane.b32.xlu0 %v1498, 112
        %v1527 = vpop.permute.xlu0 %1526
        %1528 = vrot.lane.b32.xlu0 %v1499, 112
        %v1529 = vpop.permute.xlu0 %1528
        %1530 = vrot.lane.b32.xlu0 %v1500, 112
        %v1531 = vpop.permute.xlu0 %1530
        %1532 = vrot.lane.b32.xlu0 %v1501, 112
        %v1533 = vpop.permute.xlu0 %1532
        %v1542 = vmul.f32 %v1494, %v1519
        %v1543 = vmul.f32 %v1495, %v1521
        %v1544 = vmul.f32 %v1496, %v1523
        %v1545 = vmul.f32 %v1497, %v1525
        %v1546 = vmul.f32 %v1498, %v1527
        %v1547 = vmul.f32 %v1499, %v1529
        %v1548 = vmul.f32 %v1500, %v1531
        %v1549 = vmul.f32 %v1501, %v1533
        %1558 = vrot.lane.b32.xlu0 %v1542, 8
        %v1559 = vpop.permute.xlu0 %1558
        %1560 = vrot.lane.b32.xlu0 %v1543, 8
        %v1561 = vpop.permute.xlu0 %1560
        %1562 = vrot.lane.b32.xlu0 %v1544, 8
        %v1563 = vpop.permute.xlu0 %1562
        %1564 = vrot.lane.b32.xlu0 %v1545, 8
        %v1565 = vpop.permute.xlu0 %1564
        %1566 = vrot.lane.b32.xlu0 %v1546, 8
        %v1567 = vpop.permute.xlu0 %1566
        %1568 = vrot.lane.b32.xlu0 %v1547, 8
        %v1569 = vpop.permute.xlu0 %1568
        %1570 = vrot.lane.b32.xlu0 %v1548, 8
        %v1571 = vpop.permute.xlu0 %1570
        %1572 = vrot.lane.b32.xlu0 %v1549, 8
        %v1573 = vpop.permute.xlu0 %1572
        %v1582 = vadd.f32 %v1502, %v1559
        %v1583 = vadd.f32 %v1503, %v1561
        %v1584 = vadd.f32 %v1504, %v1563
        %v1585 = vadd.f32 %v1505, %v1565
        %v1586 = vadd.f32 %v1506, %v1567
        %v1587 = vadd.f32 %v1507, %v1569
        %v1588 = vadd.f32 %v1508, %v1571
        %v1589 = vadd.f32 %v1509, %v1573
        %v1590 = vtanh.pop %v1582
        %v1591 = vtanh.pop %v1583
        %v1592 = vtanh.pop %v1584
        %v1593 = vtanh.pop %v1585
        %v1594 = vtanh.pop %v1586
        %v1595 = vtanh.pop %v1587
        %v1596 = vtanh.pop %v1588
        %v1597 = vtanh.pop %v1589
        %1606 = vrot.lane.b32.xlu0 %v1590, 16
        %v1607 = vpop.permute.xlu0 %1606
        %1608 = vrot.lane.b32.xlu0 %v1591, 16
        %v1609 = vpop.permute.xlu0 %1608
        %1610 = vrot.lane.b32.xlu0 %v1592, 16
        %v1611 = vpop.permute.xlu0 %1610
        %1612 = vrot.lane.b32.xlu0 %v1593, 16
        %v1613 = vpop.permute.xlu0 %1612
        %1614 = vrot.lane.b32.xlu0 %v1594, 16
        %v1615 = vpop.permute.xlu0 %1614
        %1616 = vrot.lane.b32.xlu0 %v1595, 16
        %v1617 = vpop.permute.xlu0 %1616
        %1618 = vrot.lane.b32.xlu0 %v1596, 16
        %v1619 = vpop.permute.xlu0 %1618
        %1620 = vrot.lane.b32.xlu0 %v1597, 16
        %v1621 = vpop.permute.xlu0 %1620
        %v1630 = vmul.f32 %v1494, %v1607
        %v1631 = vmul.f32 %v1495, %v1609
        %v1632 = vmul.f32 %v1496, %v1611
        %v1633 = vmul.f32 %v1497, %v1613
        %v1634 = vmul.f32 %v1498, %v1615
        %v1635 = vmul.f32 %v1499, %v1617
        %v1636 = vmul.f32 %v1500, %v1619
        %v1637 = vmul.f32 %v1501, %v1621
        %v1638 = vsel %vm323, 1, 0
        %v1639 = vsel %vm324, 1, 0
        %v1640 = vsel %vm325, 1, 0
        %v1641 = vsel %vm326, 1, 0
        %v1642 = vsel %vm327, 1, 0
        %v1643 = vsel %vm328, 1, 0
        %v1644 = vsel %vm329, 1, 0
        %v1645 = vsel %vm330, 1, 0
        %1646 = vset.pattern.permute.xlu0 0
        %1647 = vperm.xlu0 %1646, %v1638
        %v1648 = vpop.permute.xlu0 %1647
        %1649 = vset.pattern.permute.xlu0 0
        %1650 = vperm.xlu0 %1649, %v1639
        %v1651 = vpop.permute.xlu0 %1650
        %1652 = vset.pattern.permute.xlu0 0
        %1653 = vperm.xlu0 %1652, %v1640
        %v1654 = vpop.permute.xlu0 %1653
        %1655 = vset.pattern.permute.xlu0 0
        %1656 = vperm.xlu0 %1655, %v1641
        %v1657 = vpop.permute.xlu0 %1656
        %1658 = vset.pattern.permute.xlu0 0
        %1659 = vperm.xlu0 %1658, %v1642
        %v1660 = vpop.permute.xlu0 %1659
        %1661 = vset.pattern.permute.xlu0 0
        %1662 = vperm.xlu0 %1661, %v1643
        %v1663 = vpop.permute.xlu0 %1662
        %1664 = vset.pattern.permute.xlu0 0
        %1665 = vperm.xlu0 %1664, %v1644
        %v1666 = vpop.permute.xlu0 %1665
        %1667 = vset.pattern.permute.xlu0 0
        %1668 = vperm.xlu0 %1667, %v1645
        %v1669 = vpop.permute.xlu0 %1668
        %vm1670 = vcmp.eq.s32.totalorder %v1648, 1
        %vm1671 = vcmp.eq.s32.totalorder %v1651, 1
        %vm1672 = vcmp.eq.s32.totalorder %v1654, 1
        %vm1673 = vcmp.eq.s32.totalorder %v1657, 1
        %vm1674 = vcmp.eq.s32.totalorder %v1660, 1
        %vm1675 = vcmp.eq.s32.totalorder %v1663, 1
        %vm1676 = vcmp.eq.s32.totalorder %v1666, 1
        %vm1677 = vcmp.eq.s32.totalorder %v1669, 1
        %v1678 = vsel %vm1670, %v1630, %v1245
        %v1679 = vsel %vm1671, %v1631, %v1246
        %v1680 = vsel %vm1672, %v1632, %v1247
        %v1681 = vsel %vm1673, %v1633, %v1248
        %v1682 = vsel %vm1674, %v1634, %v1249
        %v1683 = vsel %vm1675, %v1635, %v1250
        %v1684 = vsel %vm1676, %v1636, %v1251
        %v1685 = vsel %vm1677, %v1637, %v1252
        %v1686 = vsel %vm1670, %v1582, %v1253
        %v1687 = vsel %vm1671, %v1583, %v1254
        %v1688 = vsel %vm1672, %v1584, %v1255
        %v1689 = vsel %vm1673, %v1585, %v1256
        %v1690 = vsel %vm1674, %v1586, %v1257
        %v1691 = vsel %vm1675, %v1587, %v1258
        %v1692 = vsel %vm1676, %v1588, %v1259
        %v1693 = vsel %vm1677, %v1589, %v1260
        %1702 = vrot.lane.b32.xlu0 %v1678, 104
        %v1703 = vpop.permute.xlu0 %1702
        %1704 = vrot.lane.b32.xlu0 %v1679, 104
        %v1705 = vpop.permute.xlu0 %1704
        %1706 = vrot.lane.b32.xlu0 %v1680, 104
        %v1707 = vpop.permute.xlu0 %1706
        %1708 = vrot.lane.b32.xlu0 %v1681, 104
        %v1709 = vpop.permute.xlu0 %1708
        %1710 = vrot.lane.b32.xlu0 %v1682, 104
        %v1711 = vpop.permute.xlu0 %1710
        %1712 = vrot.lane.b32.xlu0 %v1683, 104
        %v1713 = vpop.permute.xlu0 %1712
        %1714 = vrot.lane.b32.xlu0 %v1684, 104
        %v1715 = vpop.permute.xlu0 %1714
        %1716 = vrot.lane.b32.xlu0 %v1685, 104
        %v1717 = vpop.permute.xlu0 %1716
        %v1718 = vsel %vm415, %v1703, 0
        %v1720 = vsel %vm415, %v1705, 0
        %v1722 = vsel %vm415, %v1707, 0
        %v1724 = vsel %vm415, %v1709, 0
        %v1726 = vsel %vm415, %v1711, 0
        %v1728 = vsel %vm415, %v1713, 0
        %v1730 = vsel %vm415, %v1715, 0
        %v1732 = vsel %vm415, %v1717, 0
        %1734 = vmatprep.subr.mxu0 0.0
        %1735 = vmatpush1.msra.mxu0 0.0
        %1736 = vmatprep.subr.mxu0 0.0
        %1737 = vmatpush1.msra.mxu0 0.0
        %1738 = vmatprep.subr.mxu0 0.0
        %1739 = vmatpush1.msra.mxu0 0.0
        %1740 = vmatprep.subr.mxu0 0.0
        %1741 = vmatpush1.msra.mxu0 0.0
        %1742 = vmatprep.subr.mxu0 0.0
        %1743 = vmatpush1.msra.mxu0 0.0
        %1744 = vmatprep.subr.mxu0 0.0
        %1745 = vmatpush1.msra.mxu0 0.0
        %1746 = vmatprep.subr.mxu0 0.0
        %1747 = vmatpush1.msra.mxu0 0.0
        %1748 = vmatprep.subr.mxu0 0.0
        %1749 = vmatpush1.msra.mxu0 0.0
        %1750 = vmatprep.subr.mxu0 0.0
        %1751 = vmatpush1.msra.mxu0 0.0
        %1752 = vmatprep.subr.mxu0 0.0
        %1753 = vmatpush1.msra.mxu0 0.0
        %1754 = vmatprep.subr.mxu0 0.0
        %1755 = vmatpush1.msra.mxu0 0.0
        %1756 = vmatprep.subr.mxu0 0.0
        %1757 = vmatpush1.msra.mxu0 0.0
        %1758 = vmatprep.subr.mxu0 0.0
        %1759 = vmatpush1.msra.mxu0 0.0
        %1760 = vmatprep.subr.mxu0 0.0
        %1761 = vmatpush1.msra.mxu0 0.0
        %1762 = vmatprep.subr.mxu0 0.0
        %1763 = vmatpush1.msra.mxu0 0.0
        %1764 = vmatprep.subr.mxu0 0.0
        %1765 = vmatpush1.msra.mxu0 %v244
        %1766 = vmatprep.subr.mxu0 0.0
        %1767 = vmatpush2.msra.mxu0 0.0
        %1768 = vmatprep.subr.mxu0 0.0
        %1769 = vmatpush2.msra.mxu0 0.0
        %1770 = vmatprep.subr.mxu0 0.0
        %1771 = vmatpush2.msra.mxu0 0.0
        %1772 = vmatprep.subr.mxu0 0.0
        %1773 = vmatpush2.msra.mxu0 0.0
        %1774 = vmatprep.subr.mxu0 0.0
        %1775 = vmatpush2.msra.mxu0 0.0
        %1776 = vmatprep.subr.mxu0 0.0
        %1777 = vmatpush2.msra.mxu0 0.0
        %1778 = vmatprep.subr.mxu0 0.0
        %1779 = vmatpush2.msra.mxu0 0.0
        %1780 = vmatprep.subr.mxu0 0.0
        %1781 = vmatpush2.msra.mxu0 0.0
        %1782 = vmatprep.subr.mxu0 0.0
        %1783 = vmatpush2.msra.mxu0 0.0
        %1784 = vmatprep.subr.mxu0 0.0
        %1785 = vmatpush2.msra.mxu0 0.0
        %1786 = vmatprep.subr.mxu0 0.0
        %1787 = vmatpush2.msra.mxu0 0.0
        %1788 = vmatprep.subr.mxu0 0.0
        %1789 = vmatpush2.msra.mxu0 0.0
        %1790 = vmatprep.subr.mxu0 0.0
        %1791 = vmatpush2.msra.mxu0 0.0
        %1792 = vmatprep.subr.mxu0 0.0
        %1793 = vmatpush2.msra.mxu0 0.0
        %1794 = vmatprep.subr.mxu0 0.0
        %1795 = vmatpush2.msra.mxu0 0.0
        %1796 = vmatprep.subr.mxu0 0.0
        %1797 = vmatpush2.msra.mxu0 0.0
        %1798 = vmatprep.mubr.f32.mxu0 0.0
        %1799 = vmatmul.mubr.f32.gmra.mxu0 %v1718
        %v1800 = vpop.f32.mrf.mxu0
        %v1801 = vadd.f32 0.0, %v1800
        %v1802 = vpop.f32.mrf.mxu0
        %1803 = vmatprep.mubr.f32.mxu0 0.0
        %1804 = vmatmul.mubr.f32.gmra.mxu0 %v1720
        %v1805 = vpop.f32.mrf.mxu0
        %v1806 = vadd.f32 0.0, %v1805
        %v1807 = vpop.f32.mrf.mxu0
        %1808 = vmatprep.mubr.f32.mxu0 0.0
        %1809 = vmatmul.mubr.f32.gmra.mxu0 %v1722
        %v1810 = vpop.f32.mrf.mxu0
        %v1811 = vadd.f32 0.0, %v1810
        %v1812 = vpop.f32.mrf.mxu0
        %1813 = vmatprep.mubr.f32.mxu0 0.0
        %1814 = vmatmul.mubr.f32.gmra.mxu0 %v1724
        %v1815 = vpop.f32.mrf.mxu0
        %v1816 = vadd.f32 0.0, %v1815
        %v1817 = vpop.f32.mrf.mxu0
        %1818 = vmatprep.mubr.f32.mxu0 0.0
        %1819 = vmatmul.mubr.f32.gmra.mxu0 %v1726
        %v1820 = vpop.f32.mrf.mxu0
        %v1821 = vadd.f32 0.0, %v1820
        %v1822 = vpop.f32.mrf.mxu0
        %1823 = vmatprep.mubr.f32.mxu0 0.0
        %1824 = vmatmul.mubr.f32.gmra.mxu0 %v1728
        %v1825 = vpop.f32.mrf.mxu0
        %v1826 = vadd.f32 0.0, %v1825
        %v1827 = vpop.f32.mrf.mxu0
        %1828 = vmatprep.mubr.f32.mxu0 0.0
        %1829 = vmatmul.mubr.f32.gmra.mxu0 %v1730
        %v1830 = vpop.f32.mrf.mxu0
        %v1831 = vadd.f32 0.0, %v1830
        %v1832 = vpop.f32.mrf.mxu0
        %1833 = vmatprep.mubr.f32.mxu0 0.0
        %1834 = vmatmul.mubr.f32.gmra.mxu0 %v1732
        %v1835 = vpop.f32.mrf.mxu0
        %v1836 = vadd.f32 0.0, %v1835
        %v1837 = vpop.f32.mrf.mxu0
        %1838 = vdwg.mxu0
        %v1839 = vadd.f32 %v707, %v1801
        %v1840 = vadd.f32 %v712, %v1806
        %v1841 = vadd.f32 %v717, %v1811
        %v1842 = vadd.f32 %v722, %v1816
        %v1843 = vadd.f32 %v727, %v1821
        %v1844 = vadd.f32 %v732, %v1826
        %v1845 = vadd.f32 %v737, %v1831
        %v1846 = vadd.f32 %v742, %v1836
        %v1847 = vadd.f32 %v1839, %v1839
        %v1848 = vadd.f32 %v1840, %v1840
        %v1849 = vadd.f32 %v1841, %v1841
        %v1850 = vadd.f32 %v1842, %v1842
        %v1851 = vadd.f32 %v1843, %v1843
        %v1852 = vadd.f32 %v1844, %v1844
        %v1853 = vadd.f32 %v1845, %v1845
        %v1854 = vadd.f32 %v1846, %v1846
        %v1855 = vsel %vm263, %v1847, %v1839
        %v1856 = vsel %vm263, %v1848, %v1840
        %v1857 = vsel %vm263, %v1849, %v1841
        %v1858 = vsel %vm263, %v1850, %v1842
        %v1859 = vsel %vm263, %v1851, %v1843
        %v1860 = vsel %vm263, %v1852, %v1844
        %v1861 = vsel %vm263, %v1853, %v1845
        %v1862 = vsel %vm263, %v1854, %v1846
        %v1863 = vxor.u32 %v1855, 2147483648
        %v1864 = vxor.u32 %v1856, 2147483648
        %v1865 = vxor.u32 %v1857, 2147483648
        %v1866 = vxor.u32 %v1858, 2147483648
        %v1867 = vxor.u32 %v1859, 2147483648
        %v1868 = vxor.u32 %v1860, 2147483648
        %v1869 = vxor.u32 %v1861, 2147483648
        %v1870 = vxor.u32 %v1862, 2147483648
        %v1871 = vmul.f32 %v1863, 1.442695
        %v1872 = vpow.pop %v1871
        %v1873 = vmul.f32 %v1864, 1.442695
        %v1874 = vpow.pop %v1873
        %v1875 = vmul.f32 %v1865, 1.442695
        %v1876 = vpow.pop %v1875
        %v1877 = vmul.f32 %v1866, 1.442695
        %v1878 = vpow.pop %v1877
        %v1879 = vmul.f32 %v1867, 1.442695
        %v1880 = vpow.pop %v1879
        %v1881 = vmul.f32 %v1868, 1.442695
        %v1882 = vpow.pop %v1881
        %v1883 = vmul.f32 %v1869, 1.442695
        %v1884 = vpow.pop %v1883
        %v1885 = vmul.f32 %v1870, 1.442695
        %v1886 = vpow.pop %v1885
        %v1887 = vadd.f32 %v1872, 1.0
        %v1888 = vadd.f32 %v1874, 1.0
        %v1889 = vadd.f32 %v1876, 1.0
        %v1890 = vadd.f32 %v1878, 1.0
        %v1891 = vadd.f32 %v1880, 1.0
        %v1892 = vadd.f32 %v1882, 1.0
        %v1893 = vadd.f32 %v1884, 1.0
        %v1894 = vadd.f32 %v1886, 1.0
        %v1895 = vrcp.pop %v1887
        %v1896 = vmul.f32 1.0, %v1895
        %v1897 = vrcp.pop %v1888
        %v1898 = vmul.f32 1.0, %v1897
        %v1899 = vrcp.pop %v1889
        %v1900 = vmul.f32 1.0, %v1899
        %v1901 = vrcp.pop %v1890
        %v1902 = vmul.f32 1.0, %v1901
        %v1903 = vrcp.pop %v1891
        %v1904 = vmul.f32 1.0, %v1903
        %v1905 = vrcp.pop %v1892
        %v1906 = vmul.f32 1.0, %v1905
        %v1907 = vrcp.pop %v1893
        %v1908 = vmul.f32 1.0, %v1907
        %v1909 = vrcp.pop %v1894
        %v1910 = vmul.f32 1.0, %v1909
        %v1911 = vadd.f32 %v1896, %v1896
        %v1912 = vadd.f32 %v1898, %v1898
        %v1913 = vadd.f32 %v1900, %v1900
        %v1914 = vadd.f32 %v1902, %v1902
        %v1915 = vadd.f32 %v1904, %v1904
        %v1916 = vadd.f32 %v1906, %v1906
        %v1917 = vadd.f32 %v1908, %v1908
        %v1918 = vadd.f32 %v1910, %v1910
        %v1919 = vsub.f32 %v1911, 1.0
        %v1920 = vsub.f32 %v1912, 1.0
        %v1921 = vsub.f32 %v1913, 1.0
        %v1922 = vsub.f32 %v1914, 1.0
        %v1923 = vsub.f32 %v1915, 1.0
        %v1924 = vsub.f32 %v1916, 1.0
        %v1925 = vsub.f32 %v1917, 1.0
        %v1926 = vsub.f32 %v1918, 1.0
        %v1927 = vsel %vm263, %v1919, %v1896
        %v1928 = vsel %vm263, %v1920, %v1898
        %v1929 = vsel %vm263, %v1921, %v1900
        %v1930 = vsel %vm263, %v1922, %v1902
        %v1931 = vsel %vm263, %v1923, %v1904
        %v1932 = vsel %vm263, %v1924, %v1906
        %v1933 = vsel %vm263, %v1925, %v1908
        %v1934 = vsel %vm263, %v1926, %v1910
        %v1935 = vmul.f32 %v1927, %v1686
        %v1936 = vmul.f32 %v1928, %v1687
        %v1937 = vmul.f32 %v1929, %v1688
        %v1938 = vmul.f32 %v1930, %v1689
        %v1939 = vmul.f32 %v1931, %v1690
        %v1940 = vmul.f32 %v1932, %v1691
        %v1941 = vmul.f32 %v1933, %v1692
        %v1942 = vmul.f32 %v1934, %v1693
        %1951 = vrot.lane.b32.xlu0 %v1927, 112
        %v1952 = vpop.permute.xlu0 %1951
        %1953 = vrot.lane.b32.xlu0 %v1928, 112
        %v1954 = vpop.permute.xlu0 %1953
        %1955 = vrot.lane.b32.xlu0 %v1929, 112
        %v1956 = vpop.permute.xlu0 %1955
        %1957 = vrot.lane.b32.xlu0 %v1930, 112
        %v1958 = vpop.permute.xlu0 %1957
        %1959 = vrot.lane.b32.xlu0 %v1931, 112
        %v1960 = vpop.permute.xlu0 %1959
        %1961 = vrot.lane.b32.xlu0 %v1932, 112
        %v1962 = vpop.permute.xlu0 %1961
        %1963 = vrot.lane.b32.xlu0 %v1933, 112
        %v1964 = vpop.permute.xlu0 %1963
        %1965 = vrot.lane.b32.xlu0 %v1934, 112
        %v1966 = vpop.permute.xlu0 %1965
        %v1975 = vmul.f32 %v1927, %v1952
        %v1976 = vmul.f32 %v1928, %v1954
        %v1977 = vmul.f32 %v1929, %v1956
        %v1978 = vmul.f32 %v1930, %v1958
        %v1979 = vmul.f32 %v1931, %v1960
        %v1980 = vmul.f32 %v1932, %v1962
        %v1981 = vmul.f32 %v1933, %v1964
        %v1982 = vmul.f32 %v1934, %v1966
        %1991 = vrot.lane.b32.xlu0 %v1975, 8
        %v1992 = vpop.permute.xlu0 %1991
        %1993 = vrot.lane.b32.xlu0 %v1976, 8
        %v1994 = vpop.permute.xlu0 %1993
        %1995 = vrot.lane.b32.xlu0 %v1977, 8
        %v1996 = vpop.permute.xlu0 %1995
        %1997 = vrot.lane.b32.xlu0 %v1978, 8
        %v1998 = vpop.permute.xlu0 %1997
        %1999 = vrot.lane.b32.xlu0 %v1979, 8
        %v2000 = vpop.permute.xlu0 %1999
        %2001 = vrot.lane.b32.xlu0 %v1980, 8
        %v2002 = vpop.permute.xlu0 %2001
        %2003 = vrot.lane.b32.xlu0 %v1981, 8
        %v2004 = vpop.permute.xlu0 %2003
        %2005 = vrot.lane.b32.xlu0 %v1982, 8
        %v2006 = vpop.permute.xlu0 %2005
        %v2015 = vadd.f32 %v1935, %v1992
        %v2016 = vadd.f32 %v1936, %v1994
        %v2017 = vadd.f32 %v1937, %v1996
        %v2018 = vadd.f32 %v1938, %v1998
        %v2019 = vadd.f32 %v1939, %v2000
        %v2020 = vadd.f32 %v1940, %v2002
        %v2021 = vadd.f32 %v1941, %v2004
        %v2022 = vadd.f32 %v1942, %v2006
        %v2023 = vtanh.pop %v2015
        %v2024 = vtanh.pop %v2016
        %v2025 = vtanh.pop %v2017
        %v2026 = vtanh.pop %v2018
        %v2027 = vtanh.pop %v2019
        %v2028 = vtanh.pop %v2020
        %v2029 = vtanh.pop %v2021
        %v2030 = vtanh.pop %v2022
        %2039 = vrot.lane.b32.xlu0 %v2023, 16
        %v2040 = vpop.permute.xlu0 %2039
        %2041 = vrot.lane.b32.xlu0 %v2024, 16
        %v2042 = vpop.permute.xlu0 %2041
        %2043 = vrot.lane.b32.xlu0 %v2025, 16
        %v2044 = vpop.permute.xlu0 %2043
        %2045 = vrot.lane.b32.xlu0 %v2026, 16
        %v2046 = vpop.permute.xlu0 %2045
        %2047 = vrot.lane.b32.xlu0 %v2027, 16
        %v2048 = vpop.permute.xlu0 %2047
        %2049 = vrot.lane.b32.xlu0 %v2028, 16
        %v2050 = vpop.permute.xlu0 %2049
        %2051 = vrot.lane.b32.xlu0 %v2029, 16
        %v2052 = vpop.permute.xlu0 %2051
        %2053 = vrot.lane.b32.xlu0 %v2030, 16
        %v2054 = vpop.permute.xlu0 %2053
        %v2063 = vmul.f32 %v1927, %v2040
        %v2064 = vmul.f32 %v1928, %v2042
        %v2065 = vmul.f32 %v1929, %v2044
        %v2066 = vmul.f32 %v1930, %v2046
        %v2067 = vmul.f32 %v1931, %v2048
        %v2068 = vmul.f32 %v1932, %v2050
        %v2069 = vmul.f32 %v1933, %v2052
        %v2070 = vmul.f32 %v1934, %v2054
        %v2071 = vsel %vm331, 1, 0
        %v2072 = vsel %vm332, 1, 0
        %v2073 = vsel %vm333, 1, 0
        %v2074 = vsel %vm334, 1, 0
        %v2075 = vsel %vm335, 1, 0
        %v2076 = vsel %vm336, 1, 0
        %v2077 = vsel %vm337, 1, 0
        %v2078 = vsel %vm338, 1, 0
        %2079 = vset.pattern.permute.xlu0 0
        %2080 = vperm.xlu0 %2079, %v2071
        %v2081 = vpop.permute.xlu0 %2080
        %2082 = vset.pattern.permute.xlu0 0
        %2083 = vperm.xlu0 %2082, %v2072
        %v2084 = vpop.permute.xlu0 %2083
        %2085 = vset.pattern.permute.xlu0 0
        %2086 = vperm.xlu0 %2085, %v2073
        %v2087 = vpop.permute.xlu0 %2086
        %2088 = vset.pattern.permute.xlu0 0
        %2089 = vperm.xlu0 %2088, %v2074
        %v2090 = vpop.permute.xlu0 %2089
        %2091 = vset.pattern.permute.xlu0 0
        %2092 = vperm.xlu0 %2091, %v2075
        %v2093 = vpop.permute.xlu0 %2092
        %2094 = vset.pattern.permute.xlu0 0
        %2095 = vperm.xlu0 %2094, %v2076
        %v2096 = vpop.permute.xlu0 %2095
        %2097 = vset.pattern.permute.xlu0 0
        %2098 = vperm.xlu0 %2097, %v2077
        %v2099 = vpop.permute.xlu0 %2098
        %2100 = vset.pattern.permute.xlu0 0
        %2101 = vperm.xlu0 %2100, %v2078
        %v2102 = vpop.permute.xlu0 %2101
        %vm2103 = vcmp.eq.s32.totalorder %v2081, 1
        %vm2104 = vcmp.eq.s32.totalorder %v2084, 1
        %vm2105 = vcmp.eq.s32.totalorder %v2087, 1
        %vm2106 = vcmp.eq.s32.totalorder %v2090, 1
        %vm2107 = vcmp.eq.s32.totalorder %v2093, 1
        %vm2108 = vcmp.eq.s32.totalorder %v2096, 1
        %vm2109 = vcmp.eq.s32.totalorder %v2099, 1
        %vm2110 = vcmp.eq.s32.totalorder %v2102, 1
        %v2111 = vsel %vm2103, %v2063, %v1678
        %v2112 = vsel %vm2104, %v2064, %v1679
        %v2113 = vsel %vm2105, %v2065, %v1680
        %v2114 = vsel %vm2106, %v2066, %v1681
        %v2115 = vsel %vm2107, %v2067, %v1682
        %v2116 = vsel %vm2108, %v2068, %v1683
        %v2117 = vsel %vm2109, %v2069, %v1684
        %v2118 = vsel %vm2110, %v2070, %v1685
        %v2119 = vsel %vm2103, %v2015, %v1686
        %v2120 = vsel %vm2104, %v2016, %v1687
        %v2121 = vsel %vm2105, %v2017, %v1688
        %v2122 = vsel %vm2106, %v2018, %v1689
        %v2123 = vsel %vm2107, %v2019, %v1690
        %v2124 = vsel %vm2108, %v2020, %v1691
        %v2125 = vsel %vm2109, %v2021, %v1692
        %v2126 = vsel %vm2110, %v2022, %v1693
        %2135 = vrot.lane.b32.xlu0 %v2111, 104
        %v2136 = vpop.permute.xlu0 %2135
        %2137 = vrot.lane.b32.xlu0 %v2112, 104
        %v2138 = vpop.permute.xlu0 %2137
        %2139 = vrot.lane.b32.xlu0 %v2113, 104
        %v2140 = vpop.permute.xlu0 %2139
        %2141 = vrot.lane.b32.xlu0 %v2114, 104
        %v2142 = vpop.permute.xlu0 %2141
        %2143 = vrot.lane.b32.xlu0 %v2115, 104
        %v2144 = vpop.permute.xlu0 %2143
        %2145 = vrot.lane.b32.xlu0 %v2116, 104
        %v2146 = vpop.permute.xlu0 %2145
        %2147 = vrot.lane.b32.xlu0 %v2117, 104
        %v2148 = vpop.permute.xlu0 %2147
        %2149 = vrot.lane.b32.xlu0 %v2118, 104
        %v2150 = vpop.permute.xlu0 %2149
        %v2151 = vsel %vm415, %v2136, 0
        %v2153 = vsel %vm415, %v2138, 0
        %v2155 = vsel %vm415, %v2140, 0
        %v2157 = vsel %vm415, %v2142, 0
        %v2159 = vsel %vm415, %v2144, 0
        %v2161 = vsel %vm415, %v2146, 0
        %v2163 = vsel %vm415, %v2148, 0
        %v2165 = vsel %vm415, %v2150, 0
        %2167 = vmatprep.subr.mxu0 0.0
        %2168 = vmatpush1.msra.mxu0 0.0
        %2169 = vmatprep.subr.mxu0 0.0
        %2170 = vmatpush1.msra.mxu0 0.0
        %2171 = vmatprep.subr.mxu0 0.0
        %2172 = vmatpush1.msra.mxu0 0.0
        %2173 = vmatprep.subr.mxu0 0.0
        %2174 = vmatpush1.msra.mxu0 0.0
        %2175 = vmatprep.subr.mxu0 0.0
        %2176 = vmatpush1.msra.mxu0 0.0
        %2177 = vmatprep.subr.mxu0 0.0
        %2178 = vmatpush1.msra.mxu0 0.0
        %2179 = vmatprep.subr.mxu0 0.0
        %2180 = vmatpush1.msra.mxu0 0.0
        %2181 = vmatprep.subr.mxu0 0.0
        %2182 = vmatpush1.msra.mxu0 0.0
        %2183 = vmatprep.subr.mxu0 0.0
        %2184 = vmatpush1.msra.mxu0 0.0
        %2185 = vmatprep.subr.mxu0 0.0
        %2186 = vmatpush1.msra.mxu0 0.0
        %2187 = vmatprep.subr.mxu0 0.0
        %2188 = vmatpush1.msra.mxu0 0.0
        %2189 = vmatprep.subr.mxu0 0.0
        %2190 = vmatpush1.msra.mxu0 0.0
        %2191 = vmatprep.subr.mxu0 0.0
        %2192 = vmatpush1.msra.mxu0 0.0
        %2193 = vmatprep.subr.mxu0 0.0
        %2194 = vmatpush1.msra.mxu0 0.0
        %2195 = vmatprep.subr.mxu0 0.0
        %2196 = vmatpush1.msra.mxu0 0.0
        %2197 = vmatprep.subr.mxu0 0.0
        %2198 = vmatpush1.msra.mxu0 %v244
        %2199 = vmatprep.subr.mxu0 0.0
        %2200 = vmatpush2.msra.mxu0 0.0
        %2201 = vmatprep.subr.mxu0 0.0
        %2202 = vmatpush2.msra.mxu0 0.0
        %2203 = vmatprep.subr.mxu0 0.0
        %2204 = vmatpush2.msra.mxu0 0.0
        %2205 = vmatprep.subr.mxu0 0.0
        %2206 = vmatpush2.msra.mxu0 0.0
        %2207 = vmatprep.subr.mxu0 0.0
        %2208 = vmatpush2.msra.mxu0 0.0
        %2209 = vmatprep.subr.mxu0 0.0
        %2210 = vmatpush2.msra.mxu0 0.0
        %2211 = vmatprep.subr.mxu0 0.0
        %2212 = vmatpush2.msra.mxu0 0.0
        %2213 = vmatprep.subr.mxu0 0.0
        %2214 = vmatpush2.msra.mxu0 0.0
        %2215 = vmatprep.subr.mxu0 0.0
        %2216 = vmatpush2.msra.mxu0 0.0
        %2217 = vmatprep.subr.mxu0 0.0
        %2218 = vmatpush2.msra.mxu0 0.0
        %2219 = vmatprep.subr.mxu0 0.0
        %2220 = vmatpush2.msra.mxu0 0.0
        %2221 = vmatprep.subr.mxu0 0.0
        %2222 = vmatpush2.msra.mxu0 0.0
        %2223 = vmatprep.subr.mxu0 0.0
        %2224 = vmatpush2.msra.mxu0 0.0
        %2225 = vmatprep.subr.mxu0 0.0
        %2226 = vmatpush2.msra.mxu0 0.0
        %2227 = vmatprep.subr.mxu0 0.0
        %2228 = vmatpush2.msra.mxu0 0.0
        %2229 = vmatprep.subr.mxu0 0.0
        %2230 = vmatpush2.msra.mxu0 0.0
        %2231 = vmatprep.mubr.f32.mxu0 0.0
        %2232 = vmatmul.mubr.f32.gmra.mxu0 %v2151
        %v2233 = vpop.f32.mrf.mxu0
        %v2234 = vadd.f32 0.0, %v2233
        %v2235 = vpop.f32.mrf.mxu0
        %2236 = vmatprep.mubr.f32.mxu0 0.0
        %2237 = vmatmul.mubr.f32.gmra.mxu0 %v2153
        %v2238 = vpop.f32.mrf.mxu0
        %v2239 = vadd.f32 0.0, %v2238
        %v2240 = vpop.f32.mrf.mxu0
        %2241 = vmatprep.mubr.f32.mxu0 0.0
        %2242 = vmatmul.mubr.f32.gmra.mxu0 %v2155
        %v2243 = vpop.f32.mrf.mxu0
        %v2244 = vadd.f32 0.0, %v2243
        %v2245 = vpop.f32.mrf.mxu0
        %2246 = vmatprep.mubr.f32.mxu0 0.0
        %2247 = vmatmul.mubr.f32.gmra.mxu0 %v2157
        %v2248 = vpop.f32.mrf.mxu0
        %v2249 = vadd.f32 0.0, %v2248
        %v2250 = vpop.f32.mrf.mxu0
        %2251 = vmatprep.mubr.f32.mxu0 0.0
        %2252 = vmatmul.mubr.f32.gmra.mxu0 %v2159
        %v2253 = vpop.f32.mrf.mxu0
        %v2254 = vadd.f32 0.0, %v2253
        %v2255 = vpop.f32.mrf.mxu0
        %2256 = vmatprep.mubr.f32.mxu0 0.0
        %2257 = vmatmul.mubr.f32.gmra.mxu0 %v2161
        %v2258 = vpop.f32.mrf.mxu0
        %v2259 = vadd.f32 0.0, %v2258
        %v2260 = vpop.f32.mrf.mxu0
        %2261 = vmatprep.mubr.f32.mxu0 0.0
        %2262 = vmatmul.mubr.f32.gmra.mxu0 %v2163
        %v2263 = vpop.f32.mrf.mxu0
        %v2264 = vadd.f32 0.0, %v2263
        %v2265 = vpop.f32.mrf.mxu0
        %2266 = vmatprep.mubr.f32.mxu0 0.0
        %2267 = vmatmul.mubr.f32.gmra.mxu0 %v2165
        %v2268 = vpop.f32.mrf.mxu0
        %v2269 = vadd.f32 0.0, %v2268
        %v2270 = vpop.f32.mrf.mxu0
        %2271 = vdwg.mxu0
        %v2272 = vadd.f32 %v747, %v2234
        %v2273 = vadd.f32 %v752, %v2239
        %v2274 = vadd.f32 %v757, %v2244
        %v2275 = vadd.f32 %v762, %v2249
        %v2276 = vadd.f32 %v767, %v2254
        %v2277 = vadd.f32 %v772, %v2259
        %v2278 = vadd.f32 %v777, %v2264
        %v2279 = vadd.f32 %v782, %v2269
        %v2280 = vadd.f32 %v2272, %v2272
        %v2281 = vadd.f32 %v2273, %v2273
        %v2282 = vadd.f32 %v2274, %v2274
        %v2283 = vadd.f32 %v2275, %v2275
        %v2284 = vadd.f32 %v2276, %v2276
        %v2285 = vadd.f32 %v2277, %v2277
        %v2286 = vadd.f32 %v2278, %v2278
        %v2287 = vadd.f32 %v2279, %v2279
        %v2288 = vsel %vm263, %v2280, %v2272
        %v2289 = vsel %vm263, %v2281, %v2273
        %v2290 = vsel %vm263, %v2282, %v2274
        %v2291 = vsel %vm263, %v2283, %v2275
        %v2292 = vsel %vm263, %v2284, %v2276
        %v2293 = vsel %vm263, %v2285, %v2277
        %v2294 = vsel %vm263, %v2286, %v2278
        %v2295 = vsel %vm263, %v2287, %v2279
        %v2296 = vxor.u32 %v2288, 2147483648
        %v2297 = vxor.u32 %v2289, 2147483648
        %v2298 = vxor.u32 %v2290, 2147483648
        %v2299 = vxor.u32 %v2291, 2147483648
        %v2300 = vxor.u32 %v2292, 2147483648
        %v2301 = vxor.u32 %v2293, 2147483648
        %v2302 = vxor.u32 %v2294, 2147483648
        %v2303 = vxor.u32 %v2295, 2147483648
        %v2304 = vmul.f32 %v2296, 1.442695
        %v2305 = vpow.pop %v2304
        %v2306 = vmul.f32 %v2297, 1.442695
        %v2307 = vpow.pop %v2306
        %v2308 = vmul.f32 %v2298, 1.442695
        %v2309 = vpow.pop %v2308
        %v2310 = vmul.f32 %v2299, 1.442695
        %v2311 = vpow.pop %v2310
        %v2312 = vmul.f32 %v2300, 1.442695
        %v2313 = vpow.pop %v2312
        %v2314 = vmul.f32 %v2301, 1.442695
        %v2315 = vpow.pop %v2314
        %v2316 = vmul.f32 %v2302, 1.442695
        %v2317 = vpow.pop %v2316
        %v2318 = vmul.f32 %v2303, 1.442695
        %v2319 = vpow.pop %v2318
        %v2320 = vadd.f32 %v2305, 1.0
        %v2321 = vadd.f32 %v2307, 1.0
        %v2322 = vadd.f32 %v2309, 1.0
        %v2323 = vadd.f32 %v2311, 1.0
        %v2324 = vadd.f32 %v2313, 1.0
        %v2325 = vadd.f32 %v2315, 1.0
        %v2326 = vadd.f32 %v2317, 1.0
        %v2327 = vadd.f32 %v2319, 1.0
        %v2328 = vrcp.pop %v2320
        %v2329 = vmul.f32 1.0, %v2328
        %v2330 = vrcp.pop %v2321
        %v2331 = vmul.f32 1.0, %v2330
        %v2332 = vrcp.pop %v2322
        %v2333 = vmul.f32 1.0, %v2332
        %v2334 = vrcp.pop %v2323
        %v2335 = vmul.f32 1.0, %v2334
        %v2336 = vrcp.pop %v2324
        %v2337 = vmul.f32 1.0, %v2336
        %v2338 = vrcp.pop %v2325
        %v2339 = vmul.f32 1.0, %v2338
        %v2340 = vrcp.pop %v2326
        %v2341 = vmul.f32 1.0, %v2340
        %v2342 = vrcp.pop %v2327
        %v2343 = vmul.f32 1.0, %v2342
        %v2344 = vadd.f32 %v2329, %v2329
        %v2345 = vadd.f32 %v2331, %v2331
        %v2346 = vadd.f32 %v2333, %v2333
        %v2347 = vadd.f32 %v2335, %v2335
        %v2348 = vadd.f32 %v2337, %v2337
        %v2349 = vadd.f32 %v2339, %v2339
        %v2350 = vadd.f32 %v2341, %v2341
        %v2351 = vadd.f32 %v2343, %v2343
        %v2352 = vsub.f32 %v2344, 1.0
        %v2353 = vsub.f32 %v2345, 1.0
        %v2354 = vsub.f32 %v2346, 1.0
        %v2355 = vsub.f32 %v2347, 1.0
        %v2356 = vsub.f32 %v2348, 1.0
        %v2357 = vsub.f32 %v2349, 1.0
        %v2358 = vsub.f32 %v2350, 1.0
        %v2359 = vsub.f32 %v2351, 1.0
        %v2360 = vsel %vm263, %v2352, %v2329
        %v2361 = vsel %vm263, %v2353, %v2331
        %v2362 = vsel %vm263, %v2354, %v2333
        %v2363 = vsel %vm263, %v2355, %v2335
        %v2364 = vsel %vm263, %v2356, %v2337
        %v2365 = vsel %vm263, %v2357, %v2339
        %v2366 = vsel %vm263, %v2358, %v2341
        %v2367 = vsel %vm263, %v2359, %v2343
        %v2368 = vmul.f32 %v2360, %v2119
        %v2369 = vmul.f32 %v2361, %v2120
        %v2370 = vmul.f32 %v2362, %v2121
        %v2371 = vmul.f32 %v2363, %v2122
        %v2372 = vmul.f32 %v2364, %v2123
        %v2373 = vmul.f32 %v2365, %v2124
        %v2374 = vmul.f32 %v2366, %v2125
        %v2375 = vmul.f32 %v2367, %v2126
        %2384 = vrot.lane.b32.xlu0 %v2360, 112
        %v2385 = vpop.permute.xlu0 %2384
        %2386 = vrot.lane.b32.xlu0 %v2361, 112
        %v2387 = vpop.permute.xlu0 %2386
        %2388 = vrot.lane.b32.xlu0 %v2362, 112
        %v2389 = vpop.permute.xlu0 %2388
        %2390 = vrot.lane.b32.xlu0 %v2363, 112
        %v2391 = vpop.permute.xlu0 %2390
        %2392 = vrot.lane.b32.xlu0 %v2364, 112
        %v2393 = vpop.permute.xlu0 %2392
        %2394 = vrot.lane.b32.xlu0 %v2365, 112
        %v2395 = vpop.permute.xlu0 %2394
        %2396 = vrot.lane.b32.xlu0 %v2366, 112
        %v2397 = vpop.permute.xlu0 %2396
        %2398 = vrot.lane.b32.xlu0 %v2367, 112
        %v2399 = vpop.permute.xlu0 %2398
        %v2408 = vmul.f32 %v2360, %v2385
        %v2409 = vmul.f32 %v2361, %v2387
        %v2410 = vmul.f32 %v2362, %v2389
        %v2411 = vmul.f32 %v2363, %v2391
        %v2412 = vmul.f32 %v2364, %v2393
        %v2413 = vmul.f32 %v2365, %v2395
        %v2414 = vmul.f32 %v2366, %v2397
        %v2415 = vmul.f32 %v2367, %v2399
        %2424 = vrot.lane.b32.xlu0 %v2408, 8
        %v2425 = vpop.permute.xlu0 %2424
        %2426 = vrot.lane.b32.xlu0 %v2409, 8
        %v2427 = vpop.permute.xlu0 %2426
        %2428 = vrot.lane.b32.xlu0 %v2410, 8
        %v2429 = vpop.permute.xlu0 %2428
        %2430 = vrot.lane.b32.xlu0 %v2411, 8
        %v2431 = vpop.permute.xlu0 %2430
        %2432 = vrot.lane.b32.xlu0 %v2412, 8
        %v2433 = vpop.permute.xlu0 %2432
        %2434 = vrot.lane.b32.xlu0 %v2413, 8
        %v2435 = vpop.permute.xlu0 %2434
        %2436 = vrot.lane.b32.xlu0 %v2414, 8
        %v2437 = vpop.permute.xlu0 %2436
        %2438 = vrot.lane.b32.xlu0 %v2415, 8
        %v2439 = vpop.permute.xlu0 %2438
        %v2448 = vadd.f32 %v2368, %v2425
        %v2449 = vadd.f32 %v2369, %v2427
        %v2450 = vadd.f32 %v2370, %v2429
        %v2451 = vadd.f32 %v2371, %v2431
        %v2452 = vadd.f32 %v2372, %v2433
        %v2453 = vadd.f32 %v2373, %v2435
        %v2454 = vadd.f32 %v2374, %v2437
        %v2455 = vadd.f32 %v2375, %v2439
        %v2456 = vtanh.pop %v2448
        %v2457 = vtanh.pop %v2449
        %v2458 = vtanh.pop %v2450
        %v2459 = vtanh.pop %v2451
        %v2460 = vtanh.pop %v2452
        %v2461 = vtanh.pop %v2453
        %v2462 = vtanh.pop %v2454
        %v2463 = vtanh.pop %v2455
        %2472 = vrot.lane.b32.xlu0 %v2456, 16
        %v2473 = vpop.permute.xlu0 %2472
        %2474 = vrot.lane.b32.xlu0 %v2457, 16
        %v2475 = vpop.permute.xlu0 %2474
        %2476 = vrot.lane.b32.xlu0 %v2458, 16
        %v2477 = vpop.permute.xlu0 %2476
        %2478 = vrot.lane.b32.xlu0 %v2459, 16
        %v2479 = vpop.permute.xlu0 %2478
        %2480 = vrot.lane.b32.xlu0 %v2460, 16
        %v2481 = vpop.permute.xlu0 %2480
        %2482 = vrot.lane.b32.xlu0 %v2461, 16
        %v2483 = vpop.permute.xlu0 %2482
        %2484 = vrot.lane.b32.xlu0 %v2462, 16
        %v2485 = vpop.permute.xlu0 %2484
        %2486 = vrot.lane.b32.xlu0 %v2463, 16
        %v2487 = vpop.permute.xlu0 %2486
        %v2496 = vmul.f32 %v2360, %v2473
        %v2497 = vmul.f32 %v2361, %v2475
        %v2498 = vmul.f32 %v2362, %v2477
        %v2499 = vmul.f32 %v2363, %v2479
        %v2500 = vmul.f32 %v2364, %v2481
        %v2501 = vmul.f32 %v2365, %v2483
        %v2502 = vmul.f32 %v2366, %v2485
        %v2503 = vmul.f32 %v2367, %v2487
        %v2504 = vsel %vm339, 1, 0
        %v2505 = vsel %vm340, 1, 0
        %v2506 = vsel %vm341, 1, 0
        %v2507 = vsel %vm342, 1, 0
        %v2508 = vsel %vm343, 1, 0
        %v2509 = vsel %vm344, 1, 0
        %v2510 = vsel %vm345, 1, 0
        %v2511 = vsel %vm346, 1, 0
        %2512 = vset.pattern.permute.xlu0 0
        %2513 = vperm.xlu0 %2512, %v2504
        %v2514 = vpop.permute.xlu0 %2513
        %2515 = vset.pattern.permute.xlu0 0
        %2516 = vperm.xlu0 %2515, %v2505
        %v2517 = vpop.permute.xlu0 %2516
        %2518 = vset.pattern.permute.xlu0 0
        %2519 = vperm.xlu0 %2518, %v2506
        %v2520 = vpop.permute.xlu0 %2519
        %2521 = vset.pattern.permute.xlu0 0
        %2522 = vperm.xlu0 %2521, %v2507
        %v2523 = vpop.permute.xlu0 %2522
        %2524 = vset.pattern.permute.xlu0 0
        %2525 = vperm.xlu0 %2524, %v2508
        %v2526 = vpop.permute.xlu0 %2525
        %2527 = vset.pattern.permute.xlu0 0
        %2528 = vperm.xlu0 %2527, %v2509
        %v2529 = vpop.permute.xlu0 %2528
        %2530 = vset.pattern.permute.xlu0 0
        %2531 = vperm.xlu0 %2530, %v2510
        %v2532 = vpop.permute.xlu0 %2531
        %2533 = vset.pattern.permute.xlu0 0
        %2534 = vperm.xlu0 %2533, %v2511
        %v2535 = vpop.permute.xlu0 %2534
        %vm2536 = vcmp.eq.s32.totalorder %v2514, 1
        %vm2537 = vcmp.eq.s32.totalorder %v2517, 1
        %vm2538 = vcmp.eq.s32.totalorder %v2520, 1
        %vm2539 = vcmp.eq.s32.totalorder %v2523, 1
        %vm2540 = vcmp.eq.s32.totalorder %v2526, 1
        %vm2541 = vcmp.eq.s32.totalorder %v2529, 1
        %vm2542 = vcmp.eq.s32.totalorder %v2532, 1
        %vm2543 = vcmp.eq.s32.totalorder %v2535, 1
        %v2544 = vsel %vm2536, %v2496, %v2111
        %v2545 = vsel %vm2537, %v2497, %v2112
        %v2546 = vsel %vm2538, %v2498, %v2113
        %v2547 = vsel %vm2539, %v2499, %v2114
        %v2548 = vsel %vm2540, %v2500, %v2115
        %v2549 = vsel %vm2541, %v2501, %v2116
        %v2550 = vsel %vm2542, %v2502, %v2117
        %v2551 = vsel %vm2543, %v2503, %v2118
        %v2552 = vsel %vm2536, %v2448, %v2119
        %v2553 = vsel %vm2537, %v2449, %v2120
        %v2554 = vsel %vm2538, %v2450, %v2121
        %v2555 = vsel %vm2539, %v2451, %v2122
        %v2556 = vsel %vm2540, %v2452, %v2123
        %v2557 = vsel %vm2541, %v2453, %v2124
        %v2558 = vsel %vm2542, %v2454, %v2125
        %v2559 = vsel %vm2543, %v2455, %v2126
        %2568 = vrot.lane.b32.xlu0 %v2544, 104
        %v2569 = vpop.permute.xlu0 %2568
        %2570 = vrot.lane.b32.xlu0 %v2545, 104
        %v2571 = vpop.permute.xlu0 %2570
        %2572 = vrot.lane.b32.xlu0 %v2546, 104
        %v2573 = vpop.permute.xlu0 %2572
        %2574 = vrot.lane.b32.xlu0 %v2547, 104
        %v2575 = vpop.permute.xlu0 %2574
        %2576 = vrot.lane.b32.xlu0 %v2548, 104
        %v2577 = vpop.permute.xlu0 %2576
        %2578 = vrot.lane.b32.xlu0 %v2549, 104
        %v2579 = vpop.permute.xlu0 %2578
        %2580 = vrot.lane.b32.xlu0 %v2550, 104
        %v2581 = vpop.permute.xlu0 %2580
        %2582 = vrot.lane.b32.xlu0 %v2551, 104
        %v2583 = vpop.permute.xlu0 %2582
        %v2584 = vsel %vm415, %v2569, 0
        %v2586 = vsel %vm415, %v2571, 0
        %v2588 = vsel %vm415, %v2573, 0
        %v2590 = vsel %vm415, %v2575, 0
        %v2592 = vsel %vm415, %v2577, 0
        %v2594 = vsel %vm415, %v2579, 0
        %v2596 = vsel %vm415, %v2581, 0
        %v2598 = vsel %vm415, %v2583, 0
        %2600 = vmatprep.subr.mxu0 0.0
        %2601 = vmatpush1.msra.mxu0 0.0
        %2602 = vmatprep.subr.mxu0 0.0
        %2603 = vmatpush1.msra.mxu0 0.0
        %2604 = vmatprep.subr.mxu0 0.0
        %2605 = vmatpush1.msra.mxu0 0.0
        %2606 = vmatprep.subr.mxu0 0.0
        %2607 = vmatpush1.msra.mxu0 0.0
        %2608 = vmatprep.subr.mxu0 0.0
        %2609 = vmatpush1.msra.mxu0 0.0
        %2610 = vmatprep.subr.mxu0 0.0
        %2611 = vmatpush1.msra.mxu0 0.0
        %2612 = vmatprep.subr.mxu0 0.0
        %2613 = vmatpush1.msra.mxu0 0.0
        %2614 = vmatprep.subr.mxu0 0.0
        %2615 = vmatpush1.msra.mxu0 0.0
        %2616 = vmatprep.subr.mxu0 0.0
        %2617 = vmatpush1.msra.mxu0 0.0
        %2618 = vmatprep.subr.mxu0 0.0
        %2619 = vmatpush1.msra.mxu0 0.0
        %2620 = vmatprep.subr.mxu0 0.0
        %2621 = vmatpush1.msra.mxu0 0.0
        %2622 = vmatprep.subr.mxu0 0.0
        %2623 = vmatpush1.msra.mxu0 0.0
        %2624 = vmatprep.subr.mxu0 0.0
        %2625 = vmatpush1.msra.mxu0 0.0
        %2626 = vmatprep.subr.mxu0 0.0
        %2627 = vmatpush1.msra.mxu0 0.0
        %2628 = vmatprep.subr.mxu0 0.0
        %2629 = vmatpush1.msra.mxu0 0.0
        %2630 = vmatprep.subr.mxu0 0.0
        %2631 = vmatpush1.msra.mxu0 %v244
        %2632 = vmatprep.subr.mxu0 0.0
        %2633 = vmatpush2.msra.mxu0 0.0
        %2634 = vmatprep.subr.mxu0 0.0
        %2635 = vmatpush2.msra.mxu0 0.0
        %2636 = vmatprep.subr.mxu0 0.0
        %2637 = vmatpush2.msra.mxu0 0.0
        %2638 = vmatprep.subr.mxu0 0.0
        %2639 = vmatpush2.msra.mxu0 0.0
        %2640 = vmatprep.subr.mxu0 0.0
        %2641 = vmatpush2.msra.mxu0 0.0
        %2642 = vmatprep.subr.mxu0 0.0
        %2643 = vmatpush2.msra.mxu0 0.0
        %2644 = vmatprep.subr.mxu0 0.0
        %2645 = vmatpush2.msra.mxu0 0.0
        %2646 = vmatprep.subr.mxu0 0.0
        %2647 = vmatpush2.msra.mxu0 0.0
        %2648 = vmatprep.subr.mxu0 0.0
        %2649 = vmatpush2.msra.mxu0 0.0
        %2650 = vmatprep.subr.mxu0 0.0
        %2651 = vmatpush2.msra.mxu0 0.0
        %2652 = vmatprep.subr.mxu0 0.0
        %2653 = vmatpush2.msra.mxu0 0.0
        %2654 = vmatprep.subr.mxu0 0.0
        %2655 = vmatpush2.msra.mxu0 0.0
        %2656 = vmatprep.subr.mxu0 0.0
        %2657 = vmatpush2.msra.mxu0 0.0
        %2658 = vmatprep.subr.mxu0 0.0
        %2659 = vmatpush2.msra.mxu0 0.0
        %2660 = vmatprep.subr.mxu0 0.0
        %2661 = vmatpush2.msra.mxu0 0.0
        %2662 = vmatprep.subr.mxu0 0.0
        %2663 = vmatpush2.msra.mxu0 0.0
        %2664 = vmatprep.mubr.f32.mxu0 0.0
        %2665 = vmatmul.mubr.f32.gmra.mxu0 %v2584
        %v2666 = vpop.f32.mrf.mxu0
        %v2667 = vadd.f32 0.0, %v2666
        %v2668 = vpop.f32.mrf.mxu0
        %2669 = vmatprep.mubr.f32.mxu0 0.0
        %2670 = vmatmul.mubr.f32.gmra.mxu0 %v2586
        %v2671 = vpop.f32.mrf.mxu0
        %v2672 = vadd.f32 0.0, %v2671
        %v2673 = vpop.f32.mrf.mxu0
        %2674 = vmatprep.mubr.f32.mxu0 0.0
        %2675 = vmatmul.mubr.f32.gmra.mxu0 %v2588
        %v2676 = vpop.f32.mrf.mxu0
        %v2677 = vadd.f32 0.0, %v2676
        %v2678 = vpop.f32.mrf.mxu0
        %2679 = vmatprep.mubr.f32.mxu0 0.0
        %2680 = vmatmul.mubr.f32.gmra.mxu0 %v2590
        %v2681 = vpop.f32.mrf.mxu0
        %v2682 = vadd.f32 0.0, %v2681
        %v2683 = vpop.f32.mrf.mxu0
        %2684 = vmatprep.mubr.f32.mxu0 0.0
        %2685 = vmatmul.mubr.f32.gmra.mxu0 %v2592
        %v2686 = vpop.f32.mrf.mxu0
        %v2687 = vadd.f32 0.0, %v2686
        %v2688 = vpop.f32.mrf.mxu0
        %2689 = vmatprep.mubr.f32.mxu0 0.0
        %2690 = vmatmul.mubr.f32.gmra.mxu0 %v2594
        %v2691 = vpop.f32.mrf.mxu0
        %v2692 = vadd.f32 0.0, %v2691
        %v2693 = vpop.f32.mrf.mxu0
        %2694 = vmatprep.mubr.f32.mxu0 0.0
        %2695 = vmatmul.mubr.f32.gmra.mxu0 %v2596
        %v2696 = vpop.f32.mrf.mxu0
        %v2697 = vadd.f32 0.0, %v2696
        %v2698 = vpop.f32.mrf.mxu0
        %2699 = vmatprep.mubr.f32.mxu0 0.0
        %2700 = vmatmul.mubr.f32.gmra.mxu0 %v2598
        %v2701 = vpop.f32.mrf.mxu0
        %v2702 = vadd.f32 0.0, %v2701
        %v2703 = vpop.f32.mrf.mxu0
        %2704 = vdwg.mxu0
        %v2705 = vadd.f32 %v787, %v2667
        %v2706 = vadd.f32 %v792, %v2672
        %v2707 = vadd.f32 %v797, %v2677
        %v2708 = vadd.f32 %v802, %v2682
        %v2709 = vadd.f32 %v807, %v2687
        %v2710 = vadd.f32 %v812, %v2692
        %v2711 = vadd.f32 %v817, %v2697
        %v2712 = vadd.f32 %v822, %v2702
        %v2713 = vadd.f32 %v2705, %v2705
        %v2714 = vadd.f32 %v2706, %v2706
        %v2715 = vadd.f32 %v2707, %v2707
        %v2716 = vadd.f32 %v2708, %v2708
        %v2717 = vadd.f32 %v2709, %v2709
        %v2718 = vadd.f32 %v2710, %v2710
        %v2719 = vadd.f32 %v2711, %v2711
        %v2720 = vadd.f32 %v2712, %v2712
        %v2721 = vsel %vm263, %v2713, %v2705
        %v2722 = vsel %vm263, %v2714, %v2706
        %v2723 = vsel %vm263, %v2715, %v2707
        %v2724 = vsel %vm263, %v2716, %v2708
        %v2725 = vsel %vm263, %v2717, %v2709
        %v2726 = vsel %vm263, %v2718, %v2710
        %v2727 = vsel %vm263, %v2719, %v2711
        %v2728 = vsel %vm263, %v2720, %v2712
        %v2729 = vxor.u32 %v2721, 2147483648
        %v2730 = vxor.u32 %v2722, 2147483648
        %v2731 = vxor.u32 %v2723, 2147483648
        %v2732 = vxor.u32 %v2724, 2147483648
        %v2733 = vxor.u32 %v2725, 2147483648
        %v2734 = vxor.u32 %v2726, 2147483648
        %v2735 = vxor.u32 %v2727, 2147483648
        %v2736 = vxor.u32 %v2728, 2147483648
        %v2737 = vmul.f32 %v2729, 1.442695
        %v2738 = vpow.pop %v2737
        %v2739 = vmul.f32 %v2730, 1.442695
        %v2740 = vpow.pop %v2739
        %v2741 = vmul.f32 %v2731, 1.442695
        %v2742 = vpow.pop %v2741
        %v2743 = vmul.f32 %v2732, 1.442695
        %v2744 = vpow.pop %v2743
        %v2745 = vmul.f32 %v2733, 1.442695
        %v2746 = vpow.pop %v2745
        %v2747 = vmul.f32 %v2734, 1.442695
        %v2748 = vpow.pop %v2747
        %v2749 = vmul.f32 %v2735, 1.442695
        %v2750 = vpow.pop %v2749
        %v2751 = vmul.f32 %v2736, 1.442695
        %v2752 = vpow.pop %v2751
        %v2753 = vadd.f32 %v2738, 1.0
        %v2754 = vadd.f32 %v2740, 1.0
        %v2755 = vadd.f32 %v2742, 1.0
        %v2756 = vadd.f32 %v2744, 1.0
        %v2757 = vadd.f32 %v2746, 1.0
        %v2758 = vadd.f32 %v2748, 1.0
        %v2759 = vadd.f32 %v2750, 1.0
        %v2760 = vadd.f32 %v2752, 1.0
        %v2761 = vrcp.pop %v2753
        %v2762 = vmul.f32 1.0, %v2761
        %v2763 = vrcp.pop %v2754
        %v2764 = vmul.f32 1.0, %v2763
        %v2765 = vrcp.pop %v2755
        %v2766 = vmul.f32 1.0, %v2765
        %v2767 = vrcp.pop %v2756
        %v2768 = vmul.f32 1.0, %v2767
        %v2769 = vrcp.pop %v2757
        %v2770 = vmul.f32 1.0, %v2769
        %v2771 = vrcp.pop %v2758
        %v2772 = vmul.f32 1.0, %v2771
        %v2773 = vrcp.pop %v2759
        %v2774 = vmul.f32 1.0, %v2773
        %v2775 = vrcp.pop %v2760
        %v2776 = vmul.f32 1.0, %v2775
        %v2777 = vadd.f32 %v2762, %v2762
        %v2778 = vadd.f32 %v2764, %v2764
        %v2779 = vadd.f32 %v2766, %v2766
        %v2780 = vadd.f32 %v2768, %v2768
        %v2781 = vadd.f32 %v2770, %v2770
        %v2782 = vadd.f32 %v2772, %v2772
        %v2783 = vadd.f32 %v2774, %v2774
        %v2784 = vadd.f32 %v2776, %v2776
        %v2785 = vsub.f32 %v2777, 1.0
        %v2786 = vsub.f32 %v2778, 1.0
        %v2787 = vsub.f32 %v2779, 1.0
        %v2788 = vsub.f32 %v2780, 1.0
        %v2789 = vsub.f32 %v2781, 1.0
        %v2790 = vsub.f32 %v2782, 1.0
        %v2791 = vsub.f32 %v2783, 1.0
        %v2792 = vsub.f32 %v2784, 1.0
        %v2793 = vsel %vm263, %v2785, %v2762
        %v2794 = vsel %vm263, %v2786, %v2764
        %v2795 = vsel %vm263, %v2787, %v2766
        %v2796 = vsel %vm263, %v2788, %v2768
        %v2797 = vsel %vm263, %v2789, %v2770
        %v2798 = vsel %vm263, %v2790, %v2772
        %v2799 = vsel %vm263, %v2791, %v2774
        %v2800 = vsel %vm263, %v2792, %v2776
        %v2801 = vmul.f32 %v2793, %v2552
        %v2802 = vmul.f32 %v2794, %v2553
        %v2803 = vmul.f32 %v2795, %v2554
        %v2804 = vmul.f32 %v2796, %v2555
        %v2805 = vmul.f32 %v2797, %v2556
        %v2806 = vmul.f32 %v2798, %v2557
        %v2807 = vmul.f32 %v2799, %v2558
        %v2808 = vmul.f32 %v2800, %v2559
        %2817 = vrot.lane.b32.xlu0 %v2793, 112
        %v2818 = vpop.permute.xlu0 %2817
        %2819 = vrot.lane.b32.xlu0 %v2794, 112
        %v2820 = vpop.permute.xlu0 %2819
        %2821 = vrot.lane.b32.xlu0 %v2795, 112
        %v2822 = vpop.permute.xlu0 %2821
        %2823 = vrot.lane.b32.xlu0 %v2796, 112
        %v2824 = vpop.permute.xlu0 %2823
        %2825 = vrot.lane.b32.xlu0 %v2797, 112
        %v2826 = vpop.permute.xlu0 %2825
        %2827 = vrot.lane.b32.xlu0 %v2798, 112
        %v2828 = vpop.permute.xlu0 %2827
        %2829 = vrot.lane.b32.xlu0 %v2799, 112
        %v2830 = vpop.permute.xlu0 %2829
        %2831 = vrot.lane.b32.xlu0 %v2800, 112
        %v2832 = vpop.permute.xlu0 %2831
        %v2841 = vmul.f32 %v2793, %v2818
        %v2842 = vmul.f32 %v2794, %v2820
        %v2843 = vmul.f32 %v2795, %v2822
        %v2844 = vmul.f32 %v2796, %v2824
        %v2845 = vmul.f32 %v2797, %v2826
        %v2846 = vmul.f32 %v2798, %v2828
        %v2847 = vmul.f32 %v2799, %v2830
        %v2848 = vmul.f32 %v2800, %v2832
        %2857 = vrot.lane.b32.xlu0 %v2841, 8
        %v2858 = vpop.permute.xlu0 %2857
        %2859 = vrot.lane.b32.xlu0 %v2842, 8
        %v2860 = vpop.permute.xlu0 %2859
        %2861 = vrot.lane.b32.xlu0 %v2843, 8
        %v2862 = vpop.permute.xlu0 %2861
        %2863 = vrot.lane.b32.xlu0 %v2844, 8
        %v2864 = vpop.permute.xlu0 %2863
        %2865 = vrot.lane.b32.xlu0 %v2845, 8
        %v2866 = vpop.permute.xlu0 %2865
        %2867 = vrot.lane.b32.xlu0 %v2846, 8
        %v2868 = vpop.permute.xlu0 %2867
        %2869 = vrot.lane.b32.xlu0 %v2847, 8
        %v2870 = vpop.permute.xlu0 %2869
        %2871 = vrot.lane.b32.xlu0 %v2848, 8
        %v2872 = vpop.permute.xlu0 %2871
        %v2881 = vadd.f32 %v2801, %v2858
        %v2882 = vadd.f32 %v2802, %v2860
        %v2883 = vadd.f32 %v2803, %v2862
        %v2884 = vadd.f32 %v2804, %v2864
        %v2885 = vadd.f32 %v2805, %v2866
        %v2886 = vadd.f32 %v2806, %v2868
        %v2887 = vadd.f32 %v2807, %v2870
        %v2888 = vadd.f32 %v2808, %v2872
        %v2889 = vtanh.pop %v2881
        %v2890 = vtanh.pop %v2882
        %v2891 = vtanh.pop %v2883
        %v2892 = vtanh.pop %v2884
        %v2893 = vtanh.pop %v2885
        %v2894 = vtanh.pop %v2886
        %v2895 = vtanh.pop %v2887
        %v2896 = vtanh.pop %v2888
        %2905 = vrot.lane.b32.xlu0 %v2889, 16
        %v2906 = vpop.permute.xlu0 %2905
        %2907 = vrot.lane.b32.xlu0 %v2890, 16
        %v2908 = vpop.permute.xlu0 %2907
        %2909 = vrot.lane.b32.xlu0 %v2891, 16
        %v2910 = vpop.permute.xlu0 %2909
        %2911 = vrot.lane.b32.xlu0 %v2892, 16
        %v2912 = vpop.permute.xlu0 %2911
        %2913 = vrot.lane.b32.xlu0 %v2893, 16
        %v2914 = vpop.permute.xlu0 %2913
        %2915 = vrot.lane.b32.xlu0 %v2894, 16
        %v2916 = vpop.permute.xlu0 %2915
        %2917 = vrot.lane.b32.xlu0 %v2895, 16
        %v2918 = vpop.permute.xlu0 %2917
        %2919 = vrot.lane.b32.xlu0 %v2896, 16
        %v2920 = vpop.permute.xlu0 %2919
        %v2929 = vmul.f32 %v2793, %v2906
        %v2930 = vmul.f32 %v2794, %v2908
        %v2931 = vmul.f32 %v2795, %v2910
        %v2932 = vmul.f32 %v2796, %v2912
        %v2933 = vmul.f32 %v2797, %v2914
        %v2934 = vmul.f32 %v2798, %v2916
        %v2935 = vmul.f32 %v2799, %v2918
        %v2936 = vmul.f32 %v2800, %v2920
        %v2937 = vsel %vm347, 1, 0
        %v2938 = vsel %vm348, 1, 0
        %v2939 = vsel %vm349, 1, 0
        %v2940 = vsel %vm350, 1, 0
        %v2941 = vsel %vm351, 1, 0
        %v2942 = vsel %vm352, 1, 0
        %v2943 = vsel %vm353, 1, 0
        %v2944 = vsel %vm354, 1, 0
        %2945 = vset.pattern.permute.xlu0 0
        %2946 = vperm.xlu0 %2945, %v2937
        %v2947 = vpop.permute.xlu0 %2946
        %2948 = vset.pattern.permute.xlu0 0
        %2949 = vperm.xlu0 %2948, %v2938
        %v2950 = vpop.permute.xlu0 %2949
        %2951 = vset.pattern.permute.xlu0 0
        %2952 = vperm.xlu0 %2951, %v2939
        %v2953 = vpop.permute.xlu0 %2952
        %2954 = vset.pattern.permute.xlu0 0
        %2955 = vperm.xlu0 %2954, %v2940
        %v2956 = vpop.permute.xlu0 %2955
        %2957 = vset.pattern.permute.xlu0 0
        %2958 = vperm.xlu0 %2957, %v2941
        %v2959 = vpop.permute.xlu0 %2958
        %2960 = vset.pattern.permute.xlu0 0
        %2961 = vperm.xlu0 %2960, %v2942
        %v2962 = vpop.permute.xlu0 %2961
        %2963 = vset.pattern.permute.xlu0 0
        %2964 = vperm.xlu0 %2963, %v2943
        %v2965 = vpop.permute.xlu0 %2964
        %2966 = vset.pattern.permute.xlu0 0
        %2967 = vperm.xlu0 %2966, %v2944
        %v2968 = vpop.permute.xlu0 %2967
        %vm2969 = vcmp.eq.s32.totalorder %v2947, 1
        %vm2970 = vcmp.eq.s32.totalorder %v2950, 1
        %vm2971 = vcmp.eq.s32.totalorder %v2953, 1
        %vm2972 = vcmp.eq.s32.totalorder %v2956, 1
        %vm2973 = vcmp.eq.s32.totalorder %v2959, 1
        %vm2974 = vcmp.eq.s32.totalorder %v2962, 1
        %vm2975 = vcmp.eq.s32.totalorder %v2965, 1
        %vm2976 = vcmp.eq.s32.totalorder %v2968, 1
        %v2977 = vsel %vm2969, %v2929, %v2544
        %v2978 = vsel %vm2970, %v2930, %v2545
        %v2979 = vsel %vm2971, %v2931, %v2546
        %v2980 = vsel %vm2972, %v2932, %v2547
        %v2981 = vsel %vm2973, %v2933, %v2548
        %v2982 = vsel %vm2974, %v2934, %v2549
        %v2983 = vsel %vm2975, %v2935, %v2550
        %v2984 = vsel %vm2976, %v2936, %v2551
        %v2985 = vsel %vm2969, %v2881, %v2552
        %v2986 = vsel %vm2970, %v2882, %v2553
        %v2987 = vsel %vm2971, %v2883, %v2554
        %v2988 = vsel %vm2972, %v2884, %v2555
        %v2989 = vsel %vm2973, %v2885, %v2556
        %v2990 = vsel %vm2974, %v2886, %v2557
        %v2991 = vsel %vm2975, %v2887, %v2558
        %v2992 = vsel %vm2976, %v2888, %v2559
        %3001 = vrot.lane.b32.xlu0 %v2977, 104
        %v3002 = vpop.permute.xlu0 %3001
        %3003 = vrot.lane.b32.xlu0 %v2978, 104
        %v3004 = vpop.permute.xlu0 %3003
        %3005 = vrot.lane.b32.xlu0 %v2979, 104
        %v3006 = vpop.permute.xlu0 %3005
        %3007 = vrot.lane.b32.xlu0 %v2980, 104
        %v3008 = vpop.permute.xlu0 %3007
        %3009 = vrot.lane.b32.xlu0 %v2981, 104
        %v3010 = vpop.permute.xlu0 %3009
        %3011 = vrot.lane.b32.xlu0 %v2982, 104
        %v3012 = vpop.permute.xlu0 %3011
        %3013 = vrot.lane.b32.xlu0 %v2983, 104
        %v3014 = vpop.permute.xlu0 %3013
        %3015 = vrot.lane.b32.xlu0 %v2984, 104
        %v3016 = vpop.permute.xlu0 %3015
        %v3017 = vsel %vm415, %v3002, 0
        %v3019 = vsel %vm415, %v3004, 0
        %v3021 = vsel %vm415, %v3006, 0
        %v3023 = vsel %vm415, %v3008, 0
        %v3025 = vsel %vm415, %v3010, 0
        %v3027 = vsel %vm415, %v3012, 0
        %v3029 = vsel %vm415, %v3014, 0
        %v3031 = vsel %vm415, %v3016, 0
        %3033 = vmatprep.subr.mxu0 0.0
        %3034 = vmatpush1.msra.mxu0 0.0
        %3035 = vmatprep.subr.mxu0 0.0
        %3036 = vmatpush1.msra.mxu0 0.0
        %3037 = vmatprep.subr.mxu0 0.0
        %3038 = vmatpush1.msra.mxu0 0.0
        %3039 = vmatprep.subr.mxu0 0.0
        %3040 = vmatpush1.msra.mxu0 0.0
        %3041 = vmatprep.subr.mxu0 0.0
        %3042 = vmatpush1.msra.mxu0 0.0
        %3043 = vmatprep.subr.mxu0 0.0
        %3044 = vmatpush1.msra.mxu0 0.0
        %3045 = vmatprep.subr.mxu0 0.0
        %3046 = vmatpush1.msra.mxu0 0.0
        %3047 = vmatprep.subr.mxu0 0.0
        %3048 = vmatpush1.msra.mxu0 0.0
        %3049 = vmatprep.subr.mxu0 0.0
        %3050 = vmatpush1.msra.mxu0 0.0
        %3051 = vmatprep.subr.mxu0 0.0
        %3052 = vmatpush1.msra.mxu0 0.0
        %3053 = vmatprep.subr.mxu0 0.0
        %3054 = vmatpush1.msra.mxu0 0.0
        %3055 = vmatprep.subr.mxu0 0.0
        %3056 = vmatpush1.msra.mxu0 0.0
        %3057 = vmatprep.subr.mxu0 0.0
        %3058 = vmatpush1.msra.mxu0 0.0
        %3059 = vmatprep.subr.mxu0 0.0
        %3060 = vmatpush1.msra.mxu0 0.0
        %3061 = vmatprep.subr.mxu0 0.0
        %3062 = vmatpush1.msra.mxu0 0.0
        %3063 = vmatprep.subr.mxu0 0.0
        %3064 = vmatpush1.msra.mxu0 %v244
        %3065 = vmatprep.subr.mxu0 0.0
        %3066 = vmatpush2.msra.mxu0 0.0
        %3067 = vmatprep.subr.mxu0 0.0
        %3068 = vmatpush2.msra.mxu0 0.0
        %3069 = vmatprep.subr.mxu0 0.0
        %3070 = vmatpush2.msra.mxu0 0.0
        %3071 = vmatprep.subr.mxu0 0.0
        %3072 = vmatpush2.msra.mxu0 0.0
        %3073 = vmatprep.subr.mxu0 0.0
        %3074 = vmatpush2.msra.mxu0 0.0
        %3075 = vmatprep.subr.mxu0 0.0
        %3076 = vmatpush2.msra.mxu0 0.0
        %3077 = vmatprep.subr.mxu0 0.0
        %3078 = vmatpush2.msra.mxu0 0.0
        %3079 = vmatprep.subr.mxu0 0.0
        %3080 = vmatpush2.msra.mxu0 0.0
        %3081 = vmatprep.subr.mxu0 0.0
        %3082 = vmatpush2.msra.mxu0 0.0
        %3083 = vmatprep.subr.mxu0 0.0
        %3084 = vmatpush2.msra.mxu0 0.0
        %3085 = vmatprep.subr.mxu0 0.0
        %3086 = vmatpush2.msra.mxu0 0.0
        %3087 = vmatprep.subr.mxu0 0.0
        %3088 = vmatpush2.msra.mxu0 0.0
        %3089 = vmatprep.subr.mxu0 0.0
        %3090 = vmatpush2.msra.mxu0 0.0
        %3091 = vmatprep.subr.mxu0 0.0
        %3092 = vmatpush2.msra.mxu0 0.0
        %3093 = vmatprep.subr.mxu0 0.0
        %3094 = vmatpush2.msra.mxu0 0.0
        %3095 = vmatprep.subr.mxu0 0.0
        %3096 = vmatpush2.msra.mxu0 0.0
        %3097 = vmatprep.mubr.f32.mxu0 0.0
        %3098 = vmatmul.mubr.f32.gmra.mxu0 %v3017
        %v3099 = vpop.f32.mrf.mxu0
        %v3100 = vadd.f32 0.0, %v3099
        %v3101 = vpop.f32.mrf.mxu0
        %3102 = vmatprep.mubr.f32.mxu0 0.0
        %3103 = vmatmul.mubr.f32.gmra.mxu0 %v3019
        %v3104 = vpop.f32.mrf.mxu0
        %v3105 = vadd.f32 0.0, %v3104
        %v3106 = vpop.f32.mrf.mxu0
        %3107 = vmatprep.mubr.f32.mxu0 0.0
        %3108 = vmatmul.mubr.f32.gmra.mxu0 %v3021
        %v3109 = vpop.f32.mrf.mxu0
        %v3110 = vadd.f32 0.0, %v3109
        %v3111 = vpop.f32.mrf.mxu0
        %3112 = vmatprep.mubr.f32.mxu0 0.0
        %3113 = vmatmul.mubr.f32.gmra.mxu0 %v3023
        %v3114 = vpop.f32.mrf.mxu0
        %v3115 = vadd.f32 0.0, %v3114
        %v3116 = vpop.f32.mrf.mxu0
        %3117 = vmatprep.mubr.f32.mxu0 0.0
        %3118 = vmatmul.mubr.f32.gmra.mxu0 %v3025
        %v3119 = vpop.f32.mrf.mxu0
        %v3120 = vadd.f32 0.0, %v3119
        %v3121 = vpop.f32.mrf.mxu0
        %3122 = vmatprep.mubr.f32.mxu0 0.0
        %3123 = vmatmul.mubr.f32.gmra.mxu0 %v3027
        %v3124 = vpop.f32.mrf.mxu0
        %v3125 = vadd.f32 0.0, %v3124
        %v3126 = vpop.f32.mrf.mxu0
        %3127 = vmatprep.mubr.f32.mxu0 0.0
        %3128 = vmatmul.mubr.f32.gmra.mxu0 %v3029
        %v3129 = vpop.f32.mrf.mxu0
        %v3130 = vadd.f32 0.0, %v3129
        %v3131 = vpop.f32.mrf.mxu0
        %3132 = vmatprep.mubr.f32.mxu0 0.0
        %3133 = vmatmul.mubr.f32.gmra.mxu0 %v3031
        %v3134 = vpop.f32.mrf.mxu0
        %v3135 = vadd.f32 0.0, %v3134
        %v3136 = vpop.f32.mrf.mxu0
        %3137 = vdwg.mxu0
        %v3138 = vadd.f32 %v827, %v3100
        %v3139 = vadd.f32 %v832, %v3105
        %v3140 = vadd.f32 %v837, %v3110
        %v3141 = vadd.f32 %v842, %v3115
        %v3142 = vadd.f32 %v847, %v3120
        %v3143 = vadd.f32 %v852, %v3125
        %v3144 = vadd.f32 %v857, %v3130
        %v3145 = vadd.f32 %v862, %v3135
        %v3146 = vadd.f32 %v3138, %v3138
        %v3147 = vadd.f32 %v3139, %v3139
        %v3148 = vadd.f32 %v3140, %v3140
        %v3149 = vadd.f32 %v3141, %v3141
        %v3150 = vadd.f32 %v3142, %v3142
        %v3151 = vadd.f32 %v3143, %v3143
        %v3152 = vadd.f32 %v3144, %v3144
        %v3153 = vadd.f32 %v3145, %v3145
        %v3154 = vsel %vm263, %v3146, %v3138
        %v3155 = vsel %vm263, %v3147, %v3139
        %v3156 = vsel %vm263, %v3148, %v3140
        %v3157 = vsel %vm263, %v3149, %v3141
        %v3158 = vsel %vm263, %v3150, %v3142
        %v3159 = vsel %vm263, %v3151, %v3143
        %v3160 = vsel %vm263, %v3152, %v3144
        %v3161 = vsel %vm263, %v3153, %v3145
        %v3162 = vxor.u32 %v3154, 2147483648
        %v3163 = vxor.u32 %v3155, 2147483648
        %v3164 = vxor.u32 %v3156, 2147483648
        %v3165 = vxor.u32 %v3157, 2147483648
        %v3166 = vxor.u32 %v3158, 2147483648
        %v3167 = vxor.u32 %v3159, 2147483648
        %v3168 = vxor.u32 %v3160, 2147483648
        %v3169 = vxor.u32 %v3161, 2147483648
        %v3170 = vmul.f32 %v3162, 1.442695
        %v3171 = vpow.pop %v3170
        %v3172 = vmul.f32 %v3163, 1.442695
        %v3173 = vpow.pop %v3172
        %v3174 = vmul.f32 %v3164, 1.442695
        %v3175 = vpow.pop %v3174
        %v3176 = vmul.f32 %v3165, 1.442695
        %v3177 = vpow.pop %v3176
        %v3178 = vmul.f32 %v3166, 1.442695
        %v3179 = vpow.pop %v3178
        %v3180 = vmul.f32 %v3167, 1.442695
        %v3181 = vpow.pop %v3180
        %v3182 = vmul.f32 %v3168, 1.442695
        %v3183 = vpow.pop %v3182
        %v3184 = vmul.f32 %v3169, 1.442695
        %v3185 = vpow.pop %v3184
        %v3186 = vadd.f32 %v3171, 1.0
        %v3187 = vadd.f32 %v3173, 1.0
        %v3188 = vadd.f32 %v3175, 1.0
        %v3189 = vadd.f32 %v3177, 1.0
        %v3190 = vadd.f32 %v3179, 1.0
        %v3191 = vadd.f32 %v3181, 1.0
        %v3192 = vadd.f32 %v3183, 1.0
        %v3193 = vadd.f32 %v3185, 1.0
        %v3194 = vrcp.pop %v3186
        %v3195 = vmul.f32 1.0, %v3194
        %v3196 = vrcp.pop %v3187
        %v3197 = vmul.f32 1.0, %v3196
        %v3198 = vrcp.pop %v3188
        %v3199 = vmul.f32 1.0, %v3198
        %v3200 = vrcp.pop %v3189
        %v3201 = vmul.f32 1.0, %v3200
        %v3202 = vrcp.pop %v3190
        %v3203 = vmul.f32 1.0, %v3202
        %v3204 = vrcp.pop %v3191
        %v3205 = vmul.f32 1.0, %v3204
        %v3206 = vrcp.pop %v3192
        %v3207 = vmul.f32 1.0, %v3206
        %v3208 = vrcp.pop %v3193
        %v3209 = vmul.f32 1.0, %v3208
        %v3210 = vadd.f32 %v3195, %v3195
        %v3211 = vadd.f32 %v3197, %v3197
        %v3212 = vadd.f32 %v3199, %v3199
        %v3213 = vadd.f32 %v3201, %v3201
        %v3214 = vadd.f32 %v3203, %v3203
        %v3215 = vadd.f32 %v3205, %v3205
        %v3216 = vadd.f32 %v3207, %v3207
        %v3217 = vadd.f32 %v3209, %v3209
        %v3218 = vsub.f32 %v3210, 1.0
        %v3219 = vsub.f32 %v3211, 1.0
        %v3220 = vsub.f32 %v3212, 1.0
        %v3221 = vsub.f32 %v3213, 1.0
        %v3222 = vsub.f32 %v3214, 1.0
        %v3223 = vsub.f32 %v3215, 1.0
        %v3224 = vsub.f32 %v3216, 1.0
        %v3225 = vsub.f32 %v3217, 1.0
        %v3226 = vsel %vm263, %v3218, %v3195
        %v3227 = vsel %vm263, %v3219, %v3197
        %v3228 = vsel %vm263, %v3220, %v3199
        %v3229 = vsel %vm263, %v3221, %v3201
        %v3230 = vsel %vm263, %v3222, %v3203
        %v3231 = vsel %vm263, %v3223, %v3205
        %v3232 = vsel %vm263, %v3224, %v3207
        %v3233 = vsel %vm263, %v3225, %v3209
        %v3234 = vmul.f32 %v3226, %v2985
        %v3235 = vmul.f32 %v3227, %v2986
        %v3236 = vmul.f32 %v3228, %v2987
        %v3237 = vmul.f32 %v3229, %v2988
        %v3238 = vmul.f32 %v3230, %v2989
        %v3239 = vmul.f32 %v3231, %v2990
        %v3240 = vmul.f32 %v3232, %v2991
        %v3241 = vmul.f32 %v3233, %v2992
        %3250 = vrot.lane.b32.xlu0 %v3226, 112
        %v3251 = vpop.permute.xlu0 %3250
        %3252 = vrot.lane.b32.xlu0 %v3227, 112
        %v3253 = vpop.permute.xlu0 %3252
        %3254 = vrot.lane.b32.xlu0 %v3228, 112
        %v3255 = vpop.permute.xlu0 %3254
        %3256 = vrot.lane.b32.xlu0 %v3229, 112
        %v3257 = vpop.permute.xlu0 %3256
        %3258 = vrot.lane.b32.xlu0 %v3230, 112
        %v3259 = vpop.permute.xlu0 %3258
        %3260 = vrot.lane.b32.xlu0 %v3231, 112
        %v3261 = vpop.permute.xlu0 %3260
        %3262 = vrot.lane.b32.xlu0 %v3232, 112
        %v3263 = vpop.permute.xlu0 %3262
        %3264 = vrot.lane.b32.xlu0 %v3233, 112
        %v3265 = vpop.permute.xlu0 %3264
        %v3274 = vmul.f32 %v3226, %v3251
        %v3275 = vmul.f32 %v3227, %v3253
        %v3276 = vmul.f32 %v3228, %v3255
        %v3277 = vmul.f32 %v3229, %v3257
        %v3278 = vmul.f32 %v3230, %v3259
        %v3279 = vmul.f32 %v3231, %v3261
        %v3280 = vmul.f32 %v3232, %v3263
        %v3281 = vmul.f32 %v3233, %v3265
        %3290 = vrot.lane.b32.xlu0 %v3274, 8
        %v3291 = vpop.permute.xlu0 %3290
        %3292 = vrot.lane.b32.xlu0 %v3275, 8
        %v3293 = vpop.permute.xlu0 %3292
        %3294 = vrot.lane.b32.xlu0 %v3276, 8
        %v3295 = vpop.permute.xlu0 %3294
        %3296 = vrot.lane.b32.xlu0 %v3277, 8
        %v3297 = vpop.permute.xlu0 %3296
        %3298 = vrot.lane.b32.xlu0 %v3278, 8
        %v3299 = vpop.permute.xlu0 %3298
        %3300 = vrot.lane.b32.xlu0 %v3279, 8
        %v3301 = vpop.permute.xlu0 %3300
        %3302 = vrot.lane.b32.xlu0 %v3280, 8
        %v3303 = vpop.permute.xlu0 %3302
        %3304 = vrot.lane.b32.xlu0 %v3281, 8
        %v3305 = vpop.permute.xlu0 %3304
        %v3314 = vadd.f32 %v3234, %v3291
        %v3315 = vadd.f32 %v3235, %v3293
        %v3316 = vadd.f32 %v3236, %v3295
        %v3317 = vadd.f32 %v3237, %v3297
        %v3318 = vadd.f32 %v3238, %v3299
        %v3319 = vadd.f32 %v3239, %v3301
        %v3320 = vadd.f32 %v3240, %v3303
        %v3321 = vadd.f32 %v3241, %v3305
        %v3322 = vtanh.pop %v3314
        %v3323 = vtanh.pop %v3315
        %v3324 = vtanh.pop %v3316
        %v3325 = vtanh.pop %v3317
        %v3326 = vtanh.pop %v3318
        %v3327 = vtanh.pop %v3319
        %v3328 = vtanh.pop %v3320
        %v3329 = vtanh.pop %v3321
        %3338 = vrot.lane.b32.xlu0 %v3322, 16
        %v3339 = vpop.permute.xlu0 %3338
        %3340 = vrot.lane.b32.xlu0 %v3323, 16
        %v3341 = vpop.permute.xlu0 %3340
        %3342 = vrot.lane.b32.xlu0 %v3324, 16
        %v3343 = vpop.permute.xlu0 %3342
        %3344 = vrot.lane.b32.xlu0 %v3325, 16
        %v3345 = vpop.permute.xlu0 %3344
        %3346 = vrot.lane.b32.xlu0 %v3326, 16
        %v3347 = vpop.permute.xlu0 %3346
        %3348 = vrot.lane.b32.xlu0 %v3327, 16
        %v3349 = vpop.permute.xlu0 %3348
        %3350 = vrot.lane.b32.xlu0 %v3328, 16
        %v3351 = vpop.permute.xlu0 %3350
        %3352 = vrot.lane.b32.xlu0 %v3329, 16
        %v3353 = vpop.permute.xlu0 %3352
        %v3362 = vmul.f32 %v3226, %v3339
        %v3363 = vmul.f32 %v3227, %v3341
        %v3364 = vmul.f32 %v3228, %v3343
        %v3365 = vmul.f32 %v3229, %v3345
        %v3366 = vmul.f32 %v3230, %v3347
        %v3367 = vmul.f32 %v3231, %v3349
        %v3368 = vmul.f32 %v3232, %v3351
        %v3369 = vmul.f32 %v3233, %v3353
        %v3370 = vsel %vm355, 1, 0
        %v3371 = vsel %vm356, 1, 0
        %v3372 = vsel %vm357, 1, 0
        %v3373 = vsel %vm358, 1, 0
        %v3374 = vsel %vm359, 1, 0
        %v3375 = vsel %vm360, 1, 0
        %v3376 = vsel %vm361, 1, 0
        %v3377 = vsel %vm362, 1, 0
        %3378 = vset.pattern.permute.xlu0 0
        %3379 = vperm.xlu0 %3378, %v3370
        %v3380 = vpop.permute.xlu0 %3379
        %3381 = vset.pattern.permute.xlu0 0
        %3382 = vperm.xlu0 %3381, %v3371
        %v3383 = vpop.permute.xlu0 %3382
        %3384 = vset.pattern.permute.xlu0 0
        %3385 = vperm.xlu0 %3384, %v3372
        %v3386 = vpop.permute.xlu0 %3385
        %3387 = vset.pattern.permute.xlu0 0
        %3388 = vperm.xlu0 %3387, %v3373
        %v3389 = vpop.permute.xlu0 %3388
        %3390 = vset.pattern.permute.xlu0 0
        %3391 = vperm.xlu0 %3390, %v3374
        %v3392 = vpop.permute.xlu0 %3391
        %3393 = vset.pattern.permute.xlu0 0
        %3394 = vperm.xlu0 %3393, %v3375
        %v3395 = vpop.permute.xlu0 %3394
        %3396 = vset.pattern.permute.xlu0 0
        %3397 = vperm.xlu0 %3396, %v3376
        %v3398 = vpop.permute.xlu0 %3397
        %3399 = vset.pattern.permute.xlu0 0
        %3400 = vperm.xlu0 %3399, %v3377
        %v3401 = vpop.permute.xlu0 %3400
        %vm3402 = vcmp.eq.s32.totalorder %v3380, 1
        %vm3403 = vcmp.eq.s32.totalorder %v3383, 1
        %vm3404 = vcmp.eq.s32.totalorder %v3386, 1
        %vm3405 = vcmp.eq.s32.totalorder %v3389, 1
        %vm3406 = vcmp.eq.s32.totalorder %v3392, 1
        %vm3407 = vcmp.eq.s32.totalorder %v3395, 1
        %vm3408 = vcmp.eq.s32.totalorder %v3398, 1
        %vm3409 = vcmp.eq.s32.totalorder %v3401, 1
        %v3410 = vsel %vm3402, %v3362, %v2977
        %v3411 = vsel %vm3403, %v3363, %v2978
        %v3412 = vsel %vm3404, %v3364, %v2979
        %v3413 = vsel %vm3405, %v3365, %v2980
        %v3414 = vsel %vm3406, %v3366, %v2981
        %v3415 = vsel %vm3407, %v3367, %v2982
        %v3416 = vsel %vm3408, %v3368, %v2983
        %v3417 = vsel %vm3409, %v3369, %v2984
        %v3418 = vld [vmem:[%s240] sm:$0xff]
        %v3419 = vld [vmem:[%s240 + $0x8] sm:$0xff]
        %v3420 = vld [vmem:[%s240 + $0x10] sm:$0xff]
        %v3421 = vld [vmem:[%s240 + $0x18] sm:$0xff]
        %v3422 = vld [vmem:[%s240 + $0x20] sm:$0xff]
        %v3423 = vld [vmem:[%s240 + $0x28] sm:$0xff]
        %v3424 = vld [vmem:[%s240 + $0x30] sm:$0xff]
        %v3425 = vld [vmem:[%s240 + $0x38] sm:$0xff]
        %3434 = vrot.lane.b32.xlu0 %v3410, 104
        %v3435 = vpop.permute.xlu0 %3434
        %3436 = vrot.lane.b32.xlu0 %v3411, 104
        %v3437 = vpop.permute.xlu0 %3436
        %3438 = vrot.lane.b32.xlu0 %v3412, 104
        %v3439 = vpop.permute.xlu0 %3438
        %3440 = vrot.lane.b32.xlu0 %v3413, 104
        %v3441 = vpop.permute.xlu0 %3440
        %3442 = vrot.lane.b32.xlu0 %v3414, 104
        %v3443 = vpop.permute.xlu0 %3442
        %3444 = vrot.lane.b32.xlu0 %v3415, 104
        %v3445 = vpop.permute.xlu0 %3444
        %3446 = vrot.lane.b32.xlu0 %v3416, 104
        %v3447 = vpop.permute.xlu0 %3446
        %3448 = vrot.lane.b32.xlu0 %v3417, 104
        %v3449 = vpop.permute.xlu0 %3448
        %v3450 = vsel %vm415, %v3435, 0
        %v3452 = vsel %vm415, %v3437, 0
        %v3454 = vsel %vm415, %v3439, 0
        %v3456 = vsel %vm415, %v3441, 0
        %v3458 = vsel %vm415, %v3443, 0
        %v3460 = vsel %vm415, %v3445, 0
        %v3462 = vsel %vm415, %v3447, 0
        %v3464 = vsel %vm415, %v3449, 0
        %3466 = vmatprep.subr.mxu0 0.0
        %3467 = vmatpush1.msra.mxu0 0.0
        %3468 = vmatprep.subr.mxu0 0.0
        %3469 = vmatpush1.msra.mxu0 0.0
        %3470 = vmatprep.subr.mxu0 0.0
        %3471 = vmatpush1.msra.mxu0 0.0
        %3472 = vmatprep.subr.mxu0 0.0
        %3473 = vmatpush1.msra.mxu0 0.0
        %3474 = vmatprep.subr.mxu0 0.0
        %3475 = vmatpush1.msra.mxu0 0.0
        %3476 = vmatprep.subr.mxu0 0.0
        %3477 = vmatpush1.msra.mxu0 0.0
        %3478 = vmatprep.subr.mxu0 0.0
        %3479 = vmatpush1.msra.mxu0 0.0
        %3480 = vmatprep.subr.mxu0 0.0
        %3481 = vmatpush1.msra.mxu0 0.0
        %3482 = vmatprep.subr.mxu0 0.0
        %3483 = vmatpush1.msra.mxu0 0.0
        %3484 = vmatprep.subr.mxu0 0.0
        %3485 = vmatpush1.msra.mxu0 0.0
        %3486 = vmatprep.subr.mxu0 0.0
        %3487 = vmatpush1.msra.mxu0 0.0
        %3488 = vmatprep.subr.mxu0 0.0
        %3489 = vmatpush1.msra.mxu0 0.0
        %3490 = vmatprep.subr.mxu0 0.0
        %3491 = vmatpush1.msra.mxu0 0.0
        %3492 = vmatprep.subr.mxu0 0.0
        %3493 = vmatpush1.msra.mxu0 0.0
        %3494 = vmatprep.subr.mxu0 0.0
        %3495 = vmatpush1.msra.mxu0 0.0
        %3496 = vmatprep.subr.mxu0 0.0
        %3497 = vmatpush1.msra.mxu0 %v248
        %3498 = vmatprep.subr.mxu0 0.0
        %3499 = vmatpush2.msra.mxu0 0.0
        %3500 = vmatprep.subr.mxu0 0.0
        %3501 = vmatpush2.msra.mxu0 0.0
        %3502 = vmatprep.subr.mxu0 0.0
        %3503 = vmatpush2.msra.mxu0 0.0
        %3504 = vmatprep.subr.mxu0 0.0
        %3505 = vmatpush2.msra.mxu0 0.0
        %3506 = vmatprep.subr.mxu0 0.0
        %3507 = vmatpush2.msra.mxu0 0.0
        %3508 = vmatprep.subr.mxu0 0.0
        %3509 = vmatpush2.msra.mxu0 0.0
        %3510 = vmatprep.subr.mxu0 0.0
        %3511 = vmatpush2.msra.mxu0 0.0
        %3512 = vmatprep.subr.mxu0 0.0
        %3513 = vmatpush2.msra.mxu0 0.0
        %3514 = vmatprep.subr.mxu0 0.0
        %3515 = vmatpush2.msra.mxu0 0.0
        %3516 = vmatprep.subr.mxu0 0.0
        %3517 = vmatpush2.msra.mxu0 0.0
        %3518 = vmatprep.subr.mxu0 0.0
        %3519 = vmatpush2.msra.mxu0 0.0
        %3520 = vmatprep.subr.mxu0 0.0
        %3521 = vmatpush2.msra.mxu0 0.0
        %3522 = vmatprep.subr.mxu0 0.0
        %3523 = vmatpush2.msra.mxu0 0.0
        %3524 = vmatprep.subr.mxu0 0.0
        %3525 = vmatpush2.msra.mxu0 0.0
        %3526 = vmatprep.subr.mxu0 0.0
        %3527 = vmatpush2.msra.mxu0 0.0
        %3528 = vmatprep.subr.mxu0 0.0
        %3529 = vmatpush2.msra.mxu0 0.0
        %3530 = vmatprep.mubr.f32.mxu0 0.0
        %3531 = vmatmul.mubr.f32.gmra.mxu0 %v3450
        %v3532 = vpop.f32.mrf.mxu0
        %v3533 = vadd.f32 0.0, %v3532
        %v3534 = vpop.f32.mrf.mxu0
        %3535 = vmatprep.mubr.f32.mxu0 0.0
        %3536 = vmatmul.mubr.f32.gmra.mxu0 %v3452
        %v3537 = vpop.f32.mrf.mxu0
        %v3538 = vadd.f32 0.0, %v3537
        %v3539 = vpop.f32.mrf.mxu0
        %3540 = vmatprep.mubr.f32.mxu0 0.0
        %3541 = vmatmul.mubr.f32.gmra.mxu0 %v3454
        %v3542 = vpop.f32.mrf.mxu0
        %v3543 = vadd.f32 0.0, %v3542
        %v3544 = vpop.f32.mrf.mxu0
        %3545 = vmatprep.mubr.f32.mxu0 0.0
        %3546 = vmatmul.mubr.f32.gmra.mxu0 %v3456
        %v3547 = vpop.f32.mrf.mxu0
        %v3548 = vadd.f32 0.0, %v3547
        %v3549 = vpop.f32.mrf.mxu0
        %3550 = vmatprep.mubr.f32.mxu0 0.0
        %3551 = vmatmul.mubr.f32.gmra.mxu0 %v3458
        %v3552 = vpop.f32.mrf.mxu0
        %v3553 = vadd.f32 0.0, %v3552
        %v3554 = vpop.f32.mrf.mxu0
        %3555 = vmatprep.mubr.f32.mxu0 0.0
        %3556 = vmatmul.mubr.f32.gmra.mxu0 %v3460
        %v3557 = vpop.f32.mrf.mxu0
        %v3558 = vadd.f32 0.0, %v3557
        %v3559 = vpop.f32.mrf.mxu0
        %3560 = vmatprep.mubr.f32.mxu0 0.0
        %3561 = vmatmul.mubr.f32.gmra.mxu0 %v3462
        %v3562 = vpop.f32.mrf.mxu0
        %v3563 = vadd.f32 0.0, %v3562
        %v3564 = vpop.f32.mrf.mxu0
        %3565 = vmatprep.mubr.f32.mxu0 0.0
        %3566 = vmatmul.mubr.f32.gmra.mxu0 %v3464
        %v3567 = vpop.f32.mrf.mxu0
        %v3568 = vadd.f32 0.0, %v3567
        %v3569 = vpop.f32.mrf.mxu0
        %3570 = vdwg.mxu0
        %vm3571 = vcmask 130048
        %v3573 = vsel %vm3571, %v3418, 0
        %v3576 = vsel %vm3571, %v3419, 0
        %v3579 = vsel %vm3571, %v3420, 0
        %v3582 = vsel %vm3571, %v3421, 0
        %v3585 = vsel %vm3571, %v3422, 0
        %v3588 = vsel %vm3571, %v3423, 0
        %v3591 = vsel %vm3571, %v3424, 0
        %v3594 = vsel %vm3571, %v3425, 0
        %3596 = vmatprep.subr.mxu0 0.0
        %3597 = vmatpush1.msra.mxu0 0.0
        %3598 = vmatprep.subr.mxu0 0.0
        %3599 = vmatpush1.msra.mxu0 0.0
        %3600 = vmatprep.subr.mxu0 0.0
        %3601 = vmatpush1.msra.mxu0 0.0
        %3602 = vmatprep.subr.mxu0 0.0
        %3603 = vmatpush1.msra.mxu0 0.0
        %3604 = vmatprep.subr.mxu0 0.0
        %3605 = vmatpush1.msra.mxu0 0.0
        %3606 = vmatprep.subr.mxu0 0.0
        %3607 = vmatpush1.msra.mxu0 0.0
        %3608 = vmatprep.subr.mxu0 0.0
        %3609 = vmatpush1.msra.mxu0 0.0
        %3610 = vmatprep.subr.mxu0 0.0
        %3611 = vmatpush1.msra.mxu0 0.0
        %3612 = vmatprep.subr.mxu0 0.0
        %3613 = vmatpush1.msra.mxu0 0.0
        %3614 = vmatprep.subr.mxu0 0.0
        %3615 = vmatpush1.msra.mxu0 0.0
        %3616 = vmatprep.subr.mxu0 0.0
        %3617 = vmatpush1.msra.mxu0 0.0
        %3618 = vmatprep.subr.mxu0 0.0
        %3619 = vmatpush1.msra.mxu0 0.0
        %3620 = vmatprep.subr.mxu0 0.0
        %3621 = vmatpush1.msra.mxu0 0.0
        %3622 = vmatprep.subr.mxu0 0.0
        %3623 = vmatpush1.msra.mxu0 0.0
        %3624 = vmatprep.subr.mxu0 0.0
        %3625 = vmatpush1.msra.mxu0 %v247
        %3626 = vmatprep.subr.mxu0 0.0
        %3627 = vmatpush1.msra.mxu0 %v246
        %3628 = vmatprep.subr.mxu0 0.0
        %3629 = vmatpush2.msra.mxu0 0.0
        %3630 = vmatprep.subr.mxu0 0.0
        %3631 = vmatpush2.msra.mxu0 0.0
        %3632 = vmatprep.subr.mxu0 0.0
        %3633 = vmatpush2.msra.mxu0 0.0
        %3634 = vmatprep.subr.mxu0 0.0
        %3635 = vmatpush2.msra.mxu0 0.0
        %3636 = vmatprep.subr.mxu0 0.0
        %3637 = vmatpush2.msra.mxu0 0.0
        %3638 = vmatprep.subr.mxu0 0.0
        %3639 = vmatpush2.msra.mxu0 0.0
        %3640 = vmatprep.subr.mxu0 0.0
        %3641 = vmatpush2.msra.mxu0 0.0
        %3642 = vmatprep.subr.mxu0 0.0
        %3643 = vmatpush2.msra.mxu0 0.0
        %3644 = vmatprep.subr.mxu0 0.0
        %3645 = vmatpush2.msra.mxu0 0.0
        %3646 = vmatprep.subr.mxu0 0.0
        %3647 = vmatpush2.msra.mxu0 0.0
        %3648 = vmatprep.subr.mxu0 0.0
        %3649 = vmatpush2.msra.mxu0 0.0
        %3650 = vmatprep.subr.mxu0 0.0
        %3651 = vmatpush2.msra.mxu0 0.0
        %3652 = vmatprep.subr.mxu0 0.0
        %3653 = vmatpush2.msra.mxu0 0.0
        %3654 = vmatprep.subr.mxu0 0.0
        %3655 = vmatpush2.msra.mxu0 0.0
        %3656 = vmatprep.subr.mxu0 0.0
        %3657 = vmatpush2.msra.mxu0 0.0
        %3658 = vmatprep.subr.mxu0 0.0
        %3659 = vmatpush2.msra.mxu0 0.0
        %3660 = vmatprep.mubr.f32.mxu0 0.0
        %3661 = vmatmul.mubr.f32.gmra.mxu0 %v3573
        %v3662 = vpop.f32.mrf.mxu0
        %v3663 = vadd.f32 %v3533, %v3662
        %v3664 = vpop.f32.mrf.mxu0
        %3665 = vmatprep.mubr.f32.mxu0 0.0
        %3666 = vmatmul.mubr.f32.gmra.mxu0 %v3576
        %v3667 = vpop.f32.mrf.mxu0
        %v3668 = vadd.f32 %v3538, %v3667
        %v3669 = vpop.f32.mrf.mxu0
        %3670 = vmatprep.mubr.f32.mxu0 0.0
        %3671 = vmatmul.mubr.f32.gmra.mxu0 %v3579
        %v3672 = vpop.f32.mrf.mxu0
        %v3673 = vadd.f32 %v3543, %v3672
        %v3674 = vpop.f32.mrf.mxu0
        %3675 = vmatprep.mubr.f32.mxu0 0.0
        %3676 = vmatmul.mubr.f32.gmra.mxu0 %v3582
        %v3677 = vpop.f32.mrf.mxu0
        %v3678 = vadd.f32 %v3548, %v3677
        %v3679 = vpop.f32.mrf.mxu0
        %3680 = vmatprep.mubr.f32.mxu0 0.0
        %3681 = vmatmul.mubr.f32.gmra.mxu0 %v3585
        %v3682 = vpop.f32.mrf.mxu0
        %v3683 = vadd.f32 %v3553, %v3682
        %v3684 = vpop.f32.mrf.mxu0
        %3685 = vmatprep.mubr.f32.mxu0 0.0
        %3686 = vmatmul.mubr.f32.gmra.mxu0 %v3588
        %v3687 = vpop.f32.mrf.mxu0
        %v3688 = vadd.f32 %v3558, %v3687
        %v3689 = vpop.f32.mrf.mxu0
        %3690 = vmatprep.mubr.f32.mxu0 0.0
        %3691 = vmatmul.mubr.f32.gmra.mxu0 %v3591
        %v3692 = vpop.f32.mrf.mxu0
        %v3693 = vadd.f32 %v3563, %v3692
        %v3694 = vpop.f32.mrf.mxu0
        %3695 = vmatprep.mubr.f32.mxu0 0.0
        %3696 = vmatmul.mubr.f32.gmra.mxu0 %v3594
        %v3697 = vpop.f32.mrf.mxu0
        %v3698 = vadd.f32 %v3568, %v3697
        %v3699 = vpop.f32.mrf.mxu0
        %3700 = vdwg.mxu0
        %v3701 = vlaneseq
        %v3702 = vshrl.u32 %v3701, 7
        %v3703 = vsub.s32 0, %v3702
        %v3704 = vrot.slane %v253, %v3703
        %v3705 = vadd.f32 %v3663, %v3704
        %v3706 = vadd.f32 %v3668, %v3704
        %v3707 = vadd.f32 %v3673, %v3704
        %v3708 = vadd.f32 %v3678, %v3704
        %v3709 = vadd.f32 %v3683, %v3704
        %v3710 = vadd.f32 %v3688, %v3704
        %v3711 = vadd.f32 %v3693, %v3704
        %v3712 = vadd.f32 %v3698, %v3704
        %vm3713 = vcmask 261120
        %v3714 = vsel %vm3713, 0.0, 0
        %3716 = vmatprep.subr.mxu0 0.0
        %3717 = vmatpush1.msra.mxu0 0.0
        %3718 = vmatprep.subr.mxu0 0.0
        %3719 = vmatpush1.msra.mxu0 0.0
        %3720 = vmatprep.subr.mxu0 0.0
        %3721 = vmatpush1.msra.mxu0 0.0
        %3722 = vmatprep.subr.mxu0 0.0
        %3723 = vmatpush1.msra.mxu0 0.0
        %3724 = vmatprep.subr.mxu0 0.0
        %3725 = vmatpush1.msra.mxu0 0.0
        %3726 = vmatprep.subr.mxu0 0.0
        %3727 = vmatpush1.msra.mxu0 0.0
        %3728 = vmatprep.subr.mxu0 0.0
        %3729 = vmatpush1.msra.mxu0 0.0
        %3730 = vmatprep.subr.mxu0 0.0
        %3731 = vmatpush1.msra.mxu0 0.0
        %3732 = vmatprep.subr.mxu0 0.0
        %3733 = vmatpush1.msra.mxu0 0.0
        %3734 = vmatprep.subr.mxu0 0.0
        %3735 = vmatpush1.msra.mxu0 0.0
        %3736 = vmatprep.subr.mxu0 0.0
        %3737 = vmatpush1.msra.mxu0 0.0
        %3738 = vmatprep.subr.mxu0 0.0
        %3739 = vmatpush1.msra.mxu0 0.0
        %3740 = vmatprep.subr.mxu0 0.0
        %3741 = vmatpush1.msra.mxu0 %v252
        %3742 = vmatprep.subr.mxu0 0.0
        %3743 = vmatpush1.msra.mxu0 %v251
        %3744 = vmatprep.subr.mxu0 0.0
        %3745 = vmatpush1.msra.mxu0 %v250
        %3746 = vmatprep.subr.mxu0 0.0
        %3747 = vmatpush1.msra.mxu0 %v249
        %3748 = vmatprep.subr.mxu0 0.0
        %3749 = vmatpush2.msra.mxu0 0.0
        %3750 = vmatprep.subr.mxu0 0.0
        %3751 = vmatpush2.msra.mxu0 0.0
        %3752 = vmatprep.subr.mxu0 0.0
        %3753 = vmatpush2.msra.mxu0 0.0
        %3754 = vmatprep.subr.mxu0 0.0
        %3755 = vmatpush2.msra.mxu0 0.0
        %3756 = vmatprep.subr.mxu0 0.0
        %3757 = vmatpush2.msra.mxu0 0.0
        %3758 = vmatprep.subr.mxu0 0.0
        %3759 = vmatpush2.msra.mxu0 0.0
        %3760 = vmatprep.subr.mxu0 0.0
        %3761 = vmatpush2.msra.mxu0 0.0
        %3762 = vmatprep.subr.mxu0 0.0
        %3763 = vmatpush2.msra.mxu0 0.0
        %3764 = vmatprep.subr.mxu0 0.0
        %3765 = vmatpush2.msra.mxu0 0.0
        %3766 = vmatprep.subr.mxu0 0.0
        %3767 = vmatpush2.msra.mxu0 0.0
        %3768 = vmatprep.subr.mxu0 0.0
        %3769 = vmatpush2.msra.mxu0 0.0
        %3770 = vmatprep.subr.mxu0 0.0
        %3771 = vmatpush2.msra.mxu0 0.0
        %3772 = vmatprep.subr.mxu0 0.0
        %3773 = vmatpush2.msra.mxu0 0.0
        %3774 = vmatprep.subr.mxu0 0.0
        %3775 = vmatpush2.msra.mxu0 0.0
        %3776 = vmatprep.subr.mxu0 0.0
        %3777 = vmatpush2.msra.mxu0 0.0
        %3778 = vmatprep.subr.mxu0 0.0
        %3779 = vmatpush2.msra.mxu0 0.0
        %3780 = vmatprep.mubr.f32.mxu0 0.0
        %3781 = vmatmul.mubr.f32.gmra.mxu0 %v3714
        %v3782 = vpop.f32.mrf.mxu0
        %v3783 = vadd.f32 0.0, %v3782
        %v3784 = vpop.f32.mrf.mxu0
        %3785 = vdwg.mxu0
        %v3786 = vadd.f32 %v3705, %v3783
        %v3787 = vadd.f32 %v3786, %v3786
        %v3788 = vsel %vm266, %v3787, %v3786
        %v3789 = vxor.u32 %v3788, 2147483648
        %v3790 = vmul.f32 %v3789, 1.442695
        %v3791 = vpow.pop %v3790
        %v3792 = vadd.f32 %v3791, 1.0
        %v3793 = vrcp.pop %v3792
        %v3794 = vmul.f32 1.0, %v3793
        %v3795 = vadd.f32 %v3794, %v3794
        %v3796 = vsub.f32 %v3795, 1.0
        %v3797 = vsel %vm266, %v3796, %v3794
        %v3798 = vmul.f32 %v3797, 0.0
        %3800 = vrot.lane.b32.xlu0 %v3797, 64
        %v3801 = vpop.permute.xlu0 %3800
        %v3803 = vmul.f32 %v3797, %v3801
        %3805 = vrot.lane.b32.xlu0 %v3803, 32
        %v3806 = vpop.permute.xlu0 %3805
        %v3808 = vadd.f32 %v3798, %v3806
        %v3809 = vtanh.pop %v3808
        %3811 = vrot.lane.b32.xlu0 %v3809, 64
        %v3812 = vpop.permute.xlu0 %3811
        %v3814 = vmul.f32 %v3797, %v3812
        %3816 = vrot.lane.b32.xlu0 %v3814, 32
        %v3817 = vpop.permute.xlu0 %3816
        %3819 = vst.msk [vmem:[#allocation2] sm:$0xff] %vm3713, %v3817
        %v3820 = vsel %vm3713, %v3817, 0
        %3822 = vmatprep.subr.mxu0 0.0
        %3823 = vmatpush1.msra.mxu0 0.0
        %3824 = vmatprep.subr.mxu0 0.0
        %3825 = vmatpush1.msra.mxu0 0.0
        %3826 = vmatprep.subr.mxu0 0.0
        %3827 = vmatpush1.msra.mxu0 0.0
        %3828 = vmatprep.subr.mxu0 0.0
        %3829 = vmatpush1.msra.mxu0 0.0
        %3830 = vmatprep.subr.mxu0 0.0
        %3831 = vmatpush1.msra.mxu0 0.0
        %3832 = vmatprep.subr.mxu0 0.0
        %3833 = vmatpush1.msra.mxu0 0.0
        %3834 = vmatprep.subr.mxu0 0.0
        %3835 = vmatpush1.msra.mxu0 0.0
        %3836 = vmatprep.subr.mxu0 0.0
        %3837 = vmatpush1.msra.mxu0 0.0
        %3838 = vmatprep.subr.mxu0 0.0
        %3839 = vmatpush1.msra.mxu0 0.0
        %3840 = vmatprep.subr.mxu0 0.0
        %3841 = vmatpush1.msra.mxu0 0.0
        %3842 = vmatprep.subr.mxu0 0.0
        %3843 = vmatpush1.msra.mxu0 0.0
        %3844 = vmatprep.subr.mxu0 0.0
        %3845 = vmatpush1.msra.mxu0 0.0
        %3846 = vmatprep.subr.mxu0 0.0
        %3847 = vmatpush1.msra.mxu0 %v252
        %3848 = vmatprep.subr.mxu0 0.0
        %3849 = vmatpush1.msra.mxu0 %v251
        %3850 = vmatprep.subr.mxu0 0.0
        %3851 = vmatpush1.msra.mxu0 %v250
        %3852 = vmatprep.subr.mxu0 0.0
        %3853 = vmatpush1.msra.mxu0 %v249
        %3854 = vmatprep.subr.mxu0 0.0
        %3855 = vmatpush2.msra.mxu0 0.0
        %3856 = vmatprep.subr.mxu0 0.0
        %3857 = vmatpush2.msra.mxu0 0.0
        %3858 = vmatprep.subr.mxu0 0.0
        %3859 = vmatpush2.msra.mxu0 0.0
        %3860 = vmatprep.subr.mxu0 0.0
        %3861 = vmatpush2.msra.mxu0 0.0
        %3862 = vmatprep.subr.mxu0 0.0
        %3863 = vmatpush2.msra.mxu0 0.0
        %3864 = vmatprep.subr.mxu0 0.0
        %3865 = vmatpush2.msra.mxu0 0.0
        %3866 = vmatprep.subr.mxu0 0.0
        %3867 = vmatpush2.msra.mxu0 0.0
        %3868 = vmatprep.subr.mxu0 0.0
        %3869 = vmatpush2.msra.mxu0 0.0
        %3870 = vmatprep.subr.mxu0 0.0
        %3871 = vmatpush2.msra.mxu0 0.0
        %3872 = vmatprep.subr.mxu0 0.0
        %3873 = vmatpush2.msra.mxu0 0.0
        %3874 = vmatprep.subr.mxu0 0.0
        %3875 = vmatpush2.msra.mxu0 0.0
        %3876 = vmatprep.subr.mxu0 0.0
        %3877 = vmatpush2.msra.mxu0 0.0
        %3878 = vmatprep.subr.mxu0 0.0
        %3879 = vmatpush2.msra.mxu0 0.0
        %3880 = vmatprep.subr.mxu0 0.0
        %3881 = vmatpush2.msra.mxu0 0.0
        %3882 = vmatprep.subr.mxu0 0.0
        %3883 = vmatpush2.msra.mxu0 0.0
        %3884 = vmatprep.subr.mxu0 0.0
        %3885 = vmatpush2.msra.mxu0 0.0
        %3886 = vmatprep.mubr.f32.mxu0 0.0
        %3887 = vmatmul.mubr.f32.gmra.mxu0 %v3820
        %v3888 = vpop.f32.mrf.mxu0
        %v3889 = vadd.f32 0.0, %v3888
        %v3890 = vpop.f32.mrf.mxu0
        %3891 = vdwg.mxu0
        %v3892 = vadd.f32 %v3706, %v3889
        %v3893 = vadd.f32 %v3892, %v3892
        %v3894 = vsel %vm266, %v3893, %v3892
        %v3895 = vxor.u32 %v3894, 2147483648
        %v3896 = vmul.f32 %v3895, 1.442695
        %v3897 = vpow.pop %v3896
        %v3898 = vadd.f32 %v3897, 1.0
        %v3899 = vrcp.pop %v3898
        %v3900 = vmul.f32 1.0, %v3899
        %v3901 = vadd.f32 %v3900, %v3900
        %v3902 = vsub.f32 %v3901, 1.0
        %v3903 = vsel %vm266, %v3902, %v3900
        %v3904 = vmul.f32 %v3903, %v3808
        %3906 = vrot.lane.b32.xlu0 %v3903, 64
        %v3907 = vpop.permute.xlu0 %3906
        %v3909 = vmul.f32 %v3903, %v3907
        %3911 = vrot.lane.b32.xlu0 %v3909, 32
        %v3912 = vpop.permute.xlu0 %3911
        %v3914 = vadd.f32 %v3904, %v3912
        %v3915 = vtanh.pop %v3914
        %3917 = vrot.lane.b32.xlu0 %v3915, 64
        %v3918 = vpop.permute.xlu0 %3917
        %v3920 = vmul.f32 %v3903, %v3918
        %3922 = vrot.lane.b32.xlu0 %v3920, 32
        %v3923 = vpop.permute.xlu0 %3922
        %3925 = vst.msk [vmem:[#allocation2 + $0x8] sm:$0xff] %vm3713, %v3923
        %v3926 = vsel %vm3713, %v3923, 0
        %3928 = vmatprep.subr.mxu0 0.0
        %3929 = vmatpush1.msra.mxu0 0.0
        %3930 = vmatprep.subr.mxu0 0.0
        %3931 = vmatpush1.msra.mxu0 0.0
        %3932 = vmatprep.subr.mxu0 0.0
        %3933 = vmatpush1.msra.mxu0 0.0
        %3934 = vmatprep.subr.mxu0 0.0
        %3935 = vmatpush1.msra.mxu0 0.0
        %3936 = vmatprep.subr.mxu0 0.0
        %3937 = vmatpush1.msra.mxu0 0.0
        %3938 = vmatprep.subr.mxu0 0.0
        %3939 = vmatpush1.msra.mxu0 0.0
        %3940 = vmatprep.subr.mxu0 0.0
        %3941 = vmatpush1.msra.mxu0 0.0
        %3942 = vmatprep.subr.mxu0 0.0
        %3943 = vmatpush1.msra.mxu0 0.0
        %3944 = vmatprep.subr.mxu0 0.0
        %3945 = vmatpush1.msra.mxu0 0.0
        %3946 = vmatprep.subr.mxu0 0.0
        %3947 = vmatpush1.msra.mxu0 0.0
        %3948 = vmatprep.subr.mxu0 0.0
        %3949 = vmatpush1.msra.mxu0 0.0
        %3950 = vmatprep.subr.mxu0 0.0
        %3951 = vmatpush1.msra.mxu0 0.0
        %3952 = vmatprep.subr.mxu0 0.0
        %3953 = vmatpush1.msra.mxu0 %v252
        %3954 = vmatprep.subr.mxu0 0.0
        %3955 = vmatpush1.msra.mxu0 %v251
        %3956 = vmatprep.subr.mxu0 0.0
        %3957 = vmatpush1.msra.mxu0 %v250
        %3958 = vmatprep.subr.mxu0 0.0
        %3959 = vmatpush1.msra.mxu0 %v249
        %3960 = vmatprep.subr.mxu0 0.0
        %3961 = vmatpush2.msra.mxu0 0.0
        %3962 = vmatprep.subr.mxu0 0.0
        %3963 = vmatpush2.msra.mxu0 0.0
        %3964 = vmatprep.subr.mxu0 0.0
        %3965 = vmatpush2.msra.mxu0 0.0
        %3966 = vmatprep.subr.mxu0 0.0
        %3967 = vmatpush2.msra.mxu0 0.0
        %3968 = vmatprep.subr.mxu0 0.0
        %3969 = vmatpush2.msra.mxu0 0.0
        %3970 = vmatprep.subr.mxu0 0.0
        %3971 = vmatpush2.msra.mxu0 0.0
        %3972 = vmatprep.subr.mxu0 0.0
        %3973 = vmatpush2.msra.mxu0 0.0
        %3974 = vmatprep.subr.mxu0 0.0
        %3975 = vmatpush2.msra.mxu0 0.0
        %3976 = vmatprep.subr.mxu0 0.0
        %3977 = vmatpush2.msra.mxu0 0.0
        %3978 = vmatprep.subr.mxu0 0.0
        %3979 = vmatpush2.msra.mxu0 0.0
        %3980 = vmatprep.subr.mxu0 0.0
        %3981 = vmatpush2.msra.mxu0 0.0
        %3982 = vmatprep.subr.mxu0 0.0
        %3983 = vmatpush2.msra.mxu0 0.0
        %3984 = vmatprep.subr.mxu0 0.0
        %3985 = vmatpush2.msra.mxu0 0.0
        %3986 = vmatprep.subr.mxu0 0.0
        %3987 = vmatpush2.msra.mxu0 0.0
        %3988 = vmatprep.subr.mxu0 0.0
        %3989 = vmatpush2.msra.mxu0 0.0
        %3990 = vmatprep.subr.mxu0 0.0
        %3991 = vmatpush2.msra.mxu0 0.0
        %3992 = vmatprep.mubr.f32.mxu0 0.0
        %3993 = vmatmul.mubr.f32.gmra.mxu0 %v3926
        %v3994 = vpop.f32.mrf.mxu0
        %v3995 = vadd.f32 0.0, %v3994
        %v3996 = vpop.f32.mrf.mxu0
        %3997 = vdwg.mxu0
        %v3998 = vadd.f32 %v3707, %v3995
        %v3999 = vadd.f32 %v3998, %v3998
        %v4000 = vsel %vm266, %v3999, %v3998
        %v4001 = vxor.u32 %v4000, 2147483648
        %v4002 = vmul.f32 %v4001, 1.442695
        %v4003 = vpow.pop %v4002
        %v4004 = vadd.f32 %v4003, 1.0
        %v4005 = vrcp.pop %v4004
        %v4006 = vmul.f32 1.0, %v4005
        %v4007 = vadd.f32 %v4006, %v4006
        %v4008 = vsub.f32 %v4007, 1.0
        %v4009 = vsel %vm266, %v4008, %v4006
        %v4010 = vmul.f32 %v4009, %v3914
        %4012 = vrot.lane.b32.xlu0 %v4009, 64
        %v4013 = vpop.permute.xlu0 %4012
        %v4015 = vmul.f32 %v4009, %v4013
        %4017 = vrot.lane.b32.xlu0 %v4015, 32
        %v4018 = vpop.permute.xlu0 %4017
        %v4020 = vadd.f32 %v4010, %v4018
        %v4021 = vtanh.pop %v4020
        %4023 = vrot.lane.b32.xlu0 %v4021, 64
        %v4024 = vpop.permute.xlu0 %4023
        %v4026 = vmul.f32 %v4009, %v4024
        %4028 = vrot.lane.b32.xlu0 %v4026, 32
        %v4029 = vpop.permute.xlu0 %4028
        %4031 = vst.msk [vmem:[#allocation2 + $0x10] sm:$0xff] %vm3713, %v4029
        %v4032 = vsel %vm3713, %v4029, 0
        %4034 = vmatprep.subr.mxu0 0.0
        %4035 = vmatpush1.msra.mxu0 0.0
        %4036 = vmatprep.subr.mxu0 0.0
        %4037 = vmatpush1.msra.mxu0 0.0
        %4038 = vmatprep.subr.mxu0 0.0
        %4039 = vmatpush1.msra.mxu0 0.0
        %4040 = vmatprep.subr.mxu0 0.0
        %4041 = vmatpush1.msra.mxu0 0.0
        %4042 = vmatprep.subr.mxu0 0.0
        %4043 = vmatpush1.msra.mxu0 0.0
        %4044 = vmatprep.subr.mxu0 0.0
        %4045 = vmatpush1.msra.mxu0 0.0
        %4046 = vmatprep.subr.mxu0 0.0
        %4047 = vmatpush1.msra.mxu0 0.0
        %4048 = vmatprep.subr.mxu0 0.0
        %4049 = vmatpush1.msra.mxu0 0.0
        %4050 = vmatprep.subr.mxu0 0.0
        %4051 = vmatpush1.msra.mxu0 0.0
        %4052 = vmatprep.subr.mxu0 0.0
        %4053 = vmatpush1.msra.mxu0 0.0
        %4054 = vmatprep.subr.mxu0 0.0
        %4055 = vmatpush1.msra.mxu0 0.0
        %4056 = vmatprep.subr.mxu0 0.0
        %4057 = vmatpush1.msra.mxu0 0.0
        %4058 = vmatprep.subr.mxu0 0.0
        %4059 = vmatpush1.msra.mxu0 %v252
        %4060 = vmatprep.subr.mxu0 0.0
        %4061 = vmatpush1.msra.mxu0 %v251
        %4062 = vmatprep.subr.mxu0 0.0
        %4063 = vmatpush1.msra.mxu0 %v250
        %4064 = vmatprep.subr.mxu0 0.0
        %4065 = vmatpush1.msra.mxu0 %v249
        %4066 = vmatprep.subr.mxu0 0.0
        %4067 = vmatpush2.msra.mxu0 0.0
        %4068 = vmatprep.subr.mxu0 0.0
        %4069 = vmatpush2.msra.mxu0 0.0
        %4070 = vmatprep.subr.mxu0 0.0
        %4071 = vmatpush2.msra.mxu0 0.0
        %4072 = vmatprep.subr.mxu0 0.0
        %4073 = vmatpush2.msra.mxu0 0.0
        %4074 = vmatprep.subr.mxu0 0.0
        %4075 = vmatpush2.msra.mxu0 0.0
        %4076 = vmatprep.subr.mxu0 0.0
        %4077 = vmatpush2.msra.mxu0 0.0
        %4078 = vmatprep.subr.mxu0 0.0
        %4079 = vmatpush2.msra.mxu0 0.0
        %4080 = vmatprep.subr.mxu0 0.0
        %4081 = vmatpush2.msra.mxu0 0.0
        %4082 = vmatprep.subr.mxu0 0.0
        %4083 = vmatpush2.msra.mxu0 0.0
        %4084 = vmatprep.subr.mxu0 0.0
        %4085 = vmatpush2.msra.mxu0 0.0
        %4086 = vmatprep.subr.mxu0 0.0
        %4087 = vmatpush2.msra.mxu0 0.0
        %4088 = vmatprep.subr.mxu0 0.0
        %4089 = vmatpush2.msra.mxu0 0.0
        %4090 = vmatprep.subr.mxu0 0.0
        %4091 = vmatpush2.msra.mxu0 0.0
        %4092 = vmatprep.subr.mxu0 0.0
        %4093 = vmatpush2.msra.mxu0 0.0
        %4094 = vmatprep.subr.mxu0 0.0
        %4095 = vmatpush2.msra.mxu0 0.0
        %4096 = vmatprep.subr.mxu0 0.0
        %4097 = vmatpush2.msra.mxu0 0.0
        %4098 = vmatprep.mubr.f32.mxu0 0.0
        %4099 = vmatmul.mubr.f32.gmra.mxu0 %v4032
        %v4100 = vpop.f32.mrf.mxu0
        %v4101 = vadd.f32 0.0, %v4100
        %v4102 = vpop.f32.mrf.mxu0
        %4103 = vdwg.mxu0
        %v4104 = vadd.f32 %v3708, %v4101
        %v4105 = vadd.f32 %v4104, %v4104
        %v4106 = vsel %vm266, %v4105, %v4104
        %v4107 = vxor.u32 %v4106, 2147483648
        %v4108 = vmul.f32 %v4107, 1.442695
        %v4109 = vpow.pop %v4108
        %v4110 = vadd.f32 %v4109, 1.0
        %v4111 = vrcp.pop %v4110
        %v4112 = vmul.f32 1.0, %v4111
        %v4113 = vadd.f32 %v4112, %v4112
        %v4114 = vsub.f32 %v4113, 1.0
        %v4115 = vsel %vm266, %v4114, %v4112
        %v4116 = vmul.f32 %v4115, %v4020
        %4118 = vrot.lane.b32.xlu0 %v4115, 64
        %v4119 = vpop.permute.xlu0 %4118
        %v4121 = vmul.f32 %v4115, %v4119
        %4123 = vrot.lane.b32.xlu0 %v4121, 32
        %v4124 = vpop.permute.xlu0 %4123
        %v4126 = vadd.f32 %v4116, %v4124
        %v4127 = vtanh.pop %v4126
        %4129 = vrot.lane.b32.xlu0 %v4127, 64
        %v4130 = vpop.permute.xlu0 %4129
        %v4132 = vmul.f32 %v4115, %v4130
        %4134 = vrot.lane.b32.xlu0 %v4132, 32
        %v4135 = vpop.permute.xlu0 %4134
        %4137 = vst.msk [vmem:[#allocation2 + $0x18] sm:$0xff] %vm3713, %v4135
        %v4138 = vsel %vm3713, %v4135, 0
        %4140 = vmatprep.subr.mxu0 0.0
        %4141 = vmatpush1.msra.mxu0 0.0
        %4142 = vmatprep.subr.mxu0 0.0
        %4143 = vmatpush1.msra.mxu0 0.0
        %4144 = vmatprep.subr.mxu0 0.0
        %4145 = vmatpush1.msra.mxu0 0.0
        %4146 = vmatprep.subr.mxu0 0.0
        %4147 = vmatpush1.msra.mxu0 0.0
        %4148 = vmatprep.subr.mxu0 0.0
        %4149 = vmatpush1.msra.mxu0 0.0
        %4150 = vmatprep.subr.mxu0 0.0
        %4151 = vmatpush1.msra.mxu0 0.0
        %4152 = vmatprep.subr.mxu0 0.0
        %4153 = vmatpush1.msra.mxu0 0.0
        %4154 = vmatprep.subr.mxu0 0.0
        %4155 = vmatpush1.msra.mxu0 0.0
        %4156 = vmatprep.subr.mxu0 0.0
        %4157 = vmatpush1.msra.mxu0 0.0
        %4158 = vmatprep.subr.mxu0 0.0
        %4159 = vmatpush1.msra.mxu0 0.0
        %4160 = vmatprep.subr.mxu0 0.0
        %4161 = vmatpush1.msra.mxu0 0.0
        %4162 = vmatprep.subr.mxu0 0.0
        %4163 = vmatpush1.msra.mxu0 0.0
        %4164 = vmatprep.subr.mxu0 0.0
        %4165 = vmatpush1.msra.mxu0 %v252
        %4166 = vmatprep.subr.mxu0 0.0
        %4167 = vmatpush1.msra.mxu0 %v251
        %4168 = vmatprep.subr.mxu0 0.0
        %4169 = vmatpush1.msra.mxu0 %v250
        %4170 = vmatprep.subr.mxu0 0.0
        %4171 = vmatpush1.msra.mxu0 %v249
        %4172 = vmatprep.subr.mxu0 0.0
        %4173 = vmatpush2.msra.mxu0 0.0
        %4174 = vmatprep.subr.mxu0 0.0
        %4175 = vmatpush2.msra.mxu0 0.0
        %4176 = vmatprep.subr.mxu0 0.0
        %4177 = vmatpush2.msra.mxu0 0.0
        %4178 = vmatprep.subr.mxu0 0.0
        %4179 = vmatpush2.msra.mxu0 0.0
        %4180 = vmatprep.subr.mxu0 0.0
        %4181 = vmatpush2.msra.mxu0 0.0
        %4182 = vmatprep.subr.mxu0 0.0
        %4183 = vmatpush2.msra.mxu0 0.0
        %4184 = vmatprep.subr.mxu0 0.0
        %4185 = vmatpush2.msra.mxu0 0.0
        %4186 = vmatprep.subr.mxu0 0.0
        %4187 = vmatpush2.msra.mxu0 0.0
        %4188 = vmatprep.subr.mxu0 0.0
        %4189 = vmatpush2.msra.mxu0 0.0
        %4190 = vmatprep.subr.mxu0 0.0
        %4191 = vmatpush2.msra.mxu0 0.0
        %4192 = vmatprep.subr.mxu0 0.0
        %4193 = vmatpush2.msra.mxu0 0.0
        %4194 = vmatprep.subr.mxu0 0.0
        %4195 = vmatpush2.msra.mxu0 0.0
        %4196 = vmatprep.subr.mxu0 0.0
        %4197 = vmatpush2.msra.mxu0 0.0
        %4198 = vmatprep.subr.mxu0 0.0
        %4199 = vmatpush2.msra.mxu0 0.0
        %4200 = vmatprep.subr.mxu0 0.0
        %4201 = vmatpush2.msra.mxu0 0.0
        %4202 = vmatprep.subr.mxu0 0.0
        %4203 = vmatpush2.msra.mxu0 0.0
        %4204 = vmatprep.mubr.f32.mxu0 0.0
        %4205 = vmatmul.mubr.f32.gmra.mxu0 %v4138
        %v4206 = vpop.f32.mrf.mxu0
        %v4207 = vadd.f32 0.0, %v4206
        %v4208 = vpop.f32.mrf.mxu0
        %4209 = vdwg.mxu0
        %v4210 = vadd.f32 %v3709, %v4207
        %v4211 = vadd.f32 %v4210, %v4210
        %v4212 = vsel %vm266, %v4211, %v4210
        %v4213 = vxor.u32 %v4212, 2147483648
        %v4214 = vmul.f32 %v4213, 1.442695
        %v4215 = vpow.pop %v4214
        %v4216 = vadd.f32 %v4215, 1.0
        %v4217 = vrcp.pop %v4216
        %v4218 = vmul.f32 1.0, %v4217
        %v4219 = vadd.f32 %v4218, %v4218
        %v4220 = vsub.f32 %v4219, 1.0
        %v4221 = vsel %vm266, %v4220, %v4218
        %v4222 = vmul.f32 %v4221, %v4126
        %4224 = vrot.lane.b32.xlu0 %v4221, 64
        %v4225 = vpop.permute.xlu0 %4224
        %v4227 = vmul.f32 %v4221, %v4225
        %4229 = vrot.lane.b32.xlu0 %v4227, 32
        %v4230 = vpop.permute.xlu0 %4229
        %v4232 = vadd.f32 %v4222, %v4230
        %v4233 = vtanh.pop %v4232
        %4235 = vrot.lane.b32.xlu0 %v4233, 64
        %v4236 = vpop.permute.xlu0 %4235
        %v4238 = vmul.f32 %v4221, %v4236
        %4240 = vrot.lane.b32.xlu0 %v4238, 32
        %v4241 = vpop.permute.xlu0 %4240
        %4243 = vst.msk [vmem:[#allocation2 + $0x20] sm:$0xff] %vm3713, %v4241
        %v4244 = vsel %vm3713, %v4241, 0
        %4246 = vmatprep.subr.mxu0 0.0
        %4247 = vmatpush1.msra.mxu0 0.0
        %4248 = vmatprep.subr.mxu0 0.0
        %4249 = vmatpush1.msra.mxu0 0.0
        %4250 = vmatprep.subr.mxu0 0.0
        %4251 = vmatpush1.msra.mxu0 0.0
        %4252 = vmatprep.subr.mxu0 0.0
        %4253 = vmatpush1.msra.mxu0 0.0
        %4254 = vmatprep.subr.mxu0 0.0
        %4255 = vmatpush1.msra.mxu0 0.0
        %4256 = vmatprep.subr.mxu0 0.0
        %4257 = vmatpush1.msra.mxu0 0.0
        %4258 = vmatprep.subr.mxu0 0.0
        %4259 = vmatpush1.msra.mxu0 0.0
        %4260 = vmatprep.subr.mxu0 0.0
        %4261 = vmatpush1.msra.mxu0 0.0
        %4262 = vmatprep.subr.mxu0 0.0
        %4263 = vmatpush1.msra.mxu0 0.0
        %4264 = vmatprep.subr.mxu0 0.0
        %4265 = vmatpush1.msra.mxu0 0.0
        %4266 = vmatprep.subr.mxu0 0.0
        %4267 = vmatpush1.msra.mxu0 0.0
        %4268 = vmatprep.subr.mxu0 0.0
        %4269 = vmatpush1.msra.mxu0 0.0
        %4270 = vmatprep.subr.mxu0 0.0
        %4271 = vmatpush1.msra.mxu0 %v252
        %4272 = vmatprep.subr.mxu0 0.0
        %4273 = vmatpush1.msra.mxu0 %v251
        %4274 = vmatprep.subr.mxu0 0.0
        %4275 = vmatpush1.msra.mxu0 %v250
        %4276 = vmatprep.subr.mxu0 0.0
        %4277 = vmatpush1.msra.mxu0 %v249
        %4278 = vmatprep.subr.mxu0 0.0
        %4279 = vmatpush2.msra.mxu0 0.0
        %4280 = vmatprep.subr.mxu0 0.0
        %4281 = vmatpush2.msra.mxu0 0.0
        %4282 = vmatprep.subr.mxu0 0.0
        %4283 = vmatpush2.msra.mxu0 0.0
        %4284 = vmatprep.subr.mxu0 0.0
        %4285 = vmatpush2.msra.mxu0 0.0
        %4286 = vmatprep.subr.mxu0 0.0
        %4287 = vmatpush2.msra.mxu0 0.0
        %4288 = vmatprep.subr.mxu0 0.0
        %4289 = vmatpush2.msra.mxu0 0.0
        %4290 = vmatprep.subr.mxu0 0.0
        %4291 = vmatpush2.msra.mxu0 0.0
        %4292 = vmatprep.subr.mxu0 0.0
        %4293 = vmatpush2.msra.mxu0 0.0
        %4294 = vmatprep.subr.mxu0 0.0
        %4295 = vmatpush2.msra.mxu0 0.0
        %4296 = vmatprep.subr.mxu0 0.0
        %4297 = vmatpush2.msra.mxu0 0.0
        %4298 = vmatprep.subr.mxu0 0.0
        %4299 = vmatpush2.msra.mxu0 0.0
        %4300 = vmatprep.subr.mxu0 0.0
        %4301 = vmatpush2.msra.mxu0 0.0
        %4302 = vmatprep.subr.mxu0 0.0
        %4303 = vmatpush2.msra.mxu0 0.0
        %4304 = vmatprep.subr.mxu0 0.0
        %4305 = vmatpush2.msra.mxu0 0.0
        %4306 = vmatprep.subr.mxu0 0.0
        %4307 = vmatpush2.msra.mxu0 0.0
        %4308 = vmatprep.subr.mxu0 0.0
        %4309 = vmatpush2.msra.mxu0 0.0
        %4310 = vmatprep.mubr.f32.mxu0 0.0
        %4311 = vmatmul.mubr.f32.gmra.mxu0 %v4244
        %v4312 = vpop.f32.mrf.mxu0
        %v4313 = vadd.f32 0.0, %v4312
        %v4314 = vpop.f32.mrf.mxu0
        %4315 = vdwg.mxu0
        %v4316 = vadd.f32 %v3710, %v4313
        %v4317 = vadd.f32 %v4316, %v4316
        %v4318 = vsel %vm266, %v4317, %v4316
        %v4319 = vxor.u32 %v4318, 2147483648
        %v4320 = vmul.f32 %v4319, 1.442695
        %v4321 = vpow.pop %v4320
        %v4322 = vadd.f32 %v4321, 1.0
        %v4323 = vrcp.pop %v4322
        %v4324 = vmul.f32 1.0, %v4323
        %v4325 = vadd.f32 %v4324, %v4324
        %v4326 = vsub.f32 %v4325, 1.0
        %v4327 = vsel %vm266, %v4326, %v4324
        %v4328 = vmul.f32 %v4327, %v4232
        %4330 = vrot.lane.b32.xlu0 %v4327, 64
        %v4331 = vpop.permute.xlu0 %4330
        %v4333 = vmul.f32 %v4327, %v4331
        %4335 = vrot.lane.b32.xlu0 %v4333, 32
        %v4336 = vpop.permute.xlu0 %4335
        %v4338 = vadd.f32 %v4328, %v4336
        %v4339 = vtanh.pop %v4338
        %4341 = vrot.lane.b32.xlu0 %v4339, 64
        %v4342 = vpop.permute.xlu0 %4341
        %v4344 = vmul.f32 %v4327, %v4342
        %4346 = vrot.lane.b32.xlu0 %v4344, 32
        %v4347 = vpop.permute.xlu0 %4346
        %4349 = vst.msk [vmem:[#allocation2 + $0x28] sm:$0xff] %vm3713, %v4347
        %v4350 = vsel %vm3713, %v4347, 0
        %4352 = vmatprep.subr.mxu0 0.0
        %4353 = vmatpush1.msra.mxu0 0.0
        %4354 = vmatprep.subr.mxu0 0.0
        %4355 = vmatpush1.msra.mxu0 0.0
        %4356 = vmatprep.subr.mxu0 0.0
        %4357 = vmatpush1.msra.mxu0 0.0
        %4358 = vmatprep.subr.mxu0 0.0
        %4359 = vmatpush1.msra.mxu0 0.0
        %4360 = vmatprep.subr.mxu0 0.0
        %4361 = vmatpush1.msra.mxu0 0.0
        %4362 = vmatprep.subr.mxu0 0.0
        %4363 = vmatpush1.msra.mxu0 0.0
        %4364 = vmatprep.subr.mxu0 0.0
        %4365 = vmatpush1.msra.mxu0 0.0
        %4366 = vmatprep.subr.mxu0 0.0
        %4367 = vmatpush1.msra.mxu0 0.0
        %4368 = vmatprep.subr.mxu0 0.0
        %4369 = vmatpush1.msra.mxu0 0.0
        %4370 = vmatprep.subr.mxu0 0.0
        %4371 = vmatpush1.msra.mxu0 0.0
        %4372 = vmatprep.subr.mxu0 0.0
        %4373 = vmatpush1.msra.mxu0 0.0
        %4374 = vmatprep.subr.mxu0 0.0
        %4375 = vmatpush1.msra.mxu0 0.0
        %4376 = vmatprep.subr.mxu0 0.0
        %4377 = vmatpush1.msra.mxu0 %v252
        %4378 = vmatprep.subr.mxu0 0.0
        %4379 = vmatpush1.msra.mxu0 %v251
        %4380 = vmatprep.subr.mxu0 0.0
        %4381 = vmatpush1.msra.mxu0 %v250
        %4382 = vmatprep.subr.mxu0 0.0
        %4383 = vmatpush1.msra.mxu0 %v249
        %4384 = vmatprep.subr.mxu0 0.0
        %4385 = vmatpush2.msra.mxu0 0.0
        %4386 = vmatprep.subr.mxu0 0.0
        %4387 = vmatpush2.msra.mxu0 0.0
        %4388 = vmatprep.subr.mxu0 0.0
        %4389 = vmatpush2.msra.mxu0 0.0
        %4390 = vmatprep.subr.mxu0 0.0
        %4391 = vmatpush2.msra.mxu0 0.0
        %4392 = vmatprep.subr.mxu0 0.0
        %4393 = vmatpush2.msra.mxu0 0.0
        %4394 = vmatprep.subr.mxu0 0.0
        %4395 = vmatpush2.msra.mxu0 0.0
        %4396 = vmatprep.subr.mxu0 0.0
        %4397 = vmatpush2.msra.mxu0 0.0
        %4398 = vmatprep.subr.mxu0 0.0
        %4399 = vmatpush2.msra.mxu0 0.0
        %4400 = vmatprep.subr.mxu0 0.0
        %4401 = vmatpush2.msra.mxu0 0.0
        %4402 = vmatprep.subr.mxu0 0.0
        %4403 = vmatpush2.msra.mxu0 0.0
        %4404 = vmatprep.subr.mxu0 0.0
        %4405 = vmatpush2.msra.mxu0 0.0
        %4406 = vmatprep.subr.mxu0 0.0
        %4407 = vmatpush2.msra.mxu0 0.0
        %4408 = vmatprep.subr.mxu0 0.0
        %4409 = vmatpush2.msra.mxu0 0.0
        %4410 = vmatprep.subr.mxu0 0.0
        %4411 = vmatpush2.msra.mxu0 0.0
        %4412 = vmatprep.subr.mxu0 0.0
        %4413 = vmatpush2.msra.mxu0 0.0
        %4414 = vmatprep.subr.mxu0 0.0
        %4415 = vmatpush2.msra.mxu0 0.0
        %4416 = vmatprep.mubr.f32.mxu0 0.0
        %4417 = vmatmul.mubr.f32.gmra.mxu0 %v4350
        %v4418 = vpop.f32.mrf.mxu0
        %v4419 = vadd.f32 0.0, %v4418
        %v4420 = vpop.f32.mrf.mxu0
        %4421 = vdwg.mxu0
        %v4422 = vadd.f32 %v3711, %v4419
        %v4423 = vadd.f32 %v4422, %v4422
        %v4424 = vsel %vm266, %v4423, %v4422
        %v4425 = vxor.u32 %v4424, 2147483648
        %v4426 = vmul.f32 %v4425, 1.442695
        %v4427 = vpow.pop %v4426
        %v4428 = vadd.f32 %v4427, 1.0
        %v4429 = vrcp.pop %v4428
        %v4430 = vmul.f32 1.0, %v4429
        %v4431 = vadd.f32 %v4430, %v4430
        %v4432 = vsub.f32 %v4431, 1.0
        %v4433 = vsel %vm266, %v4432, %v4430
        %v4434 = vmul.f32 %v4433, %v4338
        %4436 = vrot.lane.b32.xlu0 %v4433, 64
        %v4437 = vpop.permute.xlu0 %4436
        %v4439 = vmul.f32 %v4433, %v4437
        %4441 = vrot.lane.b32.xlu0 %v4439, 32
        %v4442 = vpop.permute.xlu0 %4441
        %v4444 = vadd.f32 %v4434, %v4442
        %v4445 = vtanh.pop %v4444
        %4447 = vrot.lane.b32.xlu0 %v4445, 64
        %v4448 = vpop.permute.xlu0 %4447
        %v4450 = vmul.f32 %v4433, %v4448
        %4452 = vrot.lane.b32.xlu0 %v4450, 32
        %v4453 = vpop.permute.xlu0 %4452
        %4455 = vst.msk [vmem:[#allocation2 + $0x30] sm:$0xff] %vm3713, %v4453
        %v4456 = vsel %vm3713, %v4453, 0
        %4458 = vmatprep.subr.mxu0 0.0
        %4459 = vmatpush1.msra.mxu0 0.0
        %4460 = vmatprep.subr.mxu0 0.0
        %4461 = vmatpush1.msra.mxu0 0.0
        %4462 = vmatprep.subr.mxu0 0.0
        %4463 = vmatpush1.msra.mxu0 0.0
        %4464 = vmatprep.subr.mxu0 0.0
        %4465 = vmatpush1.msra.mxu0 0.0
        %4466 = vmatprep.subr.mxu0 0.0
        %4467 = vmatpush1.msra.mxu0 0.0
        %4468 = vmatprep.subr.mxu0 0.0
        %4469 = vmatpush1.msra.mxu0 0.0
        %4470 = vmatprep.subr.mxu0 0.0
        %4471 = vmatpush1.msra.mxu0 0.0
        %4472 = vmatprep.subr.mxu0 0.0
        %4473 = vmatpush1.msra.mxu0 0.0
        %4474 = vmatprep.subr.mxu0 0.0
        %4475 = vmatpush1.msra.mxu0 0.0
        %4476 = vmatprep.subr.mxu0 0.0
        %4477 = vmatpush1.msra.mxu0 0.0
        %4478 = vmatprep.subr.mxu0 0.0
        %4479 = vmatpush1.msra.mxu0 0.0
        %4480 = vmatprep.subr.mxu0 0.0
        %4481 = vmatpush1.msra.mxu0 0.0
        %4482 = vmatprep.subr.mxu0 0.0
        %4483 = vmatpush1.msra.mxu0 %v252
        %4484 = vmatprep.subr.mxu0 0.0
        %4485 = vmatpush1.msra.mxu0 %v251
        %4486 = vmatprep.subr.mxu0 0.0
        %4487 = vmatpush1.msra.mxu0 %v250
        %4488 = vmatprep.subr.mxu0 0.0
        %4489 = vmatpush1.msra.mxu0 %v249
        %4490 = vmatprep.subr.mxu0 0.0
        %4491 = vmatpush2.msra.mxu0 0.0
        %4492 = vmatprep.subr.mxu0 0.0
        %4493 = vmatpush2.msra.mxu0 0.0
        %4494 = vmatprep.subr.mxu0 0.0
        %4495 = vmatpush2.msra.mxu0 0.0
        %4496 = vmatprep.subr.mxu0 0.0
        %4497 = vmatpush2.msra.mxu0 0.0
        %4498 = vmatprep.subr.mxu0 0.0
        %4499 = vmatpush2.msra.mxu0 0.0
        %4500 = vmatprep.subr.mxu0 0.0
        %4501 = vmatpush2.msra.mxu0 0.0
        %4502 = vmatprep.subr.mxu0 0.0
        %4503 = vmatpush2.msra.mxu0 0.0
        %4504 = vmatprep.subr.mxu0 0.0
        %4505 = vmatpush2.msra.mxu0 0.0
        %4506 = vmatprep.subr.mxu0 0.0
        %4507 = vmatpush2.msra.mxu0 0.0
        %4508 = vmatprep.subr.mxu0 0.0
        %4509 = vmatpush2.msra.mxu0 0.0
        %4510 = vmatprep.subr.mxu0 0.0
        %4511 = vmatpush2.msra.mxu0 0.0
        %4512 = vmatprep.subr.mxu0 0.0
        %4513 = vmatpush2.msra.mxu0 0.0
        %4514 = vmatprep.subr.mxu0 0.0
        %4515 = vmatpush2.msra.mxu0 0.0
        %4516 = vmatprep.subr.mxu0 0.0
        %4517 = vmatpush2.msra.mxu0 0.0
        %4518 = vmatprep.subr.mxu0 0.0
        %4519 = vmatpush2.msra.mxu0 0.0
        %4520 = vmatprep.subr.mxu0 0.0
        %4521 = vmatpush2.msra.mxu0 0.0
        %4522 = vmatprep.mubr.f32.mxu0 0.0
        %4523 = vmatmul.mubr.f32.gmra.mxu0 %v4456
        %v4524 = vpop.f32.mrf.mxu0
        %v4525 = vadd.f32 0.0, %v4524
        %v4526 = vpop.f32.mrf.mxu0
        %4527 = vdwg.mxu0
        %v4528 = vadd.f32 %v3712, %v4525
        %v4529 = vadd.f32 %v4528, %v4528
        %v4530 = vsel %vm266, %v4529, %v4528
        %v4531 = vxor.u32 %v4530, 2147483648
        %v4532 = vmul.f32 %v4531, 1.442695
        %v4533 = vpow.pop %v4532
        %v4534 = vadd.f32 %v4533, 1.0
        %v4535 = vrcp.pop %v4534
        %v4536 = vmul.f32 1.0, %v4535
        %v4537 = vadd.f32 %v4536, %v4536
        %v4538 = vsub.f32 %v4537, 1.0
        %v4539 = vsel %vm266, %v4538, %v4536
        %v4540 = vmul.f32 %v4539, %v4444
        %4542 = vrot.lane.b32.xlu0 %v4539, 64
        %v4543 = vpop.permute.xlu0 %4542
        %v4545 = vmul.f32 %v4539, %v4543
        %4547 = vrot.lane.b32.xlu0 %v4545, 32
        %v4548 = vpop.permute.xlu0 %4547
        %v4550 = vadd.f32 %v4540, %v4548
        %v4551 = vtanh.pop %v4550
        %4553 = vrot.lane.b32.xlu0 %v4551, 64
        %v4554 = vpop.permute.xlu0 %4553
        %v4556 = vmul.f32 %v4539, %v4554
        %4558 = vrot.lane.b32.xlu0 %v4556, 32
        %v4559 = vpop.permute.xlu0 %4558
        %4561 = vst.msk [vmem:[#allocation2 + $0x38] sm:$0xff] %vm3713, %v4559
        %v4562 = vld [vmem:[#allocation2] sm:$0xff]
        %v4563 = vld [vmem:[#allocation2 + $0x8] sm:$0xff]
        %v4564 = vld [vmem:[#allocation2 + $0x10] sm:$0xff]
        %v4565 = vld [vmem:[#allocation2 + $0x18] sm:$0xff]
        %v4566 = vld [vmem:[#allocation2 + $0x20] sm:$0xff]
        %v4567 = vld [vmem:[#allocation2 + $0x28] sm:$0xff]
        %v4568 = vld [vmem:[#allocation2 + $0x30] sm:$0xff]
        %v4569 = vld [vmem:[#allocation2 + $0x38] sm:$0xff]
        %v4570 = vlaneseq
        %v4571 = vshrl.u32 %v4570, 7
        %v4572 = vsub.s32 0, %v4571
        %v4573 = vrot.slane %v258, %v4572
        %v4575 = vsel %vm3713, %v4562, 0
        %v4578 = vsel %vm3713, %v4563, 0
        %v4581 = vsel %vm3713, %v4564, 0
        %v4584 = vsel %vm3713, %v4565, 0
        %v4587 = vsel %vm3713, %v4566, 0
        %v4590 = vsel %vm3713, %v4567, 0
        %v4593 = vsel %vm3713, %v4568, 0
        %v4596 = vsel %vm3713, %v4569, 0
        %4598 = vmatprep.subr.mxu0 0.0
        %4599 = vmatpush1.msra.mxu0 0.0
        %4600 = vmatprep.subr.mxu0 0.0
        %4601 = vmatpush1.msra.mxu0 0.0
        %4602 = vmatprep.subr.mxu0 0.0
        %4603 = vmatpush1.msra.mxu0 0.0
        %4604 = vmatprep.subr.mxu0 0.0
        %4605 = vmatpush1.msra.mxu0 0.0
        %4606 = vmatprep.subr.mxu0 0.0
        %4607 = vmatpush1.msra.mxu0 0.0
        %4608 = vmatprep.subr.mxu0 0.0
        %4609 = vmatpush1.msra.mxu0 0.0
        %4610 = vmatprep.subr.mxu0 0.0
        %4611 = vmatpush1.msra.mxu0 0.0
        %4612 = vmatprep.subr.mxu0 0.0
        %4613 = vmatpush1.msra.mxu0 0.0
        %4614 = vmatprep.subr.mxu0 0.0
        %4615 = vmatpush1.msra.mxu0 0.0
        %4616 = vmatprep.subr.mxu0 0.0
        %4617 = vmatpush1.msra.mxu0 0.0
        %4618 = vmatprep.subr.mxu0 0.0
        %4619 = vmatpush1.msra.mxu0 0.0
        %4620 = vmatprep.subr.mxu0 0.0
        %4621 = vmatpush1.msra.mxu0 0.0
        %4622 = vmatprep.subr.mxu0 0.0
        %4623 = vmatpush1.msra.mxu0 %v257
        %4624 = vmatprep.subr.mxu0 0.0
        %4625 = vmatpush1.msra.mxu0 %v256
        %4626 = vmatprep.subr.mxu0 0.0
        %4627 = vmatpush1.msra.mxu0 %v255
        %4628 = vmatprep.subr.mxu0 0.0
        %4629 = vmatpush1.msra.mxu0 %v254
        %4630 = vmatprep.subr.mxu0 0.0
        %4631 = vmatpush2.msra.mxu0 0.0
        %4632 = vmatprep.subr.mxu0 0.0
        %4633 = vmatpush2.msra.mxu0 0.0
        %4634 = vmatprep.subr.mxu0 0.0
        %4635 = vmatpush2.msra.mxu0 0.0
        %4636 = vmatprep.subr.mxu0 0.0
        %4637 = vmatpush2.msra.mxu0 0.0
        %4638 = vmatprep.subr.mxu0 0.0
        %4639 = vmatpush2.msra.mxu0 0.0
        %4640 = vmatprep.subr.mxu0 0.0
        %4641 = vmatpush2.msra.mxu0 0.0
        %4642 = vmatprep.subr.mxu0 0.0
        %4643 = vmatpush2.msra.mxu0 0.0
        %4644 = vmatprep.subr.mxu0 0.0
        %4645 = vmatpush2.msra.mxu0 0.0
        %4646 = vmatprep.subr.mxu0 0.0
        %4647 = vmatpush2.msra.mxu0 0.0
        %4648 = vmatprep.subr.mxu0 0.0
        %4649 = vmatpush2.msra.mxu0 0.0
        %4650 = vmatprep.subr.mxu0 0.0
        %4651 = vmatpush2.msra.mxu0 0.0
        %4652 = vmatprep.subr.mxu0 0.0
        %4653 = vmatpush2.msra.mxu0 0.0
        %4654 = vmatprep.subr.mxu0 0.0
        %4655 = vmatpush2.msra.mxu0 0.0
        %4656 = vmatprep.subr.mxu0 0.0
        %4657 = vmatpush2.msra.mxu0 0.0
        %4658 = vmatprep.subr.mxu0 0.0
        %4659 = vmatpush2.msra.mxu0 0.0
        %4660 = vmatprep.subr.mxu0 0.0
        %4661 = vmatpush2.msra.mxu0 0.0
        %4662 = vmatprep.mubr.f32.mxu0 0.0
        %4663 = vmatmul.mubr.f32.gmra.mxu0 %v4575
        %v4664 = vpop.f32.mrf.mxu0
        %v4665 = vadd.f32 %v4573, %v4664
        %v4666 = vpop.f32.mrf.mxu0
        %4667 = vmatprep.mubr.f32.mxu0 0.0
        %4668 = vmatmul.mubr.f32.gmra.mxu0 %v4578
        %v4669 = vpop.f32.mrf.mxu0
        %v4670 = vadd.f32 %v4573, %v4669
        %v4671 = vpop.f32.mrf.mxu0
        %4672 = vmatprep.mubr.f32.mxu0 0.0
        %4673 = vmatmul.mubr.f32.gmra.mxu0 %v4581
        %v4674 = vpop.f32.mrf.mxu0
        %v4675 = vadd.f32 %v4573, %v4674
        %v4676 = vpop.f32.mrf.mxu0
        %4677 = vmatprep.mubr.f32.mxu0 0.0
        %4678 = vmatmul.mubr.f32.gmra.mxu0 %v4584
        %v4679 = vpop.f32.mrf.mxu0
        %v4680 = vadd.f32 %v4573, %v4679
        %v4681 = vpop.f32.mrf.mxu0
        %4682 = vmatprep.mubr.f32.mxu0 0.0
        %4683 = vmatmul.mubr.f32.gmra.mxu0 %v4587
        %v4684 = vpop.f32.mrf.mxu0
        %v4685 = vadd.f32 %v4573, %v4684
        %v4686 = vpop.f32.mrf.mxu0
        %4687 = vmatprep.mubr.f32.mxu0 0.0
        %4688 = vmatmul.mubr.f32.gmra.mxu0 %v4590
        %v4689 = vpop.f32.mrf.mxu0
        %v4690 = vadd.f32 %v4573, %v4689
        %v4691 = vpop.f32.mrf.mxu0
        %4692 = vmatprep.mubr.f32.mxu0 0.0
        %4693 = vmatmul.mubr.f32.gmra.mxu0 %v4593
        %v4694 = vpop.f32.mrf.mxu0
        %v4695 = vadd.f32 %v4573, %v4694
        %v4696 = vpop.f32.mrf.mxu0
        %4697 = vmatprep.mubr.f32.mxu0 0.0
        %4698 = vmatmul.mubr.f32.gmra.mxu0 %v4596
        %v4699 = vpop.f32.mrf.mxu0
        %v4700 = vadd.f32 %v4573, %v4699
        %v4701 = vpop.f32.mrf.mxu0
        %4702 = vdwg.mxu0
        %4703 = vst [vmem:[%s223] sm:$0xff] %v4665
        %4704 = vst [vmem:[%s223 + $0x8] sm:$0xff] %v4670
        %4705 = vst [vmem:[%s223 + $0x10] sm:$0xff] %v4675
        %4706 = vst [vmem:[%s223 + $0x18] sm:$0xff] %v4680
        %4707 = vst [vmem:[%s223 + $0x20] sm:$0xff] %v4685
        %4708 = vst [vmem:[%s223 + $0x28] sm:$0xff] %v4690
        %4709 = vst [vmem:[%s223 + $0x30] sm:$0xff] %v4695
        %4710 = vst [vmem:[%s223 + $0x38] sm:$0xff] %v4700
        %s4711 = sand.u32 %s125, 1
        %s4712 = scalar_lea.sflag [#allocation4], %s4711
        %s4713 = sand.u32 %s125, 1
        %s4714 = smul.addr %s4713, 64
        %s4715 = scalar_lea.vmem [#allocation3], %s4714
        // Predicated region
        $region37: #{tpu_custom_call.1} parent=35 // pred_check
          %p4716 = pneg %p135
        $region38: #{tpu_custom_call.1} parent=35 // pred_check_branch
          %4718 = sbr.rel (%p4716) target = $region40
        $region39: #{tpu_custom_call.1} parent=35 // pred_region
          %s4719 = smul.u32 8, %s18
          %s4721 = ssub.s32 1024, 1024
          %4722 = vsyncadd %s4712, %s4721
          %s4723 = smul.addr %s4719, 128
          %s4724 = scalar_lea.hbm %s4, %s4723
          %s4725 = sshll.u32 %s4715, 4
          %s4726 = int_to_ptr.vmem [resolvable:$true] %s4725
          %4731 = dma.vmem_to_hbm [thread:$0]  %s4726, 1024, %s4724, %s4712, 128, 128, 8
        $region40: #{tpu_custom_call.1} parent=35 // pred_fallthru
          _
      $region36: #{tpu_custom_call.1} parent=5 // pred_fallthru
        _
      %p4732 = scmp.le.s32.totalorder 2, %s13
      // Predicated region
      $region41: #{tpu_custom_call.1} parent=5 // pred_check
        %p4733 = pneg %p4732
      $region42: #{tpu_custom_call.1} parent=5 // pred_check_branch
        %4735 = sbr.rel (%p4733) target = $region44
      $region43: #{tpu_custom_call.1} parent=5 // pred_region
        %s4736 = ssub.s32 %s13, 2
        // Predicated region
        $region45: #{tpu_custom_call.1} parent=43 // pred_check
          %p4737 = pneg %p141
        $region46: #{tpu_custom_call.1} parent=43 // pred_check_branch
          %4739 = sbr.rel (%p4737) target = $region48
        $region47: #{tpu_custom_call.1} parent=43 // pred_region
          %s4740 = sand.u32 %s126, 1
          %s4741 = scalar_lea.sflag [#allocation4], %s4740
          %s4742 = sand.u32 %s126, 1
          %s4743 = smul.addr %s4742, 64
          %s4744 = scalar_lea.vmem [#allocation3], %s4743
          %4745 = dma.done %s4741, 1024
        $region48: #{tpu_custom_call.1} parent=43 // pred_fallthru
          _
      $region44: #{tpu_custom_call.1} parent=5 // pred_fallthru
        _
    $region6: #{tpu_custom_call.1} parent=1 // loop_footer
      %s17 = sadd.s32 1, %s13
    $region7: #{tpu_custom_call.1} parent=1 // loop_footer_branch
      %12 = sbr.rel target = $region3
    $region8: #{tpu_custom_call.1} parent=1 // loop_exit
      _
    %4746 = vsyncpa [#allocation4], 1
    %s4747 = scalar_lea.sflag [#allocation4], 1
    %4748 = vsyncpa %s4747, 1

</llo_original>
